<compile_context>
chip_gen: v6e
topology: v6e:2x2x1
jax: 0.10.0
libtpu: 0.0.40
codegen_flags: <defaults>
</compile_context>

<pallas_src>
import math
import functools

import jax
import jax.numpy as jnp
from jax import lax
from jax.experimental import pallas as pl
from jax.experimental.pallas import tpu as pltpu


def _layernorm(v, w, b, eps=1e-5):
    mu = jnp.mean(v, axis=-1, keepdims=True)
    xc = v - mu
    var = jnp.mean(xc * xc, axis=-1, keepdims=True)
    return xc * lax.rsqrt(var + eps) * w + b


def _block_kernel(n_head, mlp_chunk,
                  x_ref,
                  ln1w_ref, ln1b_ref,
                  wqkv_ref, bqkv_ref,
                  wproj_ref, bproj_ref,
                  ln2w_ref, ln2b_ref,
                  wfc_ref, bfc_ref,
                  wproj2_ref, bproj2_ref,
                  out_ref,
                  mlp_acc_ref):
    Bb, T, C = x_ref.shape
    H = n_head
    D = C // H
    M = Bb * T

    x = x_ref[...].reshape(M, C)                       # (M, C) f32

    # ---- ln_1 + fused QKV projection (bf16 operands, f32 accumulation) ----
    # 1/sqrt(D) is already folded into the q columns of w_qkv / b_qkv
    # (done once in prepare_block_params), so no in-kernel scale multiply.
    h1 = _layernorm(x, ln1w_ref[...], ln1b_ref[...]).astype(jnp.bfloat16)
    qkv = jnp.dot(h1, wqkv_ref[...],
                  preferred_element_type=jnp.float32) + bqkv_ref[...]  # (M, 3C) f32

    # ---- causal multi-head attention, per batch element inside the block ----
    row = lax.broadcasted_iota(jnp.int32, (T, T), 0)
    col = lax.broadcasted_iota(jnp.int32, (T, T), 1)
    causal = (col <= row)[None, :, :]                  # (1, T, T)

    # TODO(synk): for long T, tile KV flash-style (online softmax, skipping fully-masked
    # upper-triangular KV tiles) instead of materializing the full (H, T, T) scores.
    y_rows = []
    for b in range(Bb):                                # static unroll; Bb is small
        r0, r1 = b * T, (b + 1) * T
        # single reshape per tensor (no per-head D=32 lane slicing / stacking)
        qb = qkv[r0:r1, 0 * C:1 * C].reshape(T, H, D)
        kb = qkv[r0:r1, 1 * C:2 * C].reshape(T, H, D)
        vb = qkv[r0:r1, 2 * C:3 * C].reshape(T, H, D)
        qh = jnp.transpose(qb, (1, 0, 2)).astype(jnp.bfloat16)   # (H, T, D)
        kh = jnp.transpose(kb, (1, 0, 2)).astype(jnp.bfloat16)
        vh = jnp.transpose(vb, (1, 0, 2)).astype(jnp.bfloat16)

        s = jnp.einsum('htd,hsd->hts', qh, kh,
                       preferred_element_type=jnp.float32)       # (H, T, T) f32
        s = jnp.where(causal, s, jnp.float32(-1e30))
        s = s - jnp.max(s, axis=-1, keepdims=True)
        p = jnp.exp(s)                                           # f32 (v5e-safe)
        p = p * pl.reciprocal(jnp.sum(p, axis=-1, keepdims=True), approx=True)

        yh = jnp.einsum('hts,hsd->htd', p.astype(jnp.bfloat16), vh,
                        preferred_element_type=jnp.float32)      # (H, T, D) f32
        # head merge via one relayout (transpose + reshape), no per-head lane concat
        y_rows.append(jnp.transpose(yh, (1, 0, 2)).reshape(T, C))

    y = (y_rows[0] if Bb == 1
         else jnp.concatenate(y_rows, axis=0)).astype(jnp.bfloat16)   # (M, C) bf16

    attn_out = jnp.dot(y, wproj_ref[...],
                       preferred_element_type=jnp.float32) + bproj_ref[...]
    x1 = x + attn_out                                  # first residual (f32)

    # ---- ln_2 + MLP with relu(x)^2, tiled over the 4C hidden dimension ----
    h2 = _layernorm(x1, ln2w_ref[...], ln2b_ref[...]).astype(jnp.bfloat16)

    hidden = wfc_ref.shape[1]
    chunk = mlp_chunk if (0 < mlp_chunk < hidden and hidden % mlp_chunk == 0) else hidden
    nchunks = hidden // chunk

    # accumulate in VMEM scratch (keeps vregs free for the matmul pipeline)
    mlp_acc_ref[...] = jnp.zeros_like(mlp_acc_ref)
    for ci in range(nchunks):                          # static unroll; lane-aligned slices
        lo, hi = ci * chunk, (ci + 1) * chunk
        ff = jnp.dot(h2, wfc_ref[:, lo:hi],
                     preferred_element_type=jnp.float32) + bfc_ref[:, lo:hi]
        ff = jnp.maximum(ff, 0.0)
        ff = (ff * ff).astype(jnp.bfloat16)
        mlp_acc_ref[...] += jnp.dot(ff, wproj2_ref[lo:hi, :],
                                    preferred_element_type=jnp.float32)

    out_ref[...] = (x1 + mlp_acc_ref[...] + bproj2_ref[...]).reshape(Bb, T, C)


def prepare_block_params(params, n_head):
    """One-time weight prep (call OUTSIDE the hot loop): fold 1/sqrt(D) into the q
    columns of the QKV projection (weight AND bias) and cast matmul weights to bf16
    so per-call HBM re-casts are avoided.  LN params and biases stay f32."""
    C = params["w_qkv"].shape[0]
    D = C // n_head
    scale = jnp.float32(1.0 / math.sqrt(D))
    w_qkv = params["w_qkv"].at[:, :C].multiply(scale)
    b_qkv = params["b_qkv"].at[:, :C].multiply(scale)
    bf16 = jnp.bfloat16
    return (
        params["ln1_w"], params["ln1_b"],
        w_qkv.astype(bf16), b_qkv,
        params["w_proj"].astype(bf16), params["b_proj"],
        params["ln2_w"], params["ln2_b"],
        params["w_fc"].astype(bf16), params["b_fc"],
        params["w_proj2"].astype(bf16), params["b_proj2"],
    )


def _choose_batch_block(B, T, target_rows=512):
    """Largest divisor of B giving ~target_rows rows per grid step, while keeping
    >=2 grid steps when B >= 2 (v7x has 2 TensorCores)."""
    max_bb = max(1, target_rows // T)
    if B >= 2:
        max_bb = min(max_bb, max(1, B // 2))
    max_bb = min(max_bb, B)
    bb = 1
    for cand in range(1, max_bb + 1):
        if B % cand == 0:
            bb = cand
    return bb


def _vmem_capacity_bytes():
    try:
        return int(pltpu.get_tpu_info().vmem_capacity_bytes)
    except Exception:
        return 64 * 2 ** 20          # conservative (v7x per-core) fallback


def gpt_block_pallas(x, weight_args, n_head, mlp_chunk=512, batch_block=None):
    """x: (B, T, C) float32. weight_args: output of prepare_block_params."""
    B, T, C = x.shape
    Bb = batch_block if batch_block is not None else _choose_batch_block(B, T)
    assert B % Bb == 0, "batch block must divide B"
    M = Bb * T

    def full2d(a):
        # Constant index_map -> the block never changes across the grid, so it is
        # only DMA'd once by the pipeline.
        return pl.BlockSpec(a.shape, lambda g: (0, 0))

    grid_spec = pltpu.PrefetchScalarGridSpec(
        num_scalar_prefetch=0,
        grid=(B // Bb,),
        in_specs=[pl.BlockSpec((Bb, T, C), lambda g: (g, 0, 0))]
                 + [full2d(w) for w in weight_args],
        out_specs=pl.BlockSpec((Bb, T, C), lambda g: (g, 0, 0)),
        scratch_shapes=[pltpu.VMEM((M, C), jnp.float32)],   # MLP accumulator
    )

    # Advisory cost estimate for the XLA scheduler.
    flops = int(B * T * 24 * C * C + B * 4 * T * T * C)
    transcendentals = int(B * n_head * T * T)
    weight_bytes = sum(int(w.size) * jnp.dtype(w.dtype).itemsize for w in weight_args)
    bytes_accessed = int(2 * B * T * C * 4 + weight_bytes)

    # Generation-aware VMEM budget: <= ~75% of physical VMEM (≈48 MiB on v7x,
    # ≈96 MiB on v5e/v6e), and at least the estimated working set.
    hidden = 4 * C
    chunk = mlp_chunk if (0 < mlp_chunk < hidden and hidden % mlp_chunk == 0) else hidden
    act_bytes = (10 * M * C * 4              # x, h1, qkv, x1, h2, y, acc, out + slack
                 + 2 * n_head * T * T * 4    # per-b scores + probs
                 + 2 * M * chunk * 4)        # MLP hidden chunk
    est = 2 * weight_bytes + 4 * Bb * T * C * 4 + act_bytes
    cap = int(0.75 * _vmem_capacity_bytes())
    vmem_limit = int(min(cap, max(32 * 2 ** 20, int(1.5 * est))))

    return pl.pallas_call(
        functools.partial(_block_kernel, n_head, mlp_chunk),
        out_shape=jax.ShapeDtypeStruct((B, T, C), jnp.float32),
        grid_spec=grid_spec,
        compiler_params=pltpu.CompilerParams(
            dimension_semantics=("parallel",),
            vmem_limit_bytes=vmem_limit),
        cost_estimate=pl.CostEstimate(
            flops=flops,
            transcendentals=transcendentals,
            bytes_accessed=bytes_accessed),
    )(x, *weight_args)


def gpt_block_reference(x, params, n_head):
    """Pure-JAX f32 reference (mirrors the PyTorch forward), uses UNPREPARED params."""
    B, T, C = x.shape
    D = C // n_head

    def ln(v, w, b):
        mu = jnp.mean(v, axis=-1, keepdims=True)
        var = jnp.mean((v - mu) ** 2, axis=-1, keepdims=True)
        return (v - mu) / jnp.sqrt(var + 1e-5) * w[0] + b[0]

    h1 = ln(x, params["ln1_w"], params["ln1_b"])
    qkv = h1 @ params["w_qkv"] + params["b_qkv"][0]
    q, k, v = jnp.split(qkv, 3, axis=-1)
    q = q.reshape(B, T, n_head, D).transpose(0, 2, 1, 3)
    k = k.reshape(B, T, n_head, D).transpose(0, 2, 1, 3)
    v = v.reshape(B, T, n_head, D).transpose(0, 2, 1, 3)
    s = jnp.einsum("bhqd,bhkd->bhqk", q, k) / math.sqrt(D)
    mask = jnp.tril(jnp.ones((T, T), dtype=bool))
    s = jnp.where(mask, s, -jnp.inf)
    p = jax.nn.softmax(s, axis=-1)
    y = jnp.einsum("bhqk,bhkd->bhqd", p, v).transpose(0, 2, 1, 3).reshape(B, T, C)
    x1 = x + y @ params["w_proj"] + params["b_proj"][0]
    h2 = ln(x1, params["ln2_w"], params["ln2_b"])
    ff = h2 @ params["w_fc"] + params["b_fc"][0]
    ff = jnp.maximum(ff, 0.0) ** 2
    return x1 + ff @ params["w_proj2"] + params["b_proj2"][0]


def init_params(key, n_embd):
    C = n_embd
    ks = jax.random.split(key, 8)
    std = 0.02
    return {
        # LayerNorm params (PyTorch init: ones / zeros), stored as (1, C) for 2D layout
        "ln1_w": jnp.ones((1, C), jnp.float32),
        "ln1_b": jnp.zeros((1, C), jnp.float32),
        "ln2_w": jnp.ones((1, C), jnp.float32),
        "ln2_b": jnp.zeros((1, C), jnp.float32),
        # Linear weights stored as (in, out); biases as (1, out)
        "w_qkv": std * jax.random.normal(ks[0], (C, 3 * C), jnp.float32),
        "b_qkv": std * jax.random.normal(ks[1], (1, 3 * C), jnp.float32),
        "w_proj": std * jax.random.normal(ks[2], (C, C), jnp.float32),
        "b_proj": std * jax.random.normal(ks[3], (1, C), jnp.float32),
        "w_fc": std * jax.random.normal(ks[4], (C, 4 * C), jnp.float32),
        "b_fc": std * jax.random.normal(ks[5], (1, 4 * C), jnp.float32),
        "w_proj2": std * jax.random.normal(ks[6], (4 * C, C), jnp.float32),
        "b_proj2": std * jax.random.normal(ks[7], (1, C), jnp.float32),
    }


if __name__ == "__main__":
    # Small config: B=2, T=16, n_embd=128 (lane-aligned), n_head=4 (head_dim=32),
    # bias=True, dropout=0 (eval). mlp_chunk=256 exercises the hidden-dim tiling (2 chunks).
    B, T, C, H = 2, 16, 128, 4
    key = jax.random.PRNGKey(0)
    kx, kp = jax.random.split(key)
    x = jax.random.normal(kx, (B, T, C), jnp.float32)
    params = init_params(kp, C)

    # One-time weight prep (bf16 cast + 1/sqrt(D) folded into q columns), outside the call.
    weight_args = prepare_block_params(params, H)

    out = jax.block_until_ready(gpt_block_pallas(x, weight_args, H, mlp_chunk=256))
    ref = gpt_block_reference(x, params, H)

    assert out.shape == (B, T, C)
    # bf16 matmul operands + approx reciprocal vs. a pure-f32 reference -> looser tolerance.
    assert jnp.allclose(out, ref, atol=2e-2, rtol=2e-2), (
        f"max abs err = {jnp.max(jnp.abs(out - ref))}")

    print("KERNEL_OK")
</pallas_src>

<mosaic_0001>
module attributes {stable_mosaic.version = 11 : i64} {
  func.func @_block_kernel(%arg0: i32, %arg1: memref<1x16x128xf32, #tpu.memory_space<vmem>>, %arg2: memref<1x128xf32, #tpu.memory_space<vmem>>, %arg3: memref<1x128xf32, #tpu.memory_space<vmem>>, %arg4: memref<128x384xbf16, #tpu.memory_space<vmem>>, %arg5: memref<1x384xf32, #tpu.memory_space<vmem>>, %arg6: memref<128x128xbf16, #tpu.memory_space<vmem>>, %arg7: memref<1x128xf32, #tpu.memory_space<vmem>>, %arg8: memref<1x128xf32, #tpu.memory_space<vmem>>, %arg9: memref<1x128xf32, #tpu.memory_space<vmem>>, %arg10: memref<128x512xbf16, #tpu.memory_space<vmem>>, %arg11: memref<1x512xf32, #tpu.memory_space<vmem>>, %arg12: memref<512x128xbf16, #tpu.memory_space<vmem>>, %arg13: memref<1x128xf32, #tpu.memory_space<vmem>>, %arg14: memref<1x16x128xf32, #tpu.memory_space<vmem>>, %arg15: memref<16x128xf32, #tpu.memory_space<vmem>>) attributes {dimension_semantics = [#tpu.dimension_semantics<parallel>], iteration_bounds = array<i64: 2>, scalar_prefetch = 0 : i64, scratch_operands = 1 : i64, tpu.core_type = #tpu.core_type<tc>, window_params = [{transform_indices = @transform_0, window_bounds = array<i64: 1, 16, 128>}, {pipeline_mode = #tpu.pipeline_mode<synchronous>, transform_indices = @transform_1, window_bounds = array<i64: 1, 128>}, {pipeline_mode = #tpu.pipeline_mode<synchronous>, transform_indices = @transform_2, window_bounds = array<i64: 1, 128>}, {pipeline_mode = #tpu.pipeline_mode<synchronous>, transform_indices = @transform_3, window_bounds = array<i64: 128, 384>}, {pipeline_mode = #tpu.pipeline_mode<synchronous>, transform_indices = @transform_4, window_bounds = array<i64: 1, 384>}, {pipeline_mode = #tpu.pipeline_mode<synchronous>, transform_indices = @transform_5, window_bounds = array<i64: 128, 128>}, {pipeline_mode = #tpu.pipeline_mode<synchronous>, transform_indices = @transform_6, window_bounds = array<i64: 1, 128>}, {pipeline_mode = #tpu.pipeline_mode<synchronous>, transform_indices = @transform_7, window_bounds = array<i64: 1, 128>}, {pipeline_mode = #tpu.pipeline_mode<synchronous>, transform_indices = @transform_8, window_bounds = array<i64: 1, 128>}, {pipeline_mode = #tpu.pipeline_mode<synchronous>, transform_indices = @transform_9, window_bounds = array<i64: 128, 512>}, {pipeline_mode = #tpu.pipeline_mode<synchronous>, transform_indices = @transform_10, window_bounds = array<i64: 1, 512>}, {pipeline_mode = #tpu.pipeline_mode<synchronous>, transform_indices = @transform_11, window_bounds = array<i64: 512, 128>}, {pipeline_mode = #tpu.pipeline_mode<synchronous>, transform_indices = @transform_12, window_bounds = array<i64: 1, 128>}, {transform_indices = @transform_13, window_bounds = array<i64: 1, 16, 128>}]} {
    %c0 = arith.constant 0 : index
    %c0_0 = arith.constant 0 : index
    %c0_1 = arith.constant 0 : index
    %0 = vector.load %arg1[%c0, %c0_0, %c0_1] : memref<1x16x128xf32, #tpu.memory_space<vmem>>, vector<1x16x128xf32>
    %1 = vector.shape_cast %0 : vector<1x16x128xf32> to vector<16x128xf32>
    %c0_2 = arith.constant 0 : index
    %c0_3 = arith.constant 0 : index
    %2 = vector.load %arg2[%c0_2, %c0_3] : memref<1x128xf32, #tpu.memory_space<vmem>>, vector<1x128xf32>
    %c0_4 = arith.constant 0 : index
    %c0_5 = arith.constant 0 : index
    %3 = vector.load %arg3[%c0_4, %c0_5] : memref<1x128xf32, #tpu.memory_space<vmem>>, vector<1x128xf32>
    %cst = arith.constant dense<0.000000e+00> : vector<16xf32>
    %4 = vector.multi_reduction <add>, %1, %cst [1] : vector<16x128xf32> to vector<16xf32>
    %5 = vector.shape_cast %4 : vector<16xf32> to vector<16x1xf32>
    %cst_6 = arith.constant 1.280000e+02 : f32
    %6 = vector.broadcast %cst_6 : f32 to vector<16x1xf32>
    %7 = arith.divf %5, %6 : vector<16x1xf32>
    %8 = vector.broadcast %7 : vector<16x1xf32> to vector<16x128xf32>
    %9 = arith.subf %1, %8 : vector<16x128xf32>
    %10 = arith.mulf %9, %9 : vector<16x128xf32>
    %cst_7 = arith.constant dense<0.000000e+00> : vector<16xf32>
    %11 = vector.multi_reduction <add>, %10, %cst_7 [1] : vector<16x128xf32> to vector<16xf32>
    %12 = vector.shape_cast %11 : vector<16xf32> to vector<16x1xf32>
    %cst_8 = arith.constant 1.280000e+02 : f32
    %13 = vector.broadcast %cst_8 : f32 to vector<16x1xf32>
    %14 = arith.divf %12, %13 : vector<16x1xf32>
    %cst_9 = arith.constant 9.99999974E-6 : f32
    %15 = vector.broadcast %cst_9 : f32 to vector<16x1xf32>
    %16 = arith.addf %14, %15 : vector<16x1xf32>
    %17 = math.rsqrt %16 : vector<16x1xf32>
    %18 = vector.broadcast %17 : vector<16x1xf32> to vector<16x128xf32>
    %19 = arith.mulf %9, %18 : vector<16x128xf32>
    %20 = vector.broadcast %2 : vector<1x128xf32> to vector<16x128xf32>
    %21 = arith.mulf %19, %20 : vector<16x128xf32>
    %22 = vector.broadcast %3 : vector<1x128xf32> to vector<16x128xf32>
    %23 = arith.addf %21, %22 : vector<16x128xf32>
    %24 = arith.truncf %23 : vector<16x128xf32> to vector<16x128xbf16>
    %c0_10 = arith.constant 0 : index
    %c0_11 = arith.constant 0 : index
    %25 = vector.load %arg4[%c0_10, %c0_11] : memref<128x384xbf16, #tpu.memory_space<vmem>>, vector<128x384xbf16>
    %cst_12 = arith.constant dense<0.000000e+00> : vector<16x384xf32>
    %26 = tpu.matmul %24, %25, %cst_12 {dimension_numbers = #tpu.dot_dimension_numbers<[1], [0], [0], [1], [0, 0, 1, 1], [], []>} : vector<16x128xbf16>, vector<128x384xbf16>, vector<16x384xf32> -> vector<16x384xf32>
    %c0_13 = arith.constant 0 : index
    %c0_14 = arith.constant 0 : index
    %27 = vector.load %arg5[%c0_13, %c0_14] : memref<1x384xf32, #tpu.memory_space<vmem>>, vector<1x384xf32>
    %28 = vector.broadcast %27 : vector<1x384xf32> to vector<16x384xf32>
    %29 = arith.addf %26, %28 : vector<16x384xf32>
    %30 = tpu.iota {dimensions = array<i32: 0>} : vector<16x16xi32>
    %31 = tpu.iota {dimensions = array<i32: 1>} : vector<16x16xi32>
    %32 = arith.cmpi sle, %31, %30 : vector<16x16xi32>
    %33 = vector.shape_cast %32 : vector<16x16xi1> to vector<1x16x16xi1>
    %34 = vector.extract_strided_slice %29 {offsets = [0, 0], sizes = [16, 128], strides = [1, 1]} : vector<16x384xf32> to vector<16x128xf32>
    %35 = vector.shape_cast %34 : vector<16x128xf32> to vector<16x4x32xf32>
    %36 = vector.extract_strided_slice %29 {offsets = [0, 128], sizes = [16, 128], strides = [1, 1]} : vector<16x384xf32> to vector<16x128xf32>
    %37 = vector.shape_cast %36 : vector<16x128xf32> to vector<16x4x32xf32>
    %38 = vector.extract_strided_slice %29 {offsets = [0, 256], sizes = [16, 128], strides = [1, 1]} : vector<16x384xf32> to vector<16x128xf32>
    %39 = vector.shape_cast %38 : vector<16x128xf32> to vector<16x4x32xf32>
    %40 = tpu.transpose %35, [1, 0, 2] : vector<16x4x32xf32> -> vector<4x16x32xf32>
    %41 = arith.truncf %40 : vector<4x16x32xf32> to vector<4x16x32xbf16>
    %42 = tpu.transpose %37, [1, 0, 2] : vector<16x4x32xf32> -> vector<4x16x32xf32>
    %43 = arith.truncf %42 : vector<4x16x32xf32> to vector<4x16x32xbf16>
    %44 = tpu.transpose %39, [1, 0, 2] : vector<16x4x32xf32> -> vector<4x16x32xf32>
    %45 = arith.truncf %44 : vector<4x16x32xf32> to vector<4x16x32xbf16>
    "tpu.trace_start"() <{level = 10 : i32, message = "htd,hsd->hts"}> : () -> ()
    %cst_15 = arith.constant dense<0.000000e+00> : vector<4x16x16xf32>
    %46 = tpu.matmul %41, %43, %cst_15 {dimension_numbers = #tpu.dot_dimension_numbers<[2], [2], [1], [1], [0, 0, 0, 1, 1, 1], [0], [0]>} : vector<4x16x32xbf16>, vector<4x16x32xbf16>, vector<4x16x16xf32> -> vector<4x16x16xf32>
    %cst_16 = arith.constant -1.000000e+30 : f32
    "tpu.trace_stop"() : () -> ()
    %47 = vector.shape_cast %33 : vector<1x16x16xi1> to vector<1x16x16xi1>
    %48 = vector.broadcast %47 : vector<1x16x16xi1> to vector<4x16x16xi1>
    %49 = vector.broadcast %cst_16 : f32 to vector<4x16x16xf32>
    %50 = arith.select %48, %46, %49 : vector<4x16x16xi1>, vector<4x16x16xf32>
    %cst_17 = arith.constant dense<0xFF800000> : vector<4x16xf32>
    %51 = vector.multi_reduction <maximumf>, %50, %cst_17 [2] : vector<4x16x16xf32> to vector<4x16xf32>
    %52 = vector.shape_cast %51 : vector<4x16xf32> to vector<4x16x1xf32>
    %53 = vector.broadcast %52 : vector<4x16x1xf32> to vector<4x16x16xf32>
    %54 = arith.subf %50, %53 : vector<4x16x16xf32>
    %55 = math.exp %54 : vector<4x16x16xf32>
    %cst_18 = arith.constant dense<0.000000e+00> : vector<4x16xf32>
    %56 = vector.multi_reduction <add>, %55, %cst_18 [2] : vector<4x16x16xf32> to vector<4x16xf32>
    %57 = vector.shape_cast %56 : vector<4x16xf32> to vector<4x16x1xf32>
    %58 = tpu.reciprocal %57 {approx = true} : vector<4x16x1xf32> -> vector<4x16x1xf32>
    %59 = vector.broadcast %58 : vector<4x16x1xf32> to vector<4x16x16xf32>
    %60 = arith.mulf %55, %59 : vector<4x16x16xf32>
    %61 = arith.truncf %60 : vector<4x16x16xf32> to vector<4x16x16xbf16>
    "tpu.trace_start"() <{level = 10 : i32, message = "hts,hsd->htd"}> : () -> ()
    %cst_19 = arith.constant dense<0.000000e+00> : vector<4x16x32xf32>
    %62 = tpu.matmul %61, %45, %cst_19 {dimension_numbers = #tpu.dot_dimension_numbers<[2], [1], [1], [2], [0, 0, 0, 1, 1, 2], [0], [0]>} : vector<4x16x16xbf16>, vector<4x16x32xbf16>, vector<4x16x32xf32> -> vector<4x16x32xf32>
    "tpu.trace_stop"() : () -> ()
    %63 = tpu.transpose %62, [1, 0, 2] : vector<4x16x32xf32> -> vector<16x4x32xf32>
    %64 = vector.shape_cast %63 : vector<16x4x32xf32> to vector<16x128xf32>
    %65 = arith.truncf %64 : vector<16x128xf32> to vector<16x128xbf16>
    %c0_20 = arith.constant 0 : index
    %c0_21 = arith.constant 0 : index
    %66 = vector.load %arg6[%c0_20, %c0_21] : memref<128x128xbf16, #tpu.memory_space<vmem>>, vector<128x128xbf16>
    %cst_22 = arith.constant dense<0.000000e+00> : vector<16x128xf32>
    %67 = tpu.matmul %65, %66, %cst_22 {dimension_numbers = #tpu.dot_dimension_numbers<[1], [0], [0], [1], [0, 0, 1, 1], [], []>} : vector<16x128xbf16>, vector<128x128xbf16>, vector<16x128xf32> -> vector<16x128xf32>
    %c0_23 = arith.constant 0 : index
    %c0_24 = arith.constant 0 : index
    %68 = vector.load %arg7[%c0_23, %c0_24] : memref<1x128xf32, #tpu.memory_space<vmem>>, vector<1x128xf32>
    %69 = vector.broadcast %68 : vector<1x128xf32> to vector<16x128xf32>
    %70 = arith.addf %67, %69 : vector<16x128xf32>
    %71 = arith.addf %1, %70 : vector<16x128xf32>
    %c0_25 = arith.constant 0 : index
    %c0_26 = arith.constant 0 : index
    %72 = vector.load %arg8[%c0_25, %c0_26] : memref<1x128xf32, #tpu.memory_space<vmem>>, vector<1x128xf32>
    %c0_27 = arith.constant 0 : index
    %c0_28 = arith.constant 0 : index
    %73 = vector.load %arg9[%c0_27, %c0_28] : memref<1x128xf32, #tpu.memory_space<vmem>>, vector<1x128xf32>
    %cst_29 = arith.constant dense<0.000000e+00> : vector<16xf32>
    %74 = vector.multi_reduction <add>, %71, %cst_29 [1] : vector<16x128xf32> to vector<16xf32>
    %75 = vector.shape_cast %74 : vector<16xf32> to vector<16x1xf32>
    %cst_30 = arith.constant 1.280000e+02 : f32
    %76 = vector.broadcast %cst_30 : f32 to vector<16x1xf32>
    %77 = arith.divf %75, %76 : vector<16x1xf32>
    %78 = vector.broadcast %77 : vector<16x1xf32> to vector<16x128xf32>
    %79 = arith.subf %71, %78 : vector<16x128xf32>
    %80 = arith.mulf %79, %79 : vector<16x128xf32>
    %cst_31 = arith.constant dense<0.000000e+00> : vector<16xf32>
    %81 = vector.multi_reduction <add>, %80, %cst_31 [1] : vector<16x128xf32> to vector<16xf32>
    %82 = vector.shape_cast %81 : vector<16xf32> to vector<16x1xf32>
    %cst_32 = arith.constant 1.280000e+02 : f32
    %83 = vector.broadcast %cst_32 : f32 to vector<16x1xf32>
    %84 = arith.divf %82, %83 : vector<16x1xf32>
    %cst_33 = arith.constant 9.99999974E-6 : f32
    %85 = vector.broadcast %cst_33 : f32 to vector<16x1xf32>
    %86 = arith.addf %84, %85 : vector<16x1xf32>
    %87 = math.rsqrt %86 : vector<16x1xf32>
    %88 = vector.broadcast %87 : vector<16x1xf32> to vector<16x128xf32>
    %89 = arith.mulf %79, %88 : vector<16x128xf32>
    %90 = vector.broadcast %72 : vector<1x128xf32> to vector<16x128xf32>
    %91 = arith.mulf %89, %90 : vector<16x128xf32>
    %92 = vector.broadcast %73 : vector<1x128xf32> to vector<16x128xf32>
    %93 = arith.addf %91, %92 : vector<16x128xf32>
    %94 = arith.truncf %93 : vector<16x128xf32> to vector<16x128xbf16>
    %cst_34 = arith.constant 0.000000e+00 : f32
    %95 = vector.broadcast %cst_34 : f32 to vector<16x128xf32>
    %c0_35 = arith.constant 0 : index
    %c0_36 = arith.constant 0 : index
    %96 = vector.load %arg15[%c0_35, %c0_36] : memref<16x128xf32, #tpu.memory_space<vmem>>, vector<16x128xf32>
    tpu.vector_store %arg15[%c0_35, %c0_36], %95 {strides = array<i32>} : memref<16x128xf32, #tpu.memory_space<vmem>>, vector<16x128xf32>,
    %c0_37 = arith.constant 0 : index
    %c0_38 = arith.constant 0 : index
    %97 = vector.load %arg10[%c0_37, %c0_38] : memref<128x512xbf16, #tpu.memory_space<vmem>>, vector<128x256xbf16>
    %cst_39 = arith.constant dense<0.000000e+00> : vector<16x256xf32>
    %98 = tpu.matmul %94, %97, %cst_39 {dimension_numbers = #tpu.dot_dimension_numbers<[1], [0], [0], [1], [0, 0, 1, 1], [], []>} : vector<16x128xbf16>, vector<128x256xbf16>, vector<16x256xf32> -> vector<16x256xf32>
    %c0_40 = arith.constant 0 : index
    %c0_41 = arith.constant 0 : index
    %99 = vector.load %arg11[%c0_40, %c0_41] : memref<1x512xf32, #tpu.memory_space<vmem>>, vector<1x256xf32>
    %100 = vector.broadcast %99 : vector<1x256xf32> to vector<16x256xf32>
    %101 = arith.addf %98, %100 : vector<16x256xf32>
    %cst_42 = arith.constant 0.000000e+00 : f32
    %102 = vector.broadcast %cst_42 : f32 to vector<16x256xf32>
    %103 = arith.maximumf %101, %102 : vector<16x256xf32>
    %104 = arith.mulf %103, %103 : vector<16x256xf32>
    %105 = arith.truncf %104 : vector<16x256xf32> to vector<16x256xbf16>
    %c0_43 = arith.constant 0 : index
    %c0_44 = arith.constant 0 : index
    %106 = vector.load %arg15[%c0_43, %c0_44] : memref<16x128xf32, #tpu.memory_space<vmem>>, vector<16x128xf32>
    %c0_45 = arith.constant 0 : index
    %c0_46 = arith.constant 0 : index
    %107 = vector.load %arg12[%c0_45, %c0_46] : memref<512x128xbf16, #tpu.memory_space<vmem>>, vector<256x128xbf16>
    %cst_47 = arith.constant dense<0.000000e+00> : vector<16x128xf32>
    %108 = tpu.matmul %105, %107, %cst_47 {dimension_numbers = #tpu.dot_dimension_numbers<[1], [0], [0], [1], [0, 0, 1, 1], [], []>} : vector<16x256xbf16>, vector<256x128xbf16>, vector<16x128xf32> -> vector<16x128xf32>
    %109 = arith.addf %106, %108 : vector<16x128xf32>
    %c0_48 = arith.constant 0 : index
    %c0_49 = arith.constant 0 : index
    %110 = vector.load %arg15[%c0_48, %c0_49] : memref<16x128xf32, #tpu.memory_space<vmem>>, vector<16x128xf32>
    tpu.vector_store %arg15[%c0_48, %c0_49], %109 {strides = array<i32>} : memref<16x128xf32, #tpu.memory_space<vmem>>, vector<16x128xf32>,
    %c0_50 = arith.constant 0 : index
    %c256 = arith.constant 256 : index
    %111 = vector.load %arg10[%c0_50, %c256] : memref<128x512xbf16, #tpu.memory_space<vmem>>, vector<128x256xbf16>
    %cst_51 = arith.constant dense<0.000000e+00> : vector<16x256xf32>
    %112 = tpu.matmul %94, %111, %cst_51 {dimension_numbers = #tpu.dot_dimension_numbers<[1], [0], [0], [1], [0, 0, 1, 1], [], []>} : vector<16x128xbf16>, vector<128x256xbf16>, vector<16x256xf32> -> vector<16x256xf32>
    %c0_52 = arith.constant 0 : index
    %c256_53 = arith.constant 256 : index
    %113 = vector.load %arg11[%c0_52, %c256_53] : memref<1x512xf32, #tpu.memory_space<vmem>>, vector<1x256xf32>
    %114 = vector.broadcast %113 : vector<1x256xf32> to vector<16x256xf32>
    %115 = arith.addf %112, %114 : vector<16x256xf32>
    %cst_54 = arith.constant 0.000000e+00 : f32
    %116 = vector.broadcast %cst_54 : f32 to vector<16x256xf32>
    %117 = arith.maximumf %115, %116 : vector<16x256xf32>
    %118 = arith.mulf %117, %117 : vector<16x256xf32>
    %119 = arith.truncf %118 : vector<16x256xf32> to vector<16x256xbf16>
    %c0_55 = arith.constant 0 : index
    %c0_56 = arith.constant 0 : index
    %120 = vector.load %arg15[%c0_55, %c0_56] : memref<16x128xf32, #tpu.memory_space<vmem>>, vector<16x128xf32>
    %c256_57 = arith.constant 256 : index
    %c0_58 = arith.constant 0 : index
    %121 = vector.load %arg12[%c256_57, %c0_58] : memref<512x128xbf16, #tpu.memory_space<vmem>>, vector<256x128xbf16>
    %cst_59 = arith.constant dense<0.000000e+00> : vector<16x128xf32>
    %122 = tpu.matmul %119, %121, %cst_59 {dimension_numbers = #tpu.dot_dimension_numbers<[1], [0], [0], [1], [0, 0, 1, 1], [], []>} : vector<16x256xbf16>, vector<256x128xbf16>, vector<16x128xf32> -> vector<16x128xf32>
    %123 = arith.addf %120, %122 : vector<16x128xf32>
    %c0_60 = arith.constant 0 : index
    %c0_61 = arith.constant 0 : index
    %124 = vector.load %arg15[%c0_60, %c0_61] : memref<16x128xf32, #tpu.memory_space<vmem>>, vector<16x128xf32>
    tpu.vector_store %arg15[%c0_60, %c0_61], %123 {strides = array<i32>} : memref<16x128xf32, #tpu.memory_space<vmem>>, vector<16x128xf32>,
    %c0_62 = arith.constant 0 : index
    %c0_63 = arith.constant 0 : index
    %125 = vector.load %arg15[%c0_62, %c0_63] : memref<16x128xf32, #tpu.memory_space<vmem>>, vector<16x128xf32>
    %126 = arith.addf %71, %125 : vector<16x128xf32>
    %c0_64 = arith.constant 0 : index
    %c0_65 = arith.constant 0 : index
    %127 = vector.load %arg13[%c0_64, %c0_65] : memref<1x128xf32, #tpu.memory_space<vmem>>, vector<1x128xf32>
    %128 = vector.broadcast %127 : vector<1x128xf32> to vector<16x128xf32>
    %129 = arith.addf %126, %128 : vector<16x128xf32>
    %130 = vector.shape_cast %129 : vector<16x128xf32> to vector<1x16x128xf32>
    %c0_66 = arith.constant 0 : index
    %c0_67 = arith.constant 0 : index
    %c0_68 = arith.constant 0 : index
    %131 = vector.load %arg14[%c0_66, %c0_67, %c0_68] : memref<1x16x128xf32, #tpu.memory_space<vmem>>, vector<1x16x128xf32>
    tpu.vector_store %arg14[%c0_66, %c0_67, %c0_68], %130 {strides = array<i32>} : memref<1x16x128xf32, #tpu.memory_space<vmem>>, vector<1x16x128xf32>,
    return
  }
  func.func @transform_0(%arg0: i32) -> (i32, i32, i32) {
    %c0_i32 = arith.constant 0 : i32
    %c0_i32_0 = arith.constant 0 : i32
    %c0_i32_1 = arith.constant 0 : i32
    return %arg0, %c0_i32, %c0_i32_0 : i32, i32, i32
  }
  func.func @transform_1(%arg0: i32) -> (i32, i32) {
    %c0_i32 = arith.constant 0 : i32
    %c0_i32_0 = arith.constant 0 : i32
    %c0_i32_1 = arith.constant 0 : i32
    return %c0_i32, %c0_i32_0 : i32, i32
  }
  func.func @transform_2(%arg0: i32) -> (i32, i32) {
    %c0_i32 = arith.constant 0 : i32
    %c0_i32_0 = arith.constant 0 : i32
    %c0_i32_1 = arith.constant 0 : i32
    return %c0_i32, %c0_i32_0 : i32, i32
  }
  func.func @transform_3(%arg0: i32) -> (i32, i32) {
    %c0_i32 = arith.constant 0 : i32
    %c0_i32_0 = arith.constant 0 : i32
    %c0_i32_1 = arith.constant 0 : i32
    return %c0_i32, %c0_i32_0 : i32, i32
  }
  func.func @transform_4(%arg0: i32) -> (i32, i32) {
    %c0_i32 = arith.constant 0 : i32
    %c0_i32_0 = arith.constant 0 : i32
    %c0_i32_1 = arith.constant 0 : i32
    return %c0_i32, %c0_i32_0 : i32, i32
  }
  func.func @transform_5(%arg0: i32) -> (i32, i32) {
    %c0_i32 = arith.constant 0 : i32
    %c0_i32_0 = arith.constant 0 : i32
    %c0_i32_1 = arith.constant 0 : i32
    return %c0_i32, %c0_i32_0 : i32, i32
  }
  func.func @transform_6(%arg0: i32) -> (i32, i32) {
    %c0_i32 = arith.constant 0 : i32
    %c0_i32_0 = arith.constant 0 : i32
    %c0_i32_1 = arith.constant 0 : i32
    return %c0_i32, %c0_i32_0 : i32, i32
  }
  func.func @transform_7(%arg0: i32) -> (i32, i32) {
    %c0_i32 = arith.constant 0 : i32
    %c0_i32_0 = arith.constant 0 : i32
    %c0_i32_1 = arith.constant 0 : i32
    return %c0_i32, %c0_i32_0 : i32, i32
  }
  func.func @transform_8(%arg0: i32) -> (i32, i32) {
    %c0_i32 = arith.constant 0 : i32
    %c0_i32_0 = arith.constant 0 : i32
    %c0_i32_1 = arith.constant 0 : i32
    return %c0_i32, %c0_i32_0 : i32, i32
  }
  func.func @transform_9(%arg0: i32) -> (i32, i32) {
    %c0_i32 = arith.constant 0 : i32
    %c0_i32_0 = arith.constant 0 : i32
    %c0_i32_1 = arith.constant 0 : i32
    return %c0_i32, %c0_i32_0 : i32, i32
  }
  func.func @transform_10(%arg0: i32) -> (i32, i32) {
    %c0_i32 = arith.constant 0 : i32
    %c0_i32_0 = arith.constant 0 : i32
    %c0_i32_1 = arith.constant 0 : i32
    return %c0_i32, %c0_i32_0 : i32, i32
  }
  func.func @transform_11(%arg0: i32) -> (i32, i32) {
    %c0_i32 = arith.constant 0 : i32
    %c0_i32_0 = arith.constant 0 : i32
    %c0_i32_1 = arith.constant 0 : i32
    return %c0_i32, %c0_i32_0 : i32, i32
  }
  func.func @transform_12(%arg0: i32) -> (i32, i32) {
    %c0_i32 = arith.constant 0 : i32
    %c0_i32_0 = arith.constant 0 : i32
    %c0_i32_1 = arith.constant 0 : i32
    return %c0_i32, %c0_i32_0 : i32, i32
  }
  func.func @transform_13(%arg0: i32) -> (i32, i32, i32) {
    %c0_i32 = arith.constant 0 : i32
    %c0_i32_0 = arith.constant 0 : i32
    %c0_i32_1 = arith.constant 0 : i32
    return %arg0, %c0_i32, %c0_i32_0 : i32, i32, i32
  }
}

</mosaic_0001>

<llo_original>
// kernel: tpu_custom_call.1
$region0: #{tpu_custom_call.1}
  #allocation0 [shape = 'u32[]', space=smem, size = 0x4, offset = 0x4, fixed_abs, tag = 'smem constant byte address 0x4 - core index']
  #allocation1 [shape = 'u32[144,128]{1,0:T(1,128)}', space=vmem, size = 0x12000, scoped, tag = 'internal scratch']
  #allocation2 [shape = 'f32[16,128]{1,0:T(8,128)}', space=vmem, size = 0x2000, scoped, tag = 'scratch operand']
  %s0 = inlined_call_operand.hbm [shape: f32[2,16,128], index: 0, kind: input, shape index: {}]
  %s1 = inlined_call_operand.hbm [shape: f32[1,128], index: 1, kind: input, shape index: {}]
  %s2 = inlined_call_operand.hbm [shape: f32[1,128], index: 2, kind: input, shape index: {}]
  %s3 = inlined_call_operand.hbm [shape: bf16[128,384], index: 3, kind: input, shape index: {}]
  %s4 = inlined_call_operand.vmem [shape: f32[1,384], index: 4, kind: input, shape index: {}]
  %s5 = inlined_call_operand.hbm [shape: bf16[128,128], index: 5, kind: input, shape index: {}]
  %s6 = inlined_call_operand.vmem [shape: f32[1,128], index: 6, kind: input, shape index: {}]
  %s7 = inlined_call_operand.vmem [shape: f32[1,128], index: 7, kind: input, shape index: {}]
  %s8 = inlined_call_operand.vmem [shape: f32[1,128], index: 8, kind: input, shape index: {}]
  %s9 = inlined_call_operand.hbm [shape: bf16[128,512], index: 9, kind: input, shape index: {}]
  %s10 = inlined_call_operand.vmem [shape: f32[1,512], index: 10, kind: input, shape index: {}]
  %s11 = inlined_call_operand.hbm [shape: bf16[512,128], index: 11, kind: input, shape index: {}]
  %s12 = inlined_call_operand.vmem [shape: f32[1,128], index: 12, kind: input, shape index: {}]
  %s13 = inlined_call_operand.hbm [shape: f32[2,16,128], index: 13, kind: output, shape index: {}]
  %s14 = sld [smem:[#allocation0]]
  $region113: #{tpu_custom_call.1} parent=0
    _
  %s16 = ssub.s32 1, %s14
  %s17 = scalar_select 0, %s16, %s14
  $region1: #{tpu_custom_call.1} parent=0
    #allocation3 [shape = 'u8[16384]{0}', space=vmem, size = 0x4000, scoped, tag = 'input window, operand 0']
    #allocation4 [shape = 's32[2]{0}', space=sflag, size = 0x8, scoped, tag = 'scoped memory for tpu_custom_call.1']
    #allocation5 [shape = 's32[2]{0}', space=sflag, size = 0x8, scoped, tag = 'scoped memory for tpu_custom_call.1']
    #allocation6 [shape = 'u8[512]{0}', space=vmem, size = 0x400, scoped, tag = 'input window, operand 1, single buffered']
    #allocation7 [shape = 's32[1]{0}', space=sflag, size = 0x4, scoped, tag = 'scoped memory for tpu_custom_call.1']
    #allocation8 [shape = 'u8[512]{0}', space=vmem, size = 0x400, scoped, tag = 'input window, operand 2, single buffered']
    #allocation9 [shape = 'u8[98304]{0}', space=vmem, size = 0x18000, scoped, tag = 'input window, operand 3, single buffered']
    #allocation10 [shape = 's32[1]{0}', space=sflag, size = 0x4, scoped, tag = 'scoped memory for tpu_custom_call.1']
    #allocation11 [shape = 'u8[32768]{0}', space=vmem, size = 0x8000, scoped, tag = 'input window, operand 5, single buffered']
    #allocation12 [shape = 'u8[131072]{0}', space=vmem, size = 0x20000, scoped, tag = 'input window, operand 9, single buffered']
    #allocation13 [shape = 's32[1]{0}', space=sflag, size = 0x4, scoped, tag = 'scoped memory for tpu_custom_call.1']
    #allocation14 [shape = 'u8[131072]{0}', space=vmem, size = 0x20000, scoped, tag = 'input window, operand 11, single buffered']
    #allocation15 [shape = 'u8[16384]{0}', space=vmem, size = 0x4000, scoped, tag = 'output window, operand 0']
    %18 = vsyncpa [#allocation4], 0
    %s19 = scalar_lea.sflag [#allocation4], 1
    %20 = vsyncpa %s19, 0
    %21 = vsyncpa [#allocation7], 0
    %22 = vsyncpa [#allocation10], 0
    %23 = vsyncpa [#allocation13], 0
    %24 = vsyncpa [#allocation5], 0
    %s25 = scalar_lea.sflag [#allocation5], 1
    %26 = vsyncpa %s25, 0
    loop: start=0, step=1, limit=4
    $region2: #{tpu_custom_call.1} parent=1 // loop_pre_header
      _
    $region3: #{tpu_custom_call.1} parent=1 // loop_header
      %s28 = sphi 0, %s32
      %p29 = scmp.ge.s32.totalorder %s28, 4
      %s38 = sphi 0, %s40
      %s41 = sphi 0, %s38
      %s42 = sphi 0, %s41
      %s58 = sphi 0, %s42
      %s62 = sphi 0, %s62
      %s64 = sphi 0, %s62
      %s65 = sphi 0, %s64
      %s79 = sphi 0, %s65
      %s83 = sphi 0, %s83
      %s85 = sphi 0, %s83
      %s86 = sphi 0, %s85
      %s100 = sphi 0, %s86
      %s104 = sphi 0, %s104
      %s106 = sphi 0, %s104
      %s107 = sphi 0, %s106
      %s121 = sphi 0, %s107
      %s125 = sphi 0, %s125
      %s127 = sphi 0, %s125
      %s128 = sphi 0, %s127
      %s142 = sphi 0, %s128
      %s146 = sphi 0, %s146
      %s148 = sphi 0, %s146
      %s149 = sphi 0, %s148
      %s163 = sphi 0, %s149
      %s167 = sphi 0, %s167
      %s169 = sphi 0, %s167
      %s170 = sphi 0, %s169
      %s184 = sphi 0, %s170
      %s188 = sphi 0, %s188
      %s190 = sphi 0, %s188
      %s191 = sphi 0, %s190
      %s205 = sphi 0, %s191
      %s209 = sphi 0, %s209
      %s211 = sphi 0, %s209
      %s212 = sphi 0, %s211
      %s226 = sphi 0, %s212
      %s230 = sphi 0, %s230
      %s232 = sphi 0, %s230
      %s233 = sphi 0, %s232
      %s247 = sphi 0, %s233
      %s251 = sphi 0, %s251
      %s253 = sphi 0, %s251
      %s254 = sphi 0, %s253
      %s268 = sphi 0, %s254
      %s272 = sphi 0, %s272
      %s274 = sphi 0, %s272
      %s275 = sphi 0, %s274
      %s289 = sphi 0, %s275
      %s293 = sphi 0, %s293
      %s295 = sphi 0, %s293
      %s296 = sphi 0, %s295
      %s310 = sphi 0, %s296
      %s316 = sphi 0, %s318
      %s319 = sphi 0, %s316
      %s320 = sphi 0, %s319
      %s336 = sphi 0, %s320
    $region4: #{tpu_custom_call.1} parent=1 // loop_header_branch
      %31 = sbr.rel (%p29) target = $region8
    $region5: #{tpu_custom_call.1} parent=1 // loop_body
      %s33 = ssub.s32 %s28, 1
      %s34 = ssub.s32 %s28, 2
      %s35 = sadd.s32 %s28, 1
      %s36 = ssub.s32 %s28, %s35
      %p37 = scmp.eq.s32.totalorder %s36, 0
      %s39 = sadd.s32 %s38, 1
      %s40 = scalar_select %p37, %s38, %s39
      %p43 = pneg %p37
      %p44 = scmp.eq.s32.totalorder %s28, 1
      %p45 = por %p43, %p44
      %p46 = scmp.ne.s32.totalorder %s38, %s41
      %p47 = scmp.eq.s32.totalorder %s28, 0
      %p48 = por %p46, %p47
      %p49 = scmp.ne.s32.totalorder %s38, %s41
      %p50 = scmp.eq.s32.totalorder %s33, 1
      %p51 = por %p49, %p50
      %p52 = scmp.ne.s32.totalorder %s41, %s42
      %p53 = scmp.eq.s32.totalorder %s33, 0
      %p54 = por %p52, %p53
      %p55 = scmp.ne.s32.totalorder %s41, %s42
      %p56 = scmp.eq.s32.totalorder %s34, 1
      %p57 = por %p55, %p56
      %p59 = scmp.ne.s32.totalorder %s42, %s58
      %p60 = scmp.eq.s32.totalorder %s34, 0
      %p61 = por %p59, %p60
      %s63 = sadd.s32 %s62, 1
      %p66 = scmp.eq.s32.totalorder %s28, 1
      %p67 = scmp.ne.s32.totalorder %s62, %s64
      %p68 = scmp.eq.s32.totalorder %s28, 0
      %p69 = por %p67, %p68
      %p70 = scmp.ne.s32.totalorder %s62, %s64
      %p71 = scmp.eq.s32.totalorder %s33, 1
      %p72 = por %p70, %p71
      %p73 = scmp.ne.s32.totalorder %s64, %s65
      %p74 = scmp.eq.s32.totalorder %s33, 0
      %p75 = por %p73, %p74
      %p76 = scmp.ne.s32.totalorder %s64, %s65
      %p77 = scmp.eq.s32.totalorder %s34, 1
      %p78 = por %p76, %p77
      %p80 = scmp.ne.s32.totalorder %s65, %s79
      %p81 = scmp.eq.s32.totalorder %s34, 0
      %p82 = por %p80, %p81
      %s84 = sadd.s32 %s83, 1
      %p87 = scmp.eq.s32.totalorder %s28, 1
      %p88 = scmp.ne.s32.totalorder %s83, %s85
      %p89 = scmp.eq.s32.totalorder %s28, 0
      %p90 = por %p88, %p89
      %p91 = scmp.ne.s32.totalorder %s83, %s85
      %p92 = scmp.eq.s32.totalorder %s33, 1
      %p93 = por %p91, %p92
      %p94 = scmp.ne.s32.totalorder %s85, %s86
      %p95 = scmp.eq.s32.totalorder %s33, 0
      %p96 = por %p94, %p95
      %p97 = scmp.ne.s32.totalorder %s85, %s86
      %p98 = scmp.eq.s32.totalorder %s34, 1
      %p99 = por %p97, %p98
      %p101 = scmp.ne.s32.totalorder %s86, %s100
      %p102 = scmp.eq.s32.totalorder %s34, 0
      %p103 = por %p101, %p102
      %s105 = sadd.s32 %s104, 1
      %p108 = scmp.eq.s32.totalorder %s28, 1
      %p109 = scmp.ne.s32.totalorder %s104, %s106
      %p110 = scmp.eq.s32.totalorder %s28, 0
      %p111 = por %p109, %p110
      %p112 = scmp.ne.s32.totalorder %s104, %s106
      %p113 = scmp.eq.s32.totalorder %s33, 1
      %p114 = por %p112, %p113
      %p115 = scmp.ne.s32.totalorder %s106, %s107
      %p116 = scmp.eq.s32.totalorder %s33, 0
      %p117 = por %p115, %p116
      %p118 = scmp.ne.s32.totalorder %s106, %s107
      %p119 = scmp.eq.s32.totalorder %s34, 1
      %p120 = por %p118, %p119
      %p122 = scmp.ne.s32.totalorder %s107, %s121
      %p123 = scmp.eq.s32.totalorder %s34, 0
      %p124 = por %p122, %p123
      %s126 = sadd.s32 %s125, 1
      %p129 = scmp.eq.s32.totalorder %s28, 1
      %p130 = scmp.ne.s32.totalorder %s125, %s127
      %p131 = scmp.eq.s32.totalorder %s28, 0
      %p132 = por %p130, %p131
      %p133 = scmp.ne.s32.totalorder %s125, %s127
      %p134 = scmp.eq.s32.totalorder %s33, 1
      %p135 = por %p133, %p134
      %p136 = scmp.ne.s32.totalorder %s127, %s128
      %p137 = scmp.eq.s32.totalorder %s33, 0
      %p138 = por %p136, %p137
      %p139 = scmp.ne.s32.totalorder %s127, %s128
      %p140 = scmp.eq.s32.totalorder %s34, 1
      %p141 = por %p139, %p140
      %p143 = scmp.ne.s32.totalorder %s128, %s142
      %p144 = scmp.eq.s32.totalorder %s34, 0
      %p145 = por %p143, %p144
      %s147 = sadd.s32 %s146, 1
      %p150 = scmp.eq.s32.totalorder %s28, 1
      %p151 = scmp.ne.s32.totalorder %s146, %s148
      %p152 = scmp.eq.s32.totalorder %s28, 0
      %p153 = por %p151, %p152
      %p154 = scmp.ne.s32.totalorder %s146, %s148
      %p155 = scmp.eq.s32.totalorder %s33, 1
      %p156 = por %p154, %p155
      %p157 = scmp.ne.s32.totalorder %s148, %s149
      %p158 = scmp.eq.s32.totalorder %s33, 0
      %p159 = por %p157, %p158
      %p160 = scmp.ne.s32.totalorder %s148, %s149
      %p161 = scmp.eq.s32.totalorder %s34, 1
      %p162 = por %p160, %p161
      %p164 = scmp.ne.s32.totalorder %s149, %s163
      %p165 = scmp.eq.s32.totalorder %s34, 0
      %p166 = por %p164, %p165
      %s168 = sadd.s32 %s167, 1
      %p171 = scmp.eq.s32.totalorder %s28, 1
      %p172 = scmp.ne.s32.totalorder %s167, %s169
      %p173 = scmp.eq.s32.totalorder %s28, 0
      %p174 = por %p172, %p173
      %p175 = scmp.ne.s32.totalorder %s167, %s169
      %p176 = scmp.eq.s32.totalorder %s33, 1
      %p177 = por %p175, %p176
      %p178 = scmp.ne.s32.totalorder %s169, %s170
      %p179 = scmp.eq.s32.totalorder %s33, 0
      %p180 = por %p178, %p179
      %p181 = scmp.ne.s32.totalorder %s169, %s170
      %p182 = scmp.eq.s32.totalorder %s34, 1
      %p183 = por %p181, %p182
      %p185 = scmp.ne.s32.totalorder %s170, %s184
      %p186 = scmp.eq.s32.totalorder %s34, 0
      %p187 = por %p185, %p186
      %s189 = sadd.s32 %s188, 1
      %p192 = scmp.eq.s32.totalorder %s28, 1
      %p193 = scmp.ne.s32.totalorder %s188, %s190
      %p194 = scmp.eq.s32.totalorder %s28, 0
      %p195 = por %p193, %p194
      %p196 = scmp.ne.s32.totalorder %s188, %s190
      %p197 = scmp.eq.s32.totalorder %s33, 1
      %p198 = por %p196, %p197
      %p199 = scmp.ne.s32.totalorder %s190, %s191
      %p200 = scmp.eq.s32.totalorder %s33, 0
      %p201 = por %p199, %p200
      %p202 = scmp.ne.s32.totalorder %s190, %s191
      %p203 = scmp.eq.s32.totalorder %s34, 1
      %p204 = por %p202, %p203
      %p206 = scmp.ne.s32.totalorder %s191, %s205
      %p207 = scmp.eq.s32.totalorder %s34, 0
      %p208 = por %p206, %p207
      %s210 = sadd.s32 %s209, 1
      %p213 = scmp.eq.s32.totalorder %s28, 1
      %p214 = scmp.ne.s32.totalorder %s209, %s211
      %p215 = scmp.eq.s32.totalorder %s28, 0
      %p216 = por %p214, %p215
      %p217 = scmp.ne.s32.totalorder %s209, %s211
      %p218 = scmp.eq.s32.totalorder %s33, 1
      %p219 = por %p217, %p218
      %p220 = scmp.ne.s32.totalorder %s211, %s212
      %p221 = scmp.eq.s32.totalorder %s33, 0
      %p222 = por %p220, %p221
      %p223 = scmp.ne.s32.totalorder %s211, %s212
      %p224 = scmp.eq.s32.totalorder %s34, 1
      %p225 = por %p223, %p224
      %p227 = scmp.ne.s32.totalorder %s212, %s226
      %p228 = scmp.eq.s32.totalorder %s34, 0
      %p229 = por %p227, %p228
      %s231 = sadd.s32 %s230, 1
      %p234 = scmp.eq.s32.totalorder %s28, 1
      %p235 = scmp.ne.s32.totalorder %s230, %s232
      %p236 = scmp.eq.s32.totalorder %s28, 0
      %p237 = por %p235, %p236
      %p238 = scmp.ne.s32.totalorder %s230, %s232
      %p239 = scmp.eq.s32.totalorder %s33, 1
      %p240 = por %p238, %p239
      %p241 = scmp.ne.s32.totalorder %s232, %s233
      %p242 = scmp.eq.s32.totalorder %s33, 0
      %p243 = por %p241, %p242
      %p244 = scmp.ne.s32.totalorder %s232, %s233
      %p245 = scmp.eq.s32.totalorder %s34, 1
      %p246 = por %p244, %p245
      %p248 = scmp.ne.s32.totalorder %s233, %s247
      %p249 = scmp.eq.s32.totalorder %s34, 0
      %p250 = por %p248, %p249
      %s252 = sadd.s32 %s251, 1
      %p255 = scmp.eq.s32.totalorder %s28, 1
      %p256 = scmp.ne.s32.totalorder %s251, %s253
      %p257 = scmp.eq.s32.totalorder %s28, 0
      %p258 = por %p256, %p257
      %p259 = scmp.ne.s32.totalorder %s251, %s253
      %p260 = scmp.eq.s32.totalorder %s33, 1
      %p261 = por %p259, %p260
      %p262 = scmp.ne.s32.totalorder %s253, %s254
      %p263 = scmp.eq.s32.totalorder %s33, 0
      %p264 = por %p262, %p263
      %p265 = scmp.ne.s32.totalorder %s253, %s254
      %p266 = scmp.eq.s32.totalorder %s34, 1
      %p267 = por %p265, %p266
      %p269 = scmp.ne.s32.totalorder %s254, %s268
      %p270 = scmp.eq.s32.totalorder %s34, 0
      %p271 = por %p269, %p270
      %s273 = sadd.s32 %s272, 1
      %p276 = scmp.eq.s32.totalorder %s28, 1
      %p277 = scmp.ne.s32.totalorder %s272, %s274
      %p278 = scmp.eq.s32.totalorder %s28, 0
      %p279 = por %p277, %p278
      %p280 = scmp.ne.s32.totalorder %s272, %s274
      %p281 = scmp.eq.s32.totalorder %s33, 1
      %p282 = por %p280, %p281
      %p283 = scmp.ne.s32.totalorder %s274, %s275
      %p284 = scmp.eq.s32.totalorder %s33, 0
      %p285 = por %p283, %p284
      %p286 = scmp.ne.s32.totalorder %s274, %s275
      %p287 = scmp.eq.s32.totalorder %s34, 1
      %p288 = por %p286, %p287
      %p290 = scmp.ne.s32.totalorder %s275, %s289
      %p291 = scmp.eq.s32.totalorder %s34, 0
      %p292 = por %p290, %p291
      %s294 = sadd.s32 %s293, 1
      %p297 = scmp.eq.s32.totalorder %s28, 1
      %p298 = scmp.ne.s32.totalorder %s293, %s295
      %p299 = scmp.eq.s32.totalorder %s28, 0
      %p300 = por %p298, %p299
      %p301 = scmp.ne.s32.totalorder %s293, %s295
      %p302 = scmp.eq.s32.totalorder %s33, 1
      %p303 = por %p301, %p302
      %p304 = scmp.ne.s32.totalorder %s295, %s296
      %p305 = scmp.eq.s32.totalorder %s33, 0
      %p306 = por %p304, %p305
      %p307 = scmp.ne.s32.totalorder %s295, %s296
      %p308 = scmp.eq.s32.totalorder %s34, 1
      %p309 = por %p307, %p308
      %p311 = scmp.ne.s32.totalorder %s296, %s310
      %p312 = scmp.eq.s32.totalorder %s34, 0
      %p313 = por %p311, %p312
      %s314 = ssub.s32 %s28, %s35
      %p315 = scmp.eq.s32.totalorder %s314, 0
      %s317 = sadd.s32 %s316, 1
      %s318 = scalar_select %p315, %s316, %s317
      %p321 = pneg %p315
      %p322 = scmp.eq.s32.totalorder %s28, 1
      %p323 = por %p321, %p322
      %p324 = scmp.ne.s32.totalorder %s316, %s319
      %p325 = scmp.eq.s32.totalorder %s28, 0
      %p326 = por %p324, %p325
      %p327 = scmp.ne.s32.totalorder %s316, %s319
      %p328 = scmp.eq.s32.totalorder %s33, 1
      %p329 = por %p327, %p328
      %p330 = scmp.ne.s32.totalorder %s319, %s320
      %p331 = scmp.eq.s32.totalorder %s33, 0
      %p332 = por %p330, %p331
      %p333 = scmp.ne.s32.totalorder %s319, %s320
      %p334 = scmp.eq.s32.totalorder %s34, 1
      %p335 = por %p333, %p334
      %p337 = scmp.ne.s32.totalorder %s320, %s336
      %p338 = scmp.eq.s32.totalorder %s34, 0
      %p339 = por %p337, %p338
      %p340 = scmp.le.s32.totalorder 1, %s28
      %p341 = scmp.lt.s32.totalorder %s28, 3
      %p342 = pnand %p340, %p341
      %p343 = pneg %p342
      // Predicated region
      $region9: #{tpu_custom_call.1} parent=5 // pred_check
        _
      $region10: #{tpu_custom_call.1} parent=5 // pred_check_branch
        %345 = sbr.rel (%p342) target = $region12
      $region11: #{tpu_custom_call.1} parent=5 // pred_region
        %s346 = ssub.s32 %s28, 1
        // Predicated region
        $region13: #{tpu_custom_call.1} parent=11 // pred_check
          %p347 = pneg %p75
        $region14: #{tpu_custom_call.1} parent=11 // pred_check_branch
          %349 = sbr.rel (%p347) target = $region16
        $region15: #{tpu_custom_call.1} parent=11 // pred_region
          %s351 = ssub.s32 16, 16
          %352 = vsyncadd [#allocation7], %s351
          %s354 = sshll.u32 [#allocation6], 4
          %s355 = int_to_ptr.vmem [resolvable:$true] %s354
          %357 = dma.hbm_to_vmem [thread:$0]  %s1, 16, %s355, [#allocation7]
        $region16: #{tpu_custom_call.1} parent=11 // pred_fallthru
          _
        // Predicated region
        $region17: #{tpu_custom_call.1} parent=11 // pred_check
          %p358 = pneg %p96
        $region18: #{tpu_custom_call.1} parent=11 // pred_check_branch
          %360 = sbr.rel (%p358) target = $region20
        $region19: #{tpu_custom_call.1} parent=11 // pred_region
          %s362 = ssub.s32 16, 16
          %363 = vsyncadd [#allocation7], %s362
          %s365 = sshll.u32 [#allocation8], 4
          %s366 = int_to_ptr.vmem [resolvable:$true] %s365
          %368 = dma.hbm_to_vmem [thread:$0]  %s2, 16, %s366, [#allocation7]
        $region20: #{tpu_custom_call.1} parent=11 // pred_fallthru
          _
        // Predicated region
        $region21: #{tpu_custom_call.1} parent=11 // pred_check
          %p369 = pneg %p117
        $region22: #{tpu_custom_call.1} parent=11 // pred_check_branch
          %371 = sbr.rel (%p369) target = $region24
        $region23: #{tpu_custom_call.1} parent=11 // pred_region
          %s373 = ssub.s32 3072, 3072
          %374 = vsyncadd [#allocation10], %s373
          %s375 = sshll.u32 [#allocation9], 4
          %s376 = int_to_ptr.vmem [resolvable:$true] %s375
          %381 = dma.hbm_to_vmem [thread:$0]  %s3, 3072, %s376, [#allocation10], 192, 192, 12
        $region24: #{tpu_custom_call.1} parent=11 // pred_fallthru
          _
        // Predicated region
        $region25: #{tpu_custom_call.1} parent=11 // pred_check
          %p382 = pneg %p138
        $region26: #{tpu_custom_call.1} parent=11 // pred_check_branch
          %384 = sbr.rel (%p382) target = $region28
        $region27: #{tpu_custom_call.1} parent=11 // pred_region
          _
        $region28: #{tpu_custom_call.1} parent=11 // pred_fallthru
          _
        // Predicated region
        $region29: #{tpu_custom_call.1} parent=11 // pred_check
          %p385 = pneg %p159
        $region30: #{tpu_custom_call.1} parent=11 // pred_check_branch
          %387 = sbr.rel (%p385) target = $region32
        $region31: #{tpu_custom_call.1} parent=11 // pred_region
          %s389 = ssub.s32 1024, 1024
          %390 = vsyncadd [#allocation10], %s389
          %s391 = sshll.u32 [#allocation11], 4
          %s392 = int_to_ptr.vmem [resolvable:$true] %s391
          %397 = dma.hbm_to_vmem [thread:$0]  %s5, 1024, %s392, [#allocation10], 64, 64, 4
        $region32: #{tpu_custom_call.1} parent=11 // pred_fallthru
          _
        // Predicated region
        $region33: #{tpu_custom_call.1} parent=11 // pred_check
          %p398 = pneg %p180
        $region34: #{tpu_custom_call.1} parent=11 // pred_check_branch
          %400 = sbr.rel (%p398) target = $region36
        $region35: #{tpu_custom_call.1} parent=11 // pred_region
          _
        $region36: #{tpu_custom_call.1} parent=11 // pred_fallthru
          _
        // Predicated region
        $region37: #{tpu_custom_call.1} parent=11 // pred_check
          %p401 = pneg %p201
        $region38: #{tpu_custom_call.1} parent=11 // pred_check_branch
          %403 = sbr.rel (%p401) target = $region40
        $region39: #{tpu_custom_call.1} parent=11 // pred_region
          _
        $region40: #{tpu_custom_call.1} parent=11 // pred_fallthru
          _
        // Predicated region
        $region41: #{tpu_custom_call.1} parent=11 // pred_check
          %p404 = pneg %p222
        $region42: #{tpu_custom_call.1} parent=11 // pred_check_branch
          %406 = sbr.rel (%p404) target = $region44
        $region43: #{tpu_custom_call.1} parent=11 // pred_region
          _
        $region44: #{tpu_custom_call.1} parent=11 // pred_fallthru
          _
        // Predicated region
        $region45: #{tpu_custom_call.1} parent=11 // pred_check
          %p407 = pneg %p243
        $region46: #{tpu_custom_call.1} parent=11 // pred_check_branch
          %409 = sbr.rel (%p407) target = $region48
        $region47: #{tpu_custom_call.1} parent=11 // pred_region
          %s411 = ssub.s32 4096, 4096
          %412 = vsyncadd [#allocation13], %s411
          %s413 = sshll.u32 [#allocation12], 4
          %s414 = int_to_ptr.vmem [resolvable:$true] %s413
          %419 = dma.hbm_to_vmem [thread:$0]  %s9, 4096, %s414, [#allocation13], 256, 256, 16
        $region48: #{tpu_custom_call.1} parent=11 // pred_fallthru
          _
        // Predicated region
        $region49: #{tpu_custom_call.1} parent=11 // pred_check
          %p420 = pneg %p264
        $region50: #{tpu_custom_call.1} parent=11 // pred_check_branch
          %422 = sbr.rel (%p420) target = $region52
        $region51: #{tpu_custom_call.1} parent=11 // pred_region
          _
        $region52: #{tpu_custom_call.1} parent=11 // pred_fallthru
          _
        // Predicated region
        $region53: #{tpu_custom_call.1} parent=11 // pred_check
          %p423 = pneg %p285
        $region54: #{tpu_custom_call.1} parent=11 // pred_check_branch
          %425 = sbr.rel (%p423) target = $region56
        $region55: #{tpu_custom_call.1} parent=11 // pred_region
          %s427 = ssub.s32 4096, 4096
          %428 = vsyncadd [#allocation13], %s427
          %s429 = sshll.u32 [#allocation14], 4
          %s430 = int_to_ptr.vmem [resolvable:$true] %s429
          %435 = dma.hbm_to_vmem [thread:$0]  %s11, 4096, %s430, [#allocation13], 64, 64, 4
        $region56: #{tpu_custom_call.1} parent=11 // pred_fallthru
          _
        // Predicated region
        $region57: #{tpu_custom_call.1} parent=11 // pred_check
          %p436 = pneg %p306
        $region58: #{tpu_custom_call.1} parent=11 // pred_check_branch
          %438 = sbr.rel (%p436) target = $region60
        $region59: #{tpu_custom_call.1} parent=11 // pred_region
          _
        $region60: #{tpu_custom_call.1} parent=11 // pred_fallthru
          _
      $region12: #{tpu_custom_call.1} parent=5 // pred_fallthru
        _
      %p439 = scmp.lt.s32.totalorder %s28, 2
      // Predicated region
      $region61: #{tpu_custom_call.1} parent=5 // pred_check
        %p440 = pneg %p439
      $region62: #{tpu_custom_call.1} parent=5 // pred_check_branch
        %442 = sbr.rel (%p440) target = $region64
      $region63: #{tpu_custom_call.1} parent=5 // pred_region
        // Predicated region
        $region65: #{tpu_custom_call.1} parent=63 // pred_check
          %p443 = pneg %p48
        $region66: #{tpu_custom_call.1} parent=63 // pred_check_branch
          %445 = sbr.rel (%p443) target = $region68
        $region67: #{tpu_custom_call.1} parent=63 // pred_region
          %s446 = sand.u32 %s38, 1
          %s447 = scalar_lea.sflag [#allocation4], %s446
          %s448 = sand.u32 %s38, 1
          %s449 = smul.addr %s448, 16
          %s450 = scalar_lea.vmem [#allocation3], %s449
          %s452 = ssub.s32 256, 256
          %453 = vsyncadd %s447, %s452
          %s454 = smul.addr %s28, 2
          %s455 = smul.addr %s454, 128
          %s456 = scalar_lea.hbm %s0, %s455
          %s457 = sshll.u32 %s450, 4
          %s458 = int_to_ptr.vmem [resolvable:$true] %s457
          %463 = dma.hbm_to_vmem [thread:$0]  %s456, 256, %s458, %s447, 128, 128, 8
        $region68: #{tpu_custom_call.1} parent=63 // pred_fallthru
          _
      $region64: #{tpu_custom_call.1} parent=5 // pred_fallthru
        _
      %p464 = scmp.le.s32.totalorder 1, %s28
      %p465 = scmp.lt.s32.totalorder %s28, 3
      %p466 = pnand %p464, %p465
      %p467 = pneg %p466
      // Predicated region
      $region69: #{tpu_custom_call.1} parent=5 // pred_check
        _
      $region70: #{tpu_custom_call.1} parent=5 // pred_check_branch
        %469 = sbr.rel (%p466) target = $region72
      $region71: #{tpu_custom_call.1} parent=5 // pred_region
        %s470 = ssub.s32 %s28, 1
        %s471 = sand.u32 %s41, 1
        %s472 = scalar_lea.sflag [#allocation4], %s471
        %s473 = sand.u32 %s41, 1
        %s474 = smul.addr %s473, 16
        %s475 = scalar_lea.vmem [#allocation3], %s474
        // Predicated region
        $region73: #{tpu_custom_call.1} parent=71 // pred_check
          %p476 = pneg %p54
        $region74: #{tpu_custom_call.1} parent=71 // pred_check_branch
          %478 = sbr.rel (%p476) target = $region76
        $region75: #{tpu_custom_call.1} parent=71 // pred_region
          %479 = dma.done %s472, 256
        $region76: #{tpu_custom_call.1} parent=71 // pred_fallthru
          _
        // Predicated region
        $region77: #{tpu_custom_call.1} parent=71 // pred_check
          %p480 = pneg %p75
        $region78: #{tpu_custom_call.1} parent=71 // pred_check_branch
          %482 = sbr.rel (%p480) target = $region80
        $region79: #{tpu_custom_call.1} parent=71 // pred_region
          %483 = dma.done [#allocation7], 16
        $region80: #{tpu_custom_call.1} parent=71 // pred_fallthru
          _
        // Predicated region
        $region81: #{tpu_custom_call.1} parent=71 // pred_check
          %p484 = pneg %p96
        $region82: #{tpu_custom_call.1} parent=71 // pred_check_branch
          %486 = sbr.rel (%p484) target = $region84
        $region83: #{tpu_custom_call.1} parent=71 // pred_region
          %487 = dma.done [#allocation7], 16
        $region84: #{tpu_custom_call.1} parent=71 // pred_fallthru
          _
        // Predicated region
        $region85: #{tpu_custom_call.1} parent=71 // pred_check
          %p488 = pneg %p117
        $region86: #{tpu_custom_call.1} parent=71 // pred_check_branch
          %490 = sbr.rel (%p488) target = $region88
        $region87: #{tpu_custom_call.1} parent=71 // pred_region
          %491 = dma.done [#allocation10], 3072
        $region88: #{tpu_custom_call.1} parent=71 // pred_fallthru
          _
        // Predicated region
        $region89: #{tpu_custom_call.1} parent=71 // pred_check
          %p492 = pneg %p159
        $region90: #{tpu_custom_call.1} parent=71 // pred_check_branch
          %494 = sbr.rel (%p492) target = $region92
        $region91: #{tpu_custom_call.1} parent=71 // pred_region
          %495 = dma.done [#allocation10], 1024
        $region92: #{tpu_custom_call.1} parent=71 // pred_fallthru
          _
        // Predicated region
        $region93: #{tpu_custom_call.1} parent=71 // pred_check
          %p496 = pneg %p243
        $region94: #{tpu_custom_call.1} parent=71 // pred_check_branch
          %498 = sbr.rel (%p496) target = $region96
        $region95: #{tpu_custom_call.1} parent=71 // pred_region
          %499 = dma.done [#allocation13], 4096
        $region96: #{tpu_custom_call.1} parent=71 // pred_fallthru
          _
        // Predicated region
        $region97: #{tpu_custom_call.1} parent=71 // pred_check
          %p500 = pneg %p285
        $region98: #{tpu_custom_call.1} parent=71 // pred_check_branch
          %502 = sbr.rel (%p500) target = $region100
        $region99: #{tpu_custom_call.1} parent=71 // pred_region
          %503 = dma.done [#allocation13], 4096
        $region100: #{tpu_custom_call.1} parent=71 // pred_fallthru
          _
        %s504 = sand.u32 %s41, 1
        %s505 = scalar_lea.sflag [#allocation4], %s504
        %s506 = sand.u32 %s41, 1
        %s507 = smul.addr %s506, 16
        %s508 = scalar_lea.vmem [#allocation3], %s507
        %p509 = pneg %p54
        %p510 = pneg %p51
        %p511 = pneg %p75
        %p512 = pneg %p72
        %p513 = pneg %p96
        %p514 = pneg %p93
        %p515 = pneg %p117
        %p516 = pneg %p114
        %p517 = pneg %p138
        %p518 = pneg %p135
        %p519 = pneg %p159
        %p520 = pneg %p156
        %p521 = pneg %p180
        %p522 = pneg %p177
        %p523 = pneg %p201
        %p524 = pneg %p198
        %p525 = pneg %p222
        %p526 = pneg %p219
        %p527 = pneg %p243
        %p528 = pneg %p240
        %p529 = pneg %p264
        %p530 = pneg %p261
        %p531 = pneg %p285
        %p532 = pneg %p282
        %p533 = pneg %p306
        %p534 = pneg %p303
        %p535 = pneg %p332
        %p536 = pneg %p329
        %s537 = sand.u32 %s319, 1
        %s538 = scalar_lea.sflag [#allocation5], %s537
        %s539 = sand.u32 %s319, 1
        %s540 = smul.addr %s539, 16
        %s541 = scalar_lea.vmem [#allocation15], %s540
        %v543 = vld [vmem:[%s475] sm:$0xff]
        %v544 = vld [vmem:[%s475 + $0x8] sm:$0xff]
        %v545 = vld [vmem:[#allocation6] sm:$0x1]
        %v546 = vld [vmem:[#allocation8] sm:$0x1]
        %547 = vadd.xlane.f32.xlu0 %v543
        %v548 = vpop.xlane.xlu0 %547
        %549 = vadd.xlane.f32.xlu0 %v544
        %v550 = vpop.xlane.xlu0 %549
        %v551 = vrcp.pop 128.0
        %v552 = vmul.f32 %v548, %v551
        %v553 = vmul.f32 %v550, %v551
        %v554 = vsub.f32 %v543, %v552
        %v555 = vsub.f32 %v544, %v553
        %v556 = vmul.f32 %v554, %v554
        %v557 = vmul.f32 %v555, %v555
        %558 = vadd.xlane.f32.xlu0 %v556
        %v559 = vpop.xlane.xlu0 %558
        %560 = vadd.xlane.f32.xlu0 %v557
        %v561 = vpop.xlane.xlu0 %560
        %v562 = vmul.f32 %v559, %v551
        %v563 = vmul.f32 %v561, %v551
        %v564 = vadd.f32 %v562, 1e-05
        %v565 = vadd.f32 %v563, 1e-05
        %v566 = vrsqrt.pop %v564
        %v567 = vrsqrt.pop %v565
        %v568 = vmul.f32 %v554, %v566
        %v569 = vmul.f32 %v555, %v567
        %v571 = vlaneseq
        %v572 = vshrl.u32 %v571, 7
        %v573 = vsub.s32 0, %v572
        %v574 = vrot.slane %v545, %v573
        %v576 = vmul.f32 %v568, %v574
        %v577 = vmul.f32 %v569, %v574
        %v579 = vlaneseq
        %v580 = vshrl.u32 %v579, 7
        %v581 = vsub.s32 0, %v580
        %v582 = vrot.slane %v546, %v581
        %v584 = vadd.f32 %v576, %v582
        %v585 = vadd.f32 %v577, %v582
        %v586 = vpack.c.bf16 %v585, %v584
        %v587 = vld [vmem:[#allocation9] sm:$0xff]
        %v588 = vld [vmem:[#allocation9 + $0x8] sm:$0xf]
        %v589 = vld [vmem:[#allocation9 + $0xc] sm:$0xff]
        %v590 = vld [vmem:[#allocation9 + $0x14] sm:$0xf]
        %v591 = vld [vmem:[#allocation9 + $0x18] sm:$0xff]
        %v592 = vld [vmem:[#allocation9 + $0x20] sm:$0xf]
        %v593 = vld [vmem:[#allocation9 + $0x24] sm:$0xff]
        %v594 = vld [vmem:[#allocation9 + $0x2c] sm:$0xf]
        %v595 = vld [vmem:[#allocation9 + $0x30] sm:$0xff]
        %v596 = vld [vmem:[#allocation9 + $0x38] sm:$0xf]
        %v597 = vld [vmem:[#allocation9 + $0x3c] sm:$0xff]
        %v598 = vld [vmem:[#allocation9 + $0x44] sm:$0xf]
        %v599 = vld [vmem:[#allocation9 + $0x48] sm:$0xff]
        %v600 = vld [vmem:[#allocation9 + $0x50] sm:$0xf]
        %v601 = vld [vmem:[#allocation9 + $0x54] sm:$0xff]
        %v602 = vld [vmem:[#allocation9 + $0x5c] sm:$0xf]
        %v603 = vld [vmem:[#allocation9 + $0x60] sm:$0xff]
        %v604 = vld [vmem:[#allocation9 + $0x68] sm:$0xf]
        %v605 = vld [vmem:[#allocation9 + $0x6c] sm:$0xff]
        %v606 = vld [vmem:[#allocation9 + $0x74] sm:$0xf]
        %v607 = vld [vmem:[#allocation9 + $0x78] sm:$0xff]
        %v608 = vld [vmem:[#allocation9 + $0x80] sm:$0xf]
        %v609 = vld [vmem:[#allocation9 + $0x84] sm:$0xff]
        %v610 = vld [vmem:[#allocation9 + $0x8c] sm:$0xf]
        %v611 = vld [vmem:[#allocation9 + $0x90] sm:$0xff]
        %v612 = vld [vmem:[#allocation9 + $0x98] sm:$0xf]
        %v613 = vld [vmem:[#allocation9 + $0x9c] sm:$0xff]
        %v614 = vld [vmem:[#allocation9 + $0xa4] sm:$0xf]
        %v615 = vld [vmem:[#allocation9 + $0xa8] sm:$0xff]
        %v616 = vld [vmem:[#allocation9 + $0xb0] sm:$0xf]
        %v617 = vld [vmem:[#allocation9 + $0xb4] sm:$0xff]
        %v618 = vld [vmem:[#allocation9 + $0xbc] sm:$0xf]
        %v619 = vld [vmem:[%s4] sm:$0x7]
        %v621 = vlaneseq
        %v622 = vshrl.u32 %v621, 7
        %v623 = vsub.s32 0, %v622
        %v624 = vrot.slane %v619, %v623
        %v625 = vlaneseq
        %v626 = vshrl.u32 %v625, 7
        %v627 = vsub.s32 1, %v626
        %v628 = vrot.slane %v619, %v627
        %v629 = vlaneseq
        %v630 = vshrl.u32 %v629, 7
        %v631 = vsub.s32 2, %v630
        %v632 = vrot.slane %v619, %v631
        %v668 = vunpack.c.l.b16 %v587
        %v669 = vunpack.c.h.b16 %v587
        %v670 = vunpack.c.l.b16 %v588
        %v671 = vunpack.c.l.b16 %v589
        %v672 = vunpack.c.h.b16 %v589
        %v673 = vunpack.c.l.b16 %v590
        %v674 = vunpack.c.l.b16 %v591
        %v675 = vunpack.c.h.b16 %v591
        %v676 = vunpack.c.l.b16 %v592
        %v677 = vunpack.c.l.b16 %v593
        %v678 = vunpack.c.h.b16 %v593
        %v679 = vunpack.c.l.b16 %v594
        %v680 = vunpack.c.l.b16 %v595
        %v681 = vunpack.c.h.b16 %v595
        %v682 = vunpack.c.l.b16 %v596
        %v683 = vunpack.c.l.b16 %v597
        %v684 = vunpack.c.h.b16 %v597
        %v685 = vunpack.c.l.b16 %v598
        %v686 = vunpack.c.l.b16 %v599
        %v687 = vunpack.c.h.b16 %v599
        %v688 = vunpack.c.l.b16 %v600
        %v689 = vunpack.c.l.b16 %v601
        %v690 = vunpack.c.h.b16 %v601
        %v691 = vunpack.c.l.b16 %v602
        %v692 = vunpack.c.l.b16 %v603
        %v693 = vunpack.c.h.b16 %v603
        %v694 = vunpack.c.l.b16 %v604
        %v695 = vunpack.c.l.b16 %v605
        %v696 = vunpack.c.h.b16 %v605
        %v697 = vunpack.c.l.b16 %v606
        %v698 = vunpack.c.l.b16 %v607
        %v699 = vunpack.c.h.b16 %v607
        %v700 = vunpack.c.l.b16 %v608
        %v701 = vunpack.c.l.b16 %v609
        %v702 = vunpack.c.h.b16 %v609
        %v703 = vunpack.c.l.b16 %v610
        %v704 = vunpack.c.l.b16 %v611
        %v705 = vunpack.c.h.b16 %v611
        %v706 = vunpack.c.l.b16 %v612
        %v707 = vunpack.c.l.b16 %v613
        %v708 = vunpack.c.h.b16 %v613
        %v709 = vunpack.c.l.b16 %v614
        %v710 = vunpack.c.l.b16 %v615
        %v711 = vunpack.c.h.b16 %v615
        %v712 = vunpack.c.l.b16 %v616
        %v713 = vunpack.c.l.b16 %v617
        %v714 = vunpack.c.h.b16 %v617
        %v715 = vunpack.c.l.b16 %v618
        %v716 = vpack.c.b16 %v671, %v668
        %v717 = vpack.c.b16 %v672, %v669
        %v718 = vpack.c.b16 %v673, %v670
        %v719 = vpack.c.b16 %v677, %v674
        %v720 = vpack.c.b16 %v678, %v675
        %v721 = vpack.c.b16 %v679, %v676
        %v722 = vpack.c.b16 %v683, %v680
        %v723 = vpack.c.b16 %v684, %v681
        %v724 = vpack.c.b16 %v685, %v682
        %v725 = vpack.c.b16 %v689, %v686
        %v726 = vpack.c.b16 %v690, %v687
        %v727 = vpack.c.b16 %v691, %v688
        %v728 = vpack.c.b16 %v695, %v692
        %v729 = vpack.c.b16 %v696, %v693
        %v730 = vpack.c.b16 %v697, %v694
        %v731 = vpack.c.b16 %v701, %v698
        %v732 = vpack.c.b16 %v702, %v699
        %v733 = vpack.c.b16 %v703, %v700
        %v734 = vpack.c.b16 %v707, %v704
        %v735 = vpack.c.b16 %v708, %v705
        %v736 = vpack.c.b16 %v709, %v706
        %v737 = vpack.c.b16 %v713, %v710
        %v738 = vpack.c.b16 %v714, %v711
        %v739 = vpack.c.b16 %v715, %v712
        %764 = vmatprep.subr.bf16.mxu0 %v738
        %765 = vmatpush1.bf16.msra.mxu0 %v737
        %766 = vmatprep.subr.bf16.mxu0 %v735
        %767 = vmatpush1.bf16.msra.mxu0 %v734
        %768 = vmatprep.subr.bf16.mxu0 %v732
        %769 = vmatpush1.bf16.msra.mxu0 %v731
        %770 = vmatprep.subr.bf16.mxu0 %v729
        %771 = vmatpush1.bf16.msra.mxu0 %v728
        %772 = vmatprep.subr.bf16.mxu0 %v726
        %773 = vmatpush1.bf16.msra.mxu0 %v725
        %774 = vmatprep.subr.bf16.mxu0 %v723
        %775 = vmatpush1.bf16.msra.mxu0 %v722
        %776 = vmatprep.subr.bf16.mxu0 %v720
        %777 = vmatpush1.bf16.msra.mxu0 %v719
        %778 = vmatprep.subr.bf16.mxu0 %v717
        %779 = vmatpush1.bf16.msra.mxu0 %v716
        %780 = vmatprep.subr.bf16.mxu0 0
        %781 = vmatpush2.bf16.msra.mxu0 0
        %782 = vmatprep.subr.bf16.mxu0 0
        %783 = vmatpush2.bf16.msra.mxu0 0
        %784 = vmatprep.subr.bf16.mxu0 0
        %785 = vmatpush2.bf16.msra.mxu0 0
        %786 = vmatprep.subr.bf16.mxu0 0
        %787 = vmatpush2.bf16.msra.mxu0 0
        %788 = vmatprep.subr.bf16.mxu0 0
        %789 = vmatpush2.bf16.msra.mxu0 0
        %790 = vmatprep.subr.bf16.mxu0 0
        %791 = vmatpush2.bf16.msra.mxu0 0
        %792 = vmatprep.subr.bf16.mxu0 0
        %793 = vmatpush2.bf16.msra.mxu0 0
        %794 = vmatprep.subr.bf16.mxu0 0
        %795 = vmatpush2.bf16.msra.mxu0 0
        %796 = vmatprep.mubr.bf16.mxu0 0
        %797 = vmatmul.mubr.bf16.gmra.mxu0 %v586
        %v798 = vpop.f32.mrf.mxu0
        %v799 = vadd.f32 %v624, %v798
        %v800 = vpop.f32.mrf.mxu0
        %v801 = vadd.f32 %v628, %v800
        %v802 = vpop.f32.mrf.mxu0
        %v803 = vadd.f32 %v624, %v802
        %v804 = vpop.f32.mrf.mxu0
        %v805 = vadd.f32 %v628, %v804
        %806 = vdwg.mxu0
        %807 = vmatprep.subr.bf16.mxu0 0
        %808 = vmatpush1.bf16.msra.mxu0 %v739
        %809 = vmatprep.subr.bf16.mxu0 0
        %810 = vmatpush1.bf16.msra.mxu0 %v736
        %811 = vmatprep.subr.bf16.mxu0 0
        %812 = vmatpush1.bf16.msra.mxu0 %v733
        %813 = vmatprep.subr.bf16.mxu0 0
        %814 = vmatpush1.bf16.msra.mxu0 %v730
        %815 = vmatprep.subr.bf16.mxu0 0
        %816 = vmatpush1.bf16.msra.mxu0 %v727
        %817 = vmatprep.subr.bf16.mxu0 0
        %818 = vmatpush1.bf16.msra.mxu0 %v724
        %819 = vmatprep.subr.bf16.mxu0 0
        %820 = vmatpush1.bf16.msra.mxu0 %v721
        %821 = vmatprep.subr.bf16.mxu0 0
        %822 = vmatpush1.bf16.msra.mxu0 %v718
        %823 = vmatprep.subr.bf16.mxu0 0
        %824 = vmatpush2.bf16.msra.mxu0 0
        %825 = vmatprep.subr.bf16.mxu0 0
        %826 = vmatpush2.bf16.msra.mxu0 0
        %827 = vmatprep.subr.bf16.mxu0 0
        %828 = vmatpush2.bf16.msra.mxu0 0
        %829 = vmatprep.subr.bf16.mxu0 0
        %830 = vmatpush2.bf16.msra.mxu0 0
        %831 = vmatprep.subr.bf16.mxu0 0
        %832 = vmatpush2.bf16.msra.mxu0 0
        %833 = vmatprep.subr.bf16.mxu0 0
        %834 = vmatpush2.bf16.msra.mxu0 0
        %835 = vmatprep.subr.bf16.mxu0 0
        %836 = vmatpush2.bf16.msra.mxu0 0
        %837 = vmatprep.subr.bf16.mxu0 0
        %838 = vmatpush2.bf16.msra.mxu0 0
        %839 = vmatprep.mubr.bf16.mxu0 0
        %840 = vmatmul.mubr.bf16.gmra.mxu0 %v586
        %v841 = vpop.f32.mrf.mxu0
        %v842 = vadd.f32 %v632, %v841
        %v843 = vpop.f32.mrf.mxu0
        %v844 = vpop.f32.mrf.mxu0
        %v845 = vadd.f32 %v632, %v844
        %v846 = vpop.f32.mrf.mxu0
        %847 = vdwg.mxu0
        %v848 = vlaneseq
        %v849 = vshrl.u32 %v848, 7
        %v850 = vadd.s32 %v849, 8
        %v851 = vlaneseq
        %v852 = vand.u32 %v851, 127
        %vm853 = vcmp.le.s32.totalorder %v852, %v849
        %vm854 = vcmp.le.s32.totalorder %v852, %v850
        %857 = vrot.lane.b32.xlu0 %v799, 96
        %v858 = vpop.permute.xlu0 %857
        %859 = vrot.lane.b32.xlu0 %v803, 96
        %v860 = vpop.permute.xlu0 %859
        %863 = vrot.lane.b32.xlu0 %v799, 64
        %v864 = vpop.permute.xlu0 %863
        %865 = vrot.lane.b32.xlu0 %v803, 64
        %v866 = vpop.permute.xlu0 %865
        %869 = vrot.lane.b32.xlu0 %v799, 32
        %v870 = vpop.permute.xlu0 %869
        %871 = vrot.lane.b32.xlu0 %v803, 32
        %v872 = vpop.permute.xlu0 %871
        %v875 = vcombine.low %v799, %v864
        %v876 = vcombine.high %v799, %v864
        %v878 = vunpack.c.l.s4 1983009808
        %v879 = vunpack.c.0.s8 %v878
        %v880 = vlaneseq
        %v881 = vshrl.u32 %v880, 7
        %v882 = vsub.s32 %v879, %v881
        %v883 = vrot.slane %v875, %v882
        %v885 = vunpack.c.l.s4 1983009808
        %v886 = vunpack.c.0.s8 %v885
        %v887 = vlaneseq
        %v888 = vshrl.u32 %v887, 7
        %v889 = vsub.s32 %v886, %v888
        %v890 = vrot.slane %v876, %v889
        %v891 = vcombine.low %v858, %v870
        %v892 = vcombine.high %v858, %v870
        %v894 = vunpack.c.l.s4 1983009808
        %v895 = vunpack.c.0.s8 %v894
        %v896 = vlaneseq
        %v897 = vshrl.u32 %v896, 7
        %v898 = vsub.s32 %v895, %v897
        %v899 = vrot.slane %v891, %v898
        %v901 = vunpack.c.l.s4 1983009808
        %v902 = vunpack.c.0.s8 %v901
        %v903 = vlaneseq
        %v904 = vshrl.u32 %v903, 7
        %v905 = vsub.s32 %v902, %v904
        %v906 = vrot.slane %v892, %v905
        %v907 = vcombine.low %v883, %v899
        %v908 = vcombine.high %v883, %v899
        %v910 = vunpack.c.l.s4 1934713408
        %v911 = vunpack.c.0.s8 %v910
        %v912 = vlaneseq
        %v913 = vshrl.u32 %v912, 7
        %v914 = vsub.s32 %v911, %v913
        %v915 = vrot.slane %v907, %v914
        %v917 = vunpack.c.l.s4 1934713408
        %v918 = vunpack.c.0.s8 %v917
        %v919 = vlaneseq
        %v920 = vshrl.u32 %v919, 7
        %v921 = vsub.s32 %v918, %v920
        %v922 = vrot.slane %v908, %v921
        %v923 = vcombine.low %v890, %v906
        %v924 = vcombine.high %v890, %v906
        %v926 = vunpack.c.l.s4 1934713408
        %v927 = vunpack.c.0.s8 %v926
        %v928 = vlaneseq
        %v929 = vshrl.u32 %v928, 7
        %v930 = vsub.s32 %v927, %v929
        %v931 = vrot.slane %v923, %v930
        %v933 = vunpack.c.l.s4 1934713408
        %v934 = vunpack.c.0.s8 %v933
        %v935 = vlaneseq
        %v936 = vshrl.u32 %v935, 7
        %v937 = vsub.s32 %v934, %v936
        %v938 = vrot.slane %v924, %v937
        %v939 = vcombine.high %v915, 0.0
        %v940 = vcombine.high %v922, 0.0
        %v941 = vcombine.high %v931, 0.0
        %v942 = vcombine.high %v938, 0.0
        %v943 = vcombine.low %v803, %v866
        %v944 = vcombine.high %v803, %v866
        %v946 = vunpack.c.l.s4 1983009808
        %v947 = vunpack.c.0.s8 %v946
        %v948 = vlaneseq
        %v949 = vshrl.u32 %v948, 7
        %v950 = vsub.s32 %v947, %v949
        %v951 = vrot.slane %v943, %v950
        %v953 = vunpack.c.l.s4 1983009808
        %v954 = vunpack.c.0.s8 %v953
        %v955 = vlaneseq
        %v956 = vshrl.u32 %v955, 7
        %v957 = vsub.s32 %v954, %v956
        %v958 = vrot.slane %v944, %v957
        %v959 = vcombine.low %v860, %v872
        %v960 = vcombine.high %v860, %v872
        %v962 = vunpack.c.l.s4 1983009808
        %v963 = vunpack.c.0.s8 %v962
        %v964 = vlaneseq
        %v965 = vshrl.u32 %v964, 7
        %v966 = vsub.s32 %v963, %v965
        %v967 = vrot.slane %v959, %v966
        %v969 = vunpack.c.l.s4 1983009808
        %v970 = vunpack.c.0.s8 %v969
        %v971 = vlaneseq
        %v972 = vshrl.u32 %v971, 7
        %v973 = vsub.s32 %v970, %v972
        %v974 = vrot.slane %v960, %v973
        %v975 = vcombine.low %v951, %v967
        %v976 = vcombine.high %v951, %v967
        %v978 = vunpack.c.l.s4 1934713408
        %v979 = vunpack.c.0.s8 %v978
        %v980 = vlaneseq
        %v981 = vshrl.u32 %v980, 7
        %v982 = vsub.s32 %v979, %v981
        %v983 = vrot.slane %v975, %v982
        %v985 = vunpack.c.l.s4 1934713408
        %v986 = vunpack.c.0.s8 %v985
        %v987 = vlaneseq
        %v988 = vshrl.u32 %v987, 7
        %v989 = vsub.s32 %v986, %v988
        %v990 = vrot.slane %v976, %v989
        %v991 = vcombine.low %v958, %v974
        %v992 = vcombine.high %v958, %v974
        %v994 = vunpack.c.l.s4 1934713408
        %v995 = vunpack.c.0.s8 %v994
        %v996 = vlaneseq
        %v997 = vshrl.u32 %v996, 7
        %v998 = vsub.s32 %v995, %v997
        %v999 = vrot.slane %v991, %v998
        %v1001 = vunpack.c.l.s4 1934713408
        %v1002 = vunpack.c.0.s8 %v1001
        %v1003 = vlaneseq
        %v1004 = vshrl.u32 %v1003, 7
        %v1005 = vsub.s32 %v1002, %v1004
        %v1006 = vrot.slane %v992, %v1005
        %v1007 = vcombine.high %v983, 0.0
        %v1008 = vcombine.high %v990, 0.0
        %v1009 = vcombine.high %v999, 0.0
        %v1010 = vcombine.high %v1006, 0.0
        %1013 = vrot.lane.b32.xlu0 %v801, 96
        %v1014 = vpop.permute.xlu0 %1013
        %1015 = vrot.lane.b32.xlu0 %v805, 96
        %v1016 = vpop.permute.xlu0 %1015
        %1019 = vrot.lane.b32.xlu0 %v801, 64
        %v1020 = vpop.permute.xlu0 %1019
        %1021 = vrot.lane.b32.xlu0 %v805, 64
        %v1022 = vpop.permute.xlu0 %1021
        %1025 = vrot.lane.b32.xlu0 %v801, 32
        %v1026 = vpop.permute.xlu0 %1025
        %1027 = vrot.lane.b32.xlu0 %v805, 32
        %v1028 = vpop.permute.xlu0 %1027
        %v1031 = vcombine.low %v801, %v1020
        %v1032 = vcombine.high %v801, %v1020
        %v1034 = vunpack.c.l.s4 1983009808
        %v1035 = vunpack.c.0.s8 %v1034
        %v1036 = vlaneseq
        %v1037 = vshrl.u32 %v1036, 7
        %v1038 = vsub.s32 %v1035, %v1037
        %v1039 = vrot.slane %v1031, %v1038
        %v1041 = vunpack.c.l.s4 1983009808
        %v1042 = vunpack.c.0.s8 %v1041
        %v1043 = vlaneseq
        %v1044 = vshrl.u32 %v1043, 7
        %v1045 = vsub.s32 %v1042, %v1044
        %v1046 = vrot.slane %v1032, %v1045
        %v1047 = vcombine.low %v1014, %v1026
        %v1048 = vcombine.high %v1014, %v1026
        %v1050 = vunpack.c.l.s4 1983009808
        %v1051 = vunpack.c.0.s8 %v1050
        %v1052 = vlaneseq
        %v1053 = vshrl.u32 %v1052, 7
        %v1054 = vsub.s32 %v1051, %v1053
        %v1055 = vrot.slane %v1047, %v1054
        %v1057 = vunpack.c.l.s4 1983009808
        %v1058 = vunpack.c.0.s8 %v1057
        %v1059 = vlaneseq
        %v1060 = vshrl.u32 %v1059, 7
        %v1061 = vsub.s32 %v1058, %v1060
        %v1062 = vrot.slane %v1048, %v1061
        %v1063 = vcombine.low %v1039, %v1055
        %v1064 = vcombine.high %v1039, %v1055
        %v1066 = vunpack.c.l.s4 1934713408
        %v1067 = vunpack.c.0.s8 %v1066
        %v1068 = vlaneseq
        %v1069 = vshrl.u32 %v1068, 7
        %v1070 = vsub.s32 %v1067, %v1069
        %v1071 = vrot.slane %v1063, %v1070
        %v1073 = vunpack.c.l.s4 1934713408
        %v1074 = vunpack.c.0.s8 %v1073
        %v1075 = vlaneseq
        %v1076 = vshrl.u32 %v1075, 7
        %v1077 = vsub.s32 %v1074, %v1076
        %v1078 = vrot.slane %v1064, %v1077
        %v1079 = vcombine.low %v1046, %v1062
        %v1080 = vcombine.high %v1046, %v1062
        %v1082 = vunpack.c.l.s4 1934713408
        %v1083 = vunpack.c.0.s8 %v1082
        %v1084 = vlaneseq
        %v1085 = vshrl.u32 %v1084, 7
        %v1086 = vsub.s32 %v1083, %v1085
        %v1087 = vrot.slane %v1079, %v1086
        %v1089 = vunpack.c.l.s4 1934713408
        %v1090 = vunpack.c.0.s8 %v1089
        %v1091 = vlaneseq
        %v1092 = vshrl.u32 %v1091, 7
        %v1093 = vsub.s32 %v1090, %v1092
        %v1094 = vrot.slane %v1080, %v1093
        %v1095 = vcombine.high %v1071, 0.0
        %v1096 = vcombine.high %v1078, 0.0
        %v1097 = vcombine.high %v1087, 0.0
        %v1098 = vcombine.high %v1094, 0.0
        %v1099 = vcombine.low %v805, %v1022
        %v1100 = vcombine.high %v805, %v1022
        %v1102 = vunpack.c.l.s4 1983009808
        %v1103 = vunpack.c.0.s8 %v1102
        %v1104 = vlaneseq
        %v1105 = vshrl.u32 %v1104, 7
        %v1106 = vsub.s32 %v1103, %v1105
        %v1107 = vrot.slane %v1099, %v1106
        %v1109 = vunpack.c.l.s4 1983009808
        %v1110 = vunpack.c.0.s8 %v1109
        %v1111 = vlaneseq
        %v1112 = vshrl.u32 %v1111, 7
        %v1113 = vsub.s32 %v1110, %v1112
        %v1114 = vrot.slane %v1100, %v1113
        %v1115 = vcombine.low %v1016, %v1028
        %v1116 = vcombine.high %v1016, %v1028
        %v1118 = vunpack.c.l.s4 1983009808
        %v1119 = vunpack.c.0.s8 %v1118
        %v1120 = vlaneseq
        %v1121 = vshrl.u32 %v1120, 7
        %v1122 = vsub.s32 %v1119, %v1121
        %v1123 = vrot.slane %v1115, %v1122
        %v1125 = vunpack.c.l.s4 1983009808
        %v1126 = vunpack.c.0.s8 %v1125
        %v1127 = vlaneseq
        %v1128 = vshrl.u32 %v1127, 7
        %v1129 = vsub.s32 %v1126, %v1128
        %v1130 = vrot.slane %v1116, %v1129
        %v1131 = vcombine.low %v1107, %v1123
        %v1132 = vcombine.high %v1107, %v1123
        %v1134 = vunpack.c.l.s4 1934713408
        %v1135 = vunpack.c.0.s8 %v1134
        %v1136 = vlaneseq
        %v1137 = vshrl.u32 %v1136, 7
        %v1138 = vsub.s32 %v1135, %v1137
        %v1139 = vrot.slane %v1131, %v1138
        %v1141 = vunpack.c.l.s4 1934713408
        %v1142 = vunpack.c.0.s8 %v1141
        %v1143 = vlaneseq
        %v1144 = vshrl.u32 %v1143, 7
        %v1145 = vsub.s32 %v1142, %v1144
        %v1146 = vrot.slane %v1132, %v1145
        %v1147 = vcombine.low %v1114, %v1130
        %v1148 = vcombine.high %v1114, %v1130
        %v1150 = vunpack.c.l.s4 1934713408
        %v1151 = vunpack.c.0.s8 %v1150
        %v1152 = vlaneseq
        %v1153 = vshrl.u32 %v1152, 7
        %v1154 = vsub.s32 %v1151, %v1153
        %v1155 = vrot.slane %v1147, %v1154
        %v1157 = vunpack.c.l.s4 1934713408
        %v1158 = vunpack.c.0.s8 %v1157
        %v1159 = vlaneseq
        %v1160 = vshrl.u32 %v1159, 7
        %v1161 = vsub.s32 %v1158, %v1160
        %v1162 = vrot.slane %v1148, %v1161
        %v1163 = vcombine.high %v1139, 0.0
        %v1164 = vcombine.high %v1146, 0.0
        %v1165 = vcombine.high %v1155, 0.0
        %v1166 = vcombine.high %v1162, 0.0
        %1169 = vrot.lane.b32.xlu0 %v842, 96
        %v1170 = vpop.permute.xlu0 %1169
        %1171 = vrot.lane.b32.xlu0 %v845, 96
        %v1172 = vpop.permute.xlu0 %1171
        %1175 = vrot.lane.b32.xlu0 %v842, 64
        %v1176 = vpop.permute.xlu0 %1175
        %1177 = vrot.lane.b32.xlu0 %v845, 64
        %v1178 = vpop.permute.xlu0 %1177
        %1181 = vrot.lane.b32.xlu0 %v842, 32
        %v1182 = vpop.permute.xlu0 %1181
        %1183 = vrot.lane.b32.xlu0 %v845, 32
        %v1184 = vpop.permute.xlu0 %1183
        %v1187 = vcombine.low %v842, %v1176
        %v1188 = vcombine.high %v842, %v1176
        %v1190 = vunpack.c.l.s4 1983009808
        %v1191 = vunpack.c.0.s8 %v1190
        %v1192 = vlaneseq
        %v1193 = vshrl.u32 %v1192, 7
        %v1194 = vsub.s32 %v1191, %v1193
        %v1195 = vrot.slane %v1187, %v1194
        %v1197 = vunpack.c.l.s4 1983009808
        %v1198 = vunpack.c.0.s8 %v1197
        %v1199 = vlaneseq
        %v1200 = vshrl.u32 %v1199, 7
        %v1201 = vsub.s32 %v1198, %v1200
        %v1202 = vrot.slane %v1188, %v1201
        %v1203 = vcombine.low %v1170, %v1182
        %v1204 = vcombine.high %v1170, %v1182
        %v1206 = vunpack.c.l.s4 1983009808
        %v1207 = vunpack.c.0.s8 %v1206
        %v1208 = vlaneseq
        %v1209 = vshrl.u32 %v1208, 7
        %v1210 = vsub.s32 %v1207, %v1209
        %v1211 = vrot.slane %v1203, %v1210
        %v1213 = vunpack.c.l.s4 1983009808
        %v1214 = vunpack.c.0.s8 %v1213
        %v1215 = vlaneseq
        %v1216 = vshrl.u32 %v1215, 7
        %v1217 = vsub.s32 %v1214, %v1216
        %v1218 = vrot.slane %v1204, %v1217
        %v1219 = vcombine.low %v1195, %v1211
        %v1220 = vcombine.high %v1195, %v1211
        %v1222 = vunpack.c.l.s4 1934713408
        %v1223 = vunpack.c.0.s8 %v1222
        %v1224 = vlaneseq
        %v1225 = vshrl.u32 %v1224, 7
        %v1226 = vsub.s32 %v1223, %v1225
        %v1227 = vrot.slane %v1219, %v1226
        %v1229 = vunpack.c.l.s4 1934713408
        %v1230 = vunpack.c.0.s8 %v1229
        %v1231 = vlaneseq
        %v1232 = vshrl.u32 %v1231, 7
        %v1233 = vsub.s32 %v1230, %v1232
        %v1234 = vrot.slane %v1220, %v1233
        %v1235 = vcombine.low %v1202, %v1218
        %v1236 = vcombine.high %v1202, %v1218
        %v1238 = vunpack.c.l.s4 1934713408
        %v1239 = vunpack.c.0.s8 %v1238
        %v1240 = vlaneseq
        %v1241 = vshrl.u32 %v1240, 7
        %v1242 = vsub.s32 %v1239, %v1241
        %v1243 = vrot.slane %v1235, %v1242
        %v1245 = vunpack.c.l.s4 1934713408
        %v1246 = vunpack.c.0.s8 %v1245
        %v1247 = vlaneseq
        %v1248 = vshrl.u32 %v1247, 7
        %v1249 = vsub.s32 %v1246, %v1248
        %v1250 = vrot.slane %v1236, %v1249
        %v1251 = vcombine.high %v1227, 0.0
        %v1252 = vcombine.high %v1234, 0.0
        %v1253 = vcombine.high %v1243, 0.0
        %v1254 = vcombine.high %v1250, 0.0
        %v1255 = vcombine.low %v845, %v1178
        %v1256 = vcombine.high %v845, %v1178
        %v1258 = vunpack.c.l.s4 1983009808
        %v1259 = vunpack.c.0.s8 %v1258
        %v1260 = vlaneseq
        %v1261 = vshrl.u32 %v1260, 7
        %v1262 = vsub.s32 %v1259, %v1261
        %v1263 = vrot.slane %v1255, %v1262
        %v1265 = vunpack.c.l.s4 1983009808
        %v1266 = vunpack.c.0.s8 %v1265
        %v1267 = vlaneseq
        %v1268 = vshrl.u32 %v1267, 7
        %v1269 = vsub.s32 %v1266, %v1268
        %v1270 = vrot.slane %v1256, %v1269
        %v1271 = vcombine.low %v1172, %v1184
        %v1272 = vcombine.high %v1172, %v1184
        %v1274 = vunpack.c.l.s4 1983009808
        %v1275 = vunpack.c.0.s8 %v1274
        %v1276 = vlaneseq
        %v1277 = vshrl.u32 %v1276, 7
        %v1278 = vsub.s32 %v1275, %v1277
        %v1279 = vrot.slane %v1271, %v1278
        %v1281 = vunpack.c.l.s4 1983009808
        %v1282 = vunpack.c.0.s8 %v1281
        %v1283 = vlaneseq
        %v1284 = vshrl.u32 %v1283, 7
        %v1285 = vsub.s32 %v1282, %v1284
        %v1286 = vrot.slane %v1272, %v1285
        %v1287 = vcombine.low %v1263, %v1279
        %v1288 = vcombine.high %v1263, %v1279
        %v1290 = vunpack.c.l.s4 1934713408
        %v1291 = vunpack.c.0.s8 %v1290
        %v1292 = vlaneseq
        %v1293 = vshrl.u32 %v1292, 7
        %v1294 = vsub.s32 %v1291, %v1293
        %v1295 = vrot.slane %v1287, %v1294
        %v1297 = vunpack.c.l.s4 1934713408
        %v1298 = vunpack.c.0.s8 %v1297
        %v1299 = vlaneseq
        %v1300 = vshrl.u32 %v1299, 7
        %v1301 = vsub.s32 %v1298, %v1300
        %v1302 = vrot.slane %v1288, %v1301
        %v1303 = vcombine.low %v1270, %v1286
        %v1304 = vcombine.high %v1270, %v1286
        %v1306 = vunpack.c.l.s4 1934713408
        %v1307 = vunpack.c.0.s8 %v1306
        %v1308 = vlaneseq
        %v1309 = vshrl.u32 %v1308, 7
        %v1310 = vsub.s32 %v1307, %v1309
        %v1311 = vrot.slane %v1303, %v1310
        %v1313 = vunpack.c.l.s4 1934713408
        %v1314 = vunpack.c.0.s8 %v1313
        %v1315 = vlaneseq
        %v1316 = vshrl.u32 %v1315, 7
        %v1317 = vsub.s32 %v1314, %v1316
        %v1318 = vrot.slane %v1304, %v1317
        %v1319 = vcombine.high %v1295, 0.0
        %v1320 = vcombine.high %v1302, 0.0
        %v1321 = vcombine.high %v1311, 0.0
        %v1322 = vcombine.high %v1318, 0.0
        %v1323 = vcombine.low %v915, %v922
        %v1325 = vunpack.c.l.s4 1983009808
        %v1326 = vunpack.c.0.s8 %v1325
        %v1327 = vlaneseq
        %v1328 = vshrl.u32 %v1327, 7
        %v1329 = vsub.s32 %v1326, %v1328
        %v1330 = vrot.slane %v1323, %v1329
        %v1331 = vcombine.low %v939, %v940
        %v1333 = vunpack.c.l.s4 1983009808
        %v1334 = vunpack.c.0.s8 %v1333
        %v1335 = vlaneseq
        %v1336 = vshrl.u32 %v1335, 7
        %v1337 = vsub.s32 %v1334, %v1336
        %v1338 = vrot.slane %v1331, %v1337
        %v1339 = vcombine.low %v931, %v938
        %v1341 = vunpack.c.l.s4 1983009808
        %v1342 = vunpack.c.0.s8 %v1341
        %v1343 = vlaneseq
        %v1344 = vshrl.u32 %v1343, 7
        %v1345 = vsub.s32 %v1342, %v1344
        %v1346 = vrot.slane %v1339, %v1345
        %v1347 = vcombine.low %v941, %v942
        %v1349 = vunpack.c.l.s4 1983009808
        %v1350 = vunpack.c.0.s8 %v1349
        %v1351 = vlaneseq
        %v1352 = vshrl.u32 %v1351, 7
        %v1353 = vsub.s32 %v1350, %v1352
        %v1354 = vrot.slane %v1347, %v1353
        %v1355 = vcombine.low %v1330, %v1338
        %v1356 = vcombine.high %v1330, %v1338
        %v1358 = vunpack.c.l.s4 1934713408
        %v1359 = vunpack.c.0.s8 %v1358
        %v1360 = vlaneseq
        %v1361 = vshrl.u32 %v1360, 7
        %v1362 = vsub.s32 %v1359, %v1361
        %v1363 = vrot.slane %v1355, %v1362
        %v1365 = vunpack.c.l.s4 1934713408
        %v1366 = vunpack.c.0.s8 %v1365
        %v1367 = vlaneseq
        %v1368 = vshrl.u32 %v1367, 7
        %v1369 = vsub.s32 %v1366, %v1368
        %v1370 = vrot.slane %v1356, %v1369
        %v1371 = vcombine.low %v1346, %v1354
        %v1372 = vcombine.high %v1346, %v1354
        %v1374 = vunpack.c.l.s4 1934713408
        %v1375 = vunpack.c.0.s8 %v1374
        %v1376 = vlaneseq
        %v1377 = vshrl.u32 %v1376, 7
        %v1378 = vsub.s32 %v1375, %v1377
        %v1379 = vrot.slane %v1371, %v1378
        %v1381 = vunpack.c.l.s4 1934713408
        %v1382 = vunpack.c.0.s8 %v1381
        %v1383 = vlaneseq
        %v1384 = vshrl.u32 %v1383, 7
        %v1385 = vsub.s32 %v1382, %v1384
        %v1386 = vrot.slane %v1372, %v1385
        %v1387 = vcombine.low %v1363, %v1379
        %v1388 = vcombine.high %v1363, %v1379
        %v1389 = vcombine.low %v1370, %v1386
        %v1390 = vcombine.high %v1370, %v1386
        %v1391 = vcombine.low %v983, %v990
        %v1393 = vunpack.c.l.s4 1983009808
        %v1394 = vunpack.c.0.s8 %v1393
        %v1395 = vlaneseq
        %v1396 = vshrl.u32 %v1395, 7
        %v1397 = vsub.s32 %v1394, %v1396
        %v1398 = vrot.slane %v1391, %v1397
        %v1399 = vcombine.low %v1007, %v1008
        %v1401 = vunpack.c.l.s4 1983009808
        %v1402 = vunpack.c.0.s8 %v1401
        %v1403 = vlaneseq
        %v1404 = vshrl.u32 %v1403, 7
        %v1405 = vsub.s32 %v1402, %v1404
        %v1406 = vrot.slane %v1399, %v1405
        %v1407 = vcombine.low %v999, %v1006
        %v1409 = vunpack.c.l.s4 1983009808
        %v1410 = vunpack.c.0.s8 %v1409
        %v1411 = vlaneseq
        %v1412 = vshrl.u32 %v1411, 7
        %v1413 = vsub.s32 %v1410, %v1412
        %v1414 = vrot.slane %v1407, %v1413
        %v1415 = vcombine.low %v1009, %v1010
        %v1417 = vunpack.c.l.s4 1983009808
        %v1418 = vunpack.c.0.s8 %v1417
        %v1419 = vlaneseq
        %v1420 = vshrl.u32 %v1419, 7
        %v1421 = vsub.s32 %v1418, %v1420
        %v1422 = vrot.slane %v1415, %v1421
        %v1423 = vcombine.low %v1398, %v1406
        %v1424 = vcombine.high %v1398, %v1406
        %v1426 = vunpack.c.l.s4 1934713408
        %v1427 = vunpack.c.0.s8 %v1426
        %v1428 = vlaneseq
        %v1429 = vshrl.u32 %v1428, 7
        %v1430 = vsub.s32 %v1427, %v1429
        %v1431 = vrot.slane %v1423, %v1430
        %v1433 = vunpack.c.l.s4 1934713408
        %v1434 = vunpack.c.0.s8 %v1433
        %v1435 = vlaneseq
        %v1436 = vshrl.u32 %v1435, 7
        %v1437 = vsub.s32 %v1434, %v1436
        %v1438 = vrot.slane %v1424, %v1437
        %v1439 = vcombine.low %v1414, %v1422
        %v1440 = vcombine.high %v1414, %v1422
        %v1442 = vunpack.c.l.s4 1934713408
        %v1443 = vunpack.c.0.s8 %v1442
        %v1444 = vlaneseq
        %v1445 = vshrl.u32 %v1444, 7
        %v1446 = vsub.s32 %v1443, %v1445
        %v1447 = vrot.slane %v1439, %v1446
        %v1449 = vunpack.c.l.s4 1934713408
        %v1450 = vunpack.c.0.s8 %v1449
        %v1451 = vlaneseq
        %v1452 = vshrl.u32 %v1451, 7
        %v1453 = vsub.s32 %v1450, %v1452
        %v1454 = vrot.slane %v1440, %v1453
        %v1455 = vcombine.low %v1431, %v1447
        %v1456 = vcombine.high %v1431, %v1447
        %v1457 = vcombine.low %v1438, %v1454
        %v1458 = vcombine.high %v1438, %v1454
        %v1459 = vpack.c.bf16 %v1455, %v1387
        %v1460 = vpack.c.bf16 %v1456, %v1388
        %v1461 = vpack.c.bf16 %v1457, %v1389
        %v1462 = vpack.c.bf16 %v1458, %v1390
        %v1463 = vcombine.low %v1071, %v1078
        %v1465 = vunpack.c.l.s4 1983009808
        %v1466 = vunpack.c.0.s8 %v1465
        %v1467 = vlaneseq
        %v1468 = vshrl.u32 %v1467, 7
        %v1469 = vsub.s32 %v1466, %v1468
        %v1470 = vrot.slane %v1463, %v1469
        %v1471 = vcombine.low %v1095, %v1096
        %v1473 = vunpack.c.l.s4 1983009808
        %v1474 = vunpack.c.0.s8 %v1473
        %v1475 = vlaneseq
        %v1476 = vshrl.u32 %v1475, 7
        %v1477 = vsub.s32 %v1474, %v1476
        %v1478 = vrot.slane %v1471, %v1477
        %v1479 = vcombine.low %v1087, %v1094
        %v1481 = vunpack.c.l.s4 1983009808
        %v1482 = vunpack.c.0.s8 %v1481
        %v1483 = vlaneseq
        %v1484 = vshrl.u32 %v1483, 7
        %v1485 = vsub.s32 %v1482, %v1484
        %v1486 = vrot.slane %v1479, %v1485
        %v1487 = vcombine.low %v1097, %v1098
        %v1489 = vunpack.c.l.s4 1983009808
        %v1490 = vunpack.c.0.s8 %v1489
        %v1491 = vlaneseq
        %v1492 = vshrl.u32 %v1491, 7
        %v1493 = vsub.s32 %v1490, %v1492
        %v1494 = vrot.slane %v1487, %v1493
        %v1495 = vcombine.low %v1470, %v1478
        %v1496 = vcombine.high %v1470, %v1478
        %v1498 = vunpack.c.l.s4 1934713408
        %v1499 = vunpack.c.0.s8 %v1498
        %v1500 = vlaneseq
        %v1501 = vshrl.u32 %v1500, 7
        %v1502 = vsub.s32 %v1499, %v1501
        %v1503 = vrot.slane %v1495, %v1502
        %v1505 = vunpack.c.l.s4 1934713408
        %v1506 = vunpack.c.0.s8 %v1505
        %v1507 = vlaneseq
        %v1508 = vshrl.u32 %v1507, 7
        %v1509 = vsub.s32 %v1506, %v1508
        %v1510 = vrot.slane %v1496, %v1509
        %v1511 = vcombine.low %v1486, %v1494
        %v1512 = vcombine.high %v1486, %v1494
        %v1514 = vunpack.c.l.s4 1934713408
        %v1515 = vunpack.c.0.s8 %v1514
        %v1516 = vlaneseq
        %v1517 = vshrl.u32 %v1516, 7
        %v1518 = vsub.s32 %v1515, %v1517
        %v1519 = vrot.slane %v1511, %v1518
        %v1521 = vunpack.c.l.s4 1934713408
        %v1522 = vunpack.c.0.s8 %v1521
        %v1523 = vlaneseq
        %v1524 = vshrl.u32 %v1523, 7
        %v1525 = vsub.s32 %v1522, %v1524
        %v1526 = vrot.slane %v1512, %v1525
        %v1527 = vcombine.low %v1503, %v1519
        %v1528 = vcombine.high %v1503, %v1519
        %v1529 = vcombine.low %v1510, %v1526
        %v1530 = vcombine.high %v1510, %v1526
        %v1531 = vcombine.low %v1139, %v1146
        %v1533 = vunpack.c.l.s4 1983009808
        %v1534 = vunpack.c.0.s8 %v1533
        %v1535 = vlaneseq
        %v1536 = vshrl.u32 %v1535, 7
        %v1537 = vsub.s32 %v1534, %v1536
        %v1538 = vrot.slane %v1531, %v1537
        %v1539 = vcombine.low %v1163, %v1164
        %v1541 = vunpack.c.l.s4 1983009808
        %v1542 = vunpack.c.0.s8 %v1541
        %v1543 = vlaneseq
        %v1544 = vshrl.u32 %v1543, 7
        %v1545 = vsub.s32 %v1542, %v1544
        %v1546 = vrot.slane %v1539, %v1545
        %v1547 = vcombine.low %v1155, %v1162
        %v1549 = vunpack.c.l.s4 1983009808
        %v1550 = vunpack.c.0.s8 %v1549
        %v1551 = vlaneseq
        %v1552 = vshrl.u32 %v1551, 7
        %v1553 = vsub.s32 %v1550, %v1552
        %v1554 = vrot.slane %v1547, %v1553
        %v1555 = vcombine.low %v1165, %v1166
        %v1557 = vunpack.c.l.s4 1983009808
        %v1558 = vunpack.c.0.s8 %v1557
        %v1559 = vlaneseq
        %v1560 = vshrl.u32 %v1559, 7
        %v1561 = vsub.s32 %v1558, %v1560
        %v1562 = vrot.slane %v1555, %v1561
        %v1563 = vcombine.low %v1538, %v1546
        %v1564 = vcombine.high %v1538, %v1546
        %v1566 = vunpack.c.l.s4 1934713408
        %v1567 = vunpack.c.0.s8 %v1566
        %v1568 = vlaneseq
        %v1569 = vshrl.u32 %v1568, 7
        %v1570 = vsub.s32 %v1567, %v1569
        %v1571 = vrot.slane %v1563, %v1570
        %v1573 = vunpack.c.l.s4 1934713408
        %v1574 = vunpack.c.0.s8 %v1573
        %v1575 = vlaneseq
        %v1576 = vshrl.u32 %v1575, 7
        %v1577 = vsub.s32 %v1574, %v1576
        %v1578 = vrot.slane %v1564, %v1577
        %v1579 = vcombine.low %v1554, %v1562
        %v1580 = vcombine.high %v1554, %v1562
        %v1582 = vunpack.c.l.s4 1934713408
        %v1583 = vunpack.c.0.s8 %v1582
        %v1584 = vlaneseq
        %v1585 = vshrl.u32 %v1584, 7
        %v1586 = vsub.s32 %v1583, %v1585
        %v1587 = vrot.slane %v1579, %v1586
        %v1589 = vunpack.c.l.s4 1934713408
        %v1590 = vunpack.c.0.s8 %v1589
        %v1591 = vlaneseq
        %v1592 = vshrl.u32 %v1591, 7
        %v1593 = vsub.s32 %v1590, %v1592
        %v1594 = vrot.slane %v1580, %v1593
        %v1595 = vcombine.low %v1571, %v1587
        %v1596 = vcombine.high %v1571, %v1587
        %v1597 = vcombine.low %v1578, %v1594
        %v1598 = vcombine.high %v1578, %v1594
        %v1599 = vpack.c.bf16 %v1595, %v1527
        %v1600 = vpack.c.bf16 %v1596, %v1528
        %v1601 = vpack.c.bf16 %v1597, %v1529
        %v1602 = vpack.c.bf16 %v1598, %v1530
        %v1603 = vcombine.low %v1227, %v1234
        %v1605 = vunpack.c.l.s4 1983009808
        %v1606 = vunpack.c.0.s8 %v1605
        %v1607 = vlaneseq
        %v1608 = vshrl.u32 %v1607, 7
        %v1609 = vsub.s32 %v1606, %v1608
        %v1610 = vrot.slane %v1603, %v1609
        %v1611 = vcombine.low %v1251, %v1252
        %v1613 = vunpack.c.l.s4 1983009808
        %v1614 = vunpack.c.0.s8 %v1613
        %v1615 = vlaneseq
        %v1616 = vshrl.u32 %v1615, 7
        %v1617 = vsub.s32 %v1614, %v1616
        %v1618 = vrot.slane %v1611, %v1617
        %v1619 = vcombine.low %v1243, %v1250
        %v1621 = vunpack.c.l.s4 1983009808
        %v1622 = vunpack.c.0.s8 %v1621
        %v1623 = vlaneseq
        %v1624 = vshrl.u32 %v1623, 7
        %v1625 = vsub.s32 %v1622, %v1624
        %v1626 = vrot.slane %v1619, %v1625
        %v1627 = vcombine.low %v1253, %v1254
        %v1629 = vunpack.c.l.s4 1983009808
        %v1630 = vunpack.c.0.s8 %v1629
        %v1631 = vlaneseq
        %v1632 = vshrl.u32 %v1631, 7
        %v1633 = vsub.s32 %v1630, %v1632
        %v1634 = vrot.slane %v1627, %v1633
        %v1635 = vcombine.low %v1610, %v1618
        %v1636 = vcombine.high %v1610, %v1618
        %v1638 = vunpack.c.l.s4 1934713408
        %v1639 = vunpack.c.0.s8 %v1638
        %v1640 = vlaneseq
        %v1641 = vshrl.u32 %v1640, 7
        %v1642 = vsub.s32 %v1639, %v1641
        %v1643 = vrot.slane %v1635, %v1642
        %v1645 = vunpack.c.l.s4 1934713408
        %v1646 = vunpack.c.0.s8 %v1645
        %v1647 = vlaneseq
        %v1648 = vshrl.u32 %v1647, 7
        %v1649 = vsub.s32 %v1646, %v1648
        %v1650 = vrot.slane %v1636, %v1649
        %v1651 = vcombine.low %v1626, %v1634
        %v1652 = vcombine.high %v1626, %v1634
        %v1654 = vunpack.c.l.s4 1934713408
        %v1655 = vunpack.c.0.s8 %v1654
        %v1656 = vlaneseq
        %v1657 = vshrl.u32 %v1656, 7
        %v1658 = vsub.s32 %v1655, %v1657
        %v1659 = vrot.slane %v1651, %v1658
        %v1661 = vunpack.c.l.s4 1934713408
        %v1662 = vunpack.c.0.s8 %v1661
        %v1663 = vlaneseq
        %v1664 = vshrl.u32 %v1663, 7
        %v1665 = vsub.s32 %v1662, %v1664
        %v1666 = vrot.slane %v1652, %v1665
        %v1667 = vcombine.low %v1643, %v1659
        %v1668 = vcombine.high %v1643, %v1659
        %v1669 = vcombine.low %v1650, %v1666
        %v1670 = vcombine.high %v1650, %v1666
        %v1671 = vcombine.low %v1295, %v1302
        %v1673 = vunpack.c.l.s4 1983009808
        %v1674 = vunpack.c.0.s8 %v1673
        %v1675 = vlaneseq
        %v1676 = vshrl.u32 %v1675, 7
        %v1677 = vsub.s32 %v1674, %v1676
        %v1678 = vrot.slane %v1671, %v1677
        %v1679 = vcombine.low %v1319, %v1320
        %v1681 = vunpack.c.l.s4 1983009808
        %v1682 = vunpack.c.0.s8 %v1681
        %v1683 = vlaneseq
        %v1684 = vshrl.u32 %v1683, 7
        %v1685 = vsub.s32 %v1682, %v1684
        %v1686 = vrot.slane %v1679, %v1685
        %v1687 = vcombine.low %v1311, %v1318
        %v1689 = vunpack.c.l.s4 1983009808
        %v1690 = vunpack.c.0.s8 %v1689
        %v1691 = vlaneseq
        %v1692 = vshrl.u32 %v1691, 7
        %v1693 = vsub.s32 %v1690, %v1692
        %v1694 = vrot.slane %v1687, %v1693
        %v1695 = vcombine.low %v1321, %v1322
        %v1697 = vunpack.c.l.s4 1983009808
        %v1698 = vunpack.c.0.s8 %v1697
        %v1699 = vlaneseq
        %v1700 = vshrl.u32 %v1699, 7
        %v1701 = vsub.s32 %v1698, %v1700
        %v1702 = vrot.slane %v1695, %v1701
        %v1703 = vcombine.low %v1678, %v1686
        %v1704 = vcombine.high %v1678, %v1686
        %v1706 = vunpack.c.l.s4 1934713408
        %v1707 = vunpack.c.0.s8 %v1706
        %v1708 = vlaneseq
        %v1709 = vshrl.u32 %v1708, 7
        %v1710 = vsub.s32 %v1707, %v1709
        %v1711 = vrot.slane %v1703, %v1710
        %v1713 = vunpack.c.l.s4 1934713408
        %v1714 = vunpack.c.0.s8 %v1713
        %v1715 = vlaneseq
        %v1716 = vshrl.u32 %v1715, 7
        %v1717 = vsub.s32 %v1714, %v1716
        %v1718 = vrot.slane %v1704, %v1717
        %v1719 = vcombine.low %v1694, %v1702
        %v1720 = vcombine.high %v1694, %v1702
        %v1722 = vunpack.c.l.s4 1934713408
        %v1723 = vunpack.c.0.s8 %v1722
        %v1724 = vlaneseq
        %v1725 = vshrl.u32 %v1724, 7
        %v1726 = vsub.s32 %v1723, %v1725
        %v1727 = vrot.slane %v1719, %v1726
        %v1729 = vunpack.c.l.s4 1934713408
        %v1730 = vunpack.c.0.s8 %v1729
        %v1731 = vlaneseq
        %v1732 = vshrl.u32 %v1731, 7
        %v1733 = vsub.s32 %v1730, %v1732
        %v1734 = vrot.slane %v1720, %v1733
        %v1735 = vcombine.low %v1711, %v1727
        %v1736 = vcombine.high %v1711, %v1727
        %v1737 = vcombine.low %v1718, %v1734
        %v1738 = vcombine.high %v1718, %v1734
        %v1739 = vpack.c.bf16 %v1735, %v1667
        %v1740 = vpack.c.bf16 %v1736, %v1668
        %v1741 = vpack.c.bf16 %v1737, %v1669
        %v1742 = vpack.c.bf16 %v1738, %v1670
        %vm1743 = vcmask 261120
        %v1745 = vsel %vm1743, %v1459, 0
        %v1748 = vsel %vm1743, %v1599, 0
        %1750 = vmatprep.subr.bf16.mxu0 0
        %1751 = vmatpush1.bf16.xpose.msra.mxu0 0
        %1752 = vmatprep.subr.bf16.mxu0 0
        %1753 = vmatpush1.bf16.xpose.msra.mxu0 0
        %1754 = vmatprep.subr.bf16.mxu0 0
        %1755 = vmatpush1.bf16.xpose.msra.mxu0 0
        %1756 = vmatprep.subr.bf16.mxu0 0
        %1757 = vmatpush1.bf16.xpose.msra.mxu0 0
        %1758 = vmatprep.subr.bf16.mxu0 0
        %1759 = vmatpush1.bf16.xpose.msra.mxu0 0
        %1760 = vmatprep.subr.bf16.mxu0 0
        %1761 = vmatpush1.bf16.xpose.msra.mxu0 0
        %1762 = vmatprep.subr.bf16.mxu0 0
        %1763 = vmatpush1.bf16.xpose.msra.mxu0 0
        %1764 = vmatprep.subr.bf16.mxu0 0
        %1765 = vmatpush1.bf16.xpose.msra.mxu0 %v1748
        %1766 = vmatprep.subr.bf16.mxu0 0
        %1767 = vmatpush2.bf16.xpose.msra.mxu0 0
        %1768 = vmatprep.subr.bf16.mxu0 0
        %1769 = vmatpush2.bf16.xpose.msra.mxu0 0
        %1770 = vmatprep.subr.bf16.mxu0 0
        %1771 = vmatpush2.bf16.xpose.msra.mxu0 0
        %1772 = vmatprep.subr.bf16.mxu0 0
        %1773 = vmatpush2.bf16.xpose.msra.mxu0 0
        %1774 = vmatprep.subr.bf16.mxu0 0
        %1775 = vmatpush2.bf16.xpose.msra.mxu0 0
        %1776 = vmatprep.subr.bf16.mxu0 0
        %1777 = vmatpush2.bf16.xpose.msra.mxu0 0
        %1778 = vmatprep.subr.bf16.mxu0 0
        %1779 = vmatpush2.bf16.xpose.msra.mxu0 0
        %1780 = vmatprep.subr.bf16.mxu0 0
        %1781 = vmatpush2.bf16.xpose.msra.mxu0 0
        %1782 = vmatprep.mubr.bf16.mxu0 0
        %1783 = vmatmul.mubr.bf16.gmra.mxu0 %v1745
        %v1784 = vpop.f32.mrf.mxu0
        %v1785 = vadd.f32 0.0, %v1784
        %v1786 = vpop.f32.mrf.mxu0
        %v1787 = vpop.f32.mrf.mxu0
        %v1788 = vadd.f32 0.0, %v1787
        %v1789 = vpop.f32.mrf.mxu0
        %1790 = vdwg.mxu0
        %v1792 = vsel %vm1743, %v1460, 0
        %v1795 = vsel %vm1743, %v1600, 0
        %1797 = vmatprep.subr.bf16.mxu0 0
        %1798 = vmatpush1.bf16.xpose.msra.mxu0 0
        %1799 = vmatprep.subr.bf16.mxu0 0
        %1800 = vmatpush1.bf16.xpose.msra.mxu0 0
        %1801 = vmatprep.subr.bf16.mxu0 0
        %1802 = vmatpush1.bf16.xpose.msra.mxu0 0
        %1803 = vmatprep.subr.bf16.mxu0 0
        %1804 = vmatpush1.bf16.xpose.msra.mxu0 0
        %1805 = vmatprep.subr.bf16.mxu0 0
        %1806 = vmatpush1.bf16.xpose.msra.mxu0 0
        %1807 = vmatprep.subr.bf16.mxu0 0
        %1808 = vmatpush1.bf16.xpose.msra.mxu0 0
        %1809 = vmatprep.subr.bf16.mxu0 0
        %1810 = vmatpush1.bf16.xpose.msra.mxu0 0
        %1811 = vmatprep.subr.bf16.mxu0 0
        %1812 = vmatpush1.bf16.xpose.msra.mxu0 %v1795
        %1813 = vmatprep.subr.bf16.mxu0 0
        %1814 = vmatpush2.bf16.xpose.msra.mxu0 0
        %1815 = vmatprep.subr.bf16.mxu0 0
        %1816 = vmatpush2.bf16.xpose.msra.mxu0 0
        %1817 = vmatprep.subr.bf16.mxu0 0
        %1818 = vmatpush2.bf16.xpose.msra.mxu0 0
        %1819 = vmatprep.subr.bf16.mxu0 0
        %1820 = vmatpush2.bf16.xpose.msra.mxu0 0
        %1821 = vmatprep.subr.bf16.mxu0 0
        %1822 = vmatpush2.bf16.xpose.msra.mxu0 0
        %1823 = vmatprep.subr.bf16.mxu0 0
        %1824 = vmatpush2.bf16.xpose.msra.mxu0 0
        %1825 = vmatprep.subr.bf16.mxu0 0
        %1826 = vmatpush2.bf16.xpose.msra.mxu0 0
        %1827 = vmatprep.subr.bf16.mxu0 0
        %1828 = vmatpush2.bf16.xpose.msra.mxu0 0
        %1829 = vmatprep.mubr.bf16.mxu0 0
        %1830 = vmatmul.mubr.bf16.gmra.mxu0 %v1792
        %v1831 = vpop.f32.mrf.mxu0
        %v1832 = vadd.f32 0.0, %v1831
        %v1833 = vpop.f32.mrf.mxu0
        %v1834 = vpop.f32.mrf.mxu0
        %v1835 = vadd.f32 0.0, %v1834
        %v1836 = vpop.f32.mrf.mxu0
        %1837 = vdwg.mxu0
        %v1839 = vsel %vm1743, %v1461, 0
        %v1842 = vsel %vm1743, %v1601, 0
        %1844 = vmatprep.subr.bf16.mxu0 0
        %1845 = vmatpush1.bf16.xpose.msra.mxu0 0
        %1846 = vmatprep.subr.bf16.mxu0 0
        %1847 = vmatpush1.bf16.xpose.msra.mxu0 0
        %1848 = vmatprep.subr.bf16.mxu0 0
        %1849 = vmatpush1.bf16.xpose.msra.mxu0 0
        %1850 = vmatprep.subr.bf16.mxu0 0
        %1851 = vmatpush1.bf16.xpose.msra.mxu0 0
        %1852 = vmatprep.subr.bf16.mxu0 0
        %1853 = vmatpush1.bf16.xpose.msra.mxu0 0
        %1854 = vmatprep.subr.bf16.mxu0 0
        %1855 = vmatpush1.bf16.xpose.msra.mxu0 0
        %1856 = vmatprep.subr.bf16.mxu0 0
        %1857 = vmatpush1.bf16.xpose.msra.mxu0 0
        %1858 = vmatprep.subr.bf16.mxu0 0
        %1859 = vmatpush1.bf16.xpose.msra.mxu0 %v1842
        %1860 = vmatprep.subr.bf16.mxu0 0
        %1861 = vmatpush2.bf16.xpose.msra.mxu0 0
        %1862 = vmatprep.subr.bf16.mxu0 0
        %1863 = vmatpush2.bf16.xpose.msra.mxu0 0
        %1864 = vmatprep.subr.bf16.mxu0 0
        %1865 = vmatpush2.bf16.xpose.msra.mxu0 0
        %1866 = vmatprep.subr.bf16.mxu0 0
        %1867 = vmatpush2.bf16.xpose.msra.mxu0 0
        %1868 = vmatprep.subr.bf16.mxu0 0
        %1869 = vmatpush2.bf16.xpose.msra.mxu0 0
        %1870 = vmatprep.subr.bf16.mxu0 0
        %1871 = vmatpush2.bf16.xpose.msra.mxu0 0
        %1872 = vmatprep.subr.bf16.mxu0 0
        %1873 = vmatpush2.bf16.xpose.msra.mxu0 0
        %1874 = vmatprep.subr.bf16.mxu0 0
        %1875 = vmatpush2.bf16.xpose.msra.mxu0 0
        %1876 = vmatprep.mubr.bf16.mxu0 0
        %1877 = vmatmul.mubr.bf16.gmra.mxu0 %v1839
        %v1878 = vpop.f32.mrf.mxu0
        %v1879 = vadd.f32 0.0, %v1878
        %v1880 = vpop.f32.mrf.mxu0
        %v1881 = vpop.f32.mrf.mxu0
        %v1882 = vadd.f32 0.0, %v1881
        %v1883 = vpop.f32.mrf.mxu0
        %1884 = vdwg.mxu0
        %v1886 = vsel %vm1743, %v1462, 0
        %v1889 = vsel %vm1743, %v1602, 0
        %1891 = vmatprep.subr.bf16.mxu0 0
        %1892 = vmatpush1.bf16.xpose.msra.mxu0 0
        %1893 = vmatprep.subr.bf16.mxu0 0
        %1894 = vmatpush1.bf16.xpose.msra.mxu0 0
        %1895 = vmatprep.subr.bf16.mxu0 0
        %1896 = vmatpush1.bf16.xpose.msra.mxu0 0
        %1897 = vmatprep.subr.bf16.mxu0 0
        %1898 = vmatpush1.bf16.xpose.msra.mxu0 0
        %1899 = vmatprep.subr.bf16.mxu0 0
        %1900 = vmatpush1.bf16.xpose.msra.mxu0 0
        %1901 = vmatprep.subr.bf16.mxu0 0
        %1902 = vmatpush1.bf16.xpose.msra.mxu0 0
        %1903 = vmatprep.subr.bf16.mxu0 0
        %1904 = vmatpush1.bf16.xpose.msra.mxu0 0
        %1905 = vmatprep.subr.bf16.mxu0 0
        %1906 = vmatpush1.bf16.xpose.msra.mxu0 %v1889
        %1907 = vmatprep.subr.bf16.mxu0 0
        %1908 = vmatpush2.bf16.xpose.msra.mxu0 0
        %1909 = vmatprep.subr.bf16.mxu0 0
        %1910 = vmatpush2.bf16.xpose.msra.mxu0 0
        %1911 = vmatprep.subr.bf16.mxu0 0
        %1912 = vmatpush2.bf16.xpose.msra.mxu0 0
        %1913 = vmatprep.subr.bf16.mxu0 0
        %1914 = vmatpush2.bf16.xpose.msra.mxu0 0
        %1915 = vmatprep.subr.bf16.mxu0 0
        %1916 = vmatpush2.bf16.xpose.msra.mxu0 0
        %1917 = vmatprep.subr.bf16.mxu0 0
        %1918 = vmatpush2.bf16.xpose.msra.mxu0 0
        %1919 = vmatprep.subr.bf16.mxu0 0
        %1920 = vmatpush2.bf16.xpose.msra.mxu0 0
        %1921 = vmatprep.subr.bf16.mxu0 0
        %1922 = vmatpush2.bf16.xpose.msra.mxu0 0
        %1923 = vmatprep.mubr.bf16.mxu0 0
        %1924 = vmatmul.mubr.bf16.gmra.mxu0 %v1886
        %v1925 = vpop.f32.mrf.mxu0
        %v1926 = vadd.f32 0.0, %v1925
        %v1927 = vpop.f32.mrf.mxu0
        %v1928 = vpop.f32.mrf.mxu0
        %v1929 = vadd.f32 0.0, %v1928
        %v1930 = vpop.f32.mrf.mxu0
        %1931 = vdwg.mxu0
        %v1932 = vsel %vm853, 1, 0
        %v1933 = vsel %vm854, 1, 0
        %vm1934 = vcmp.eq.s32.totalorder %v1932, 1
        %vm1935 = vcmp.eq.s32.totalorder %v1933, 1
        %v1936 = vsel %vm1934, %v1785, -1e+30
        %v1937 = vsel %vm1935, %v1788, -1e+30
        %v1938 = vsel %vm1934, %v1832, -1e+30
        %v1939 = vsel %vm1935, %v1835, -1e+30
        %v1940 = vsel %vm1934, %v1879, -1e+30
        %v1941 = vsel %vm1935, %v1882, -1e+30
        %v1942 = vsel %vm1934, %v1926, -1e+30
        %v1943 = vsel %vm1935, %v1929, -1e+30
        %vm1944 = vcmask 130048
        %v1945 = vsel %vm1944, %v1936, -inf
        %1946 = vmax.xlane.f32.xlu0 %v1945
        %v1947 = vpop.xlane.xlu0 %1946
        %v1948 = vsel %vm1944, %v1937, -inf
        %1949 = vmax.xlane.f32.xlu0 %v1948
        %v1950 = vpop.xlane.xlu0 %1949
        %v1951 = vsel %vm1944, %v1938, -inf
        %1952 = vmax.xlane.f32.xlu0 %v1951
        %v1953 = vpop.xlane.xlu0 %1952
        %v1954 = vsel %vm1944, %v1939, -inf
        %1955 = vmax.xlane.f32.xlu0 %v1954
        %v1956 = vpop.xlane.xlu0 %1955
        %v1957 = vsel %vm1944, %v1940, -inf
        %1958 = vmax.xlane.f32.xlu0 %v1957
        %v1959 = vpop.xlane.xlu0 %1958
        %v1960 = vsel %vm1944, %v1941, -inf
        %1961 = vmax.xlane.f32.xlu0 %v1960
        %v1962 = vpop.xlane.xlu0 %1961
        %v1963 = vsel %vm1944, %v1942, -inf
        %1964 = vmax.xlane.f32.xlu0 %v1963
        %v1965 = vpop.xlane.xlu0 %1964
        %v1966 = vsel %vm1944, %v1943, -inf
        %1967 = vmax.xlane.f32.xlu0 %v1966
        %v1968 = vpop.xlane.xlu0 %1967
        %v1969 = vsub.f32 %v1936, %v1947
        %v1970 = vsub.f32 %v1937, %v1950
        %v1971 = vsub.f32 %v1938, %v1953
        %v1972 = vsub.f32 %v1939, %v1956
        %v1973 = vsub.f32 %v1940, %v1959
        %v1974 = vsub.f32 %v1941, %v1962
        %v1975 = vsub.f32 %v1942, %v1965
        %v1976 = vsub.f32 %v1943, %v1968
        %v1977 = vmul.f32 %v1969, 1.442695
        %v1978 = vpow.pop %v1977
        %v1979 = vmul.f32 %v1970, 1.442695
        %v1980 = vpow.pop %v1979
        %v1981 = vmul.f32 %v1971, 1.442695
        %v1982 = vpow.pop %v1981
        %v1983 = vmul.f32 %v1972, 1.442695
        %v1984 = vpow.pop %v1983
        %v1985 = vmul.f32 %v1973, 1.442695
        %v1986 = vpow.pop %v1985
        %v1987 = vmul.f32 %v1974, 1.442695
        %v1988 = vpow.pop %v1987
        %v1989 = vmul.f32 %v1975, 1.442695
        %v1990 = vpow.pop %v1989
        %v1991 = vmul.f32 %v1976, 1.442695
        %v1992 = vpow.pop %v1991
        %v1993 = vsel %vm1944, %v1978, 0.0
        %1994 = vadd.xlane.f32.xlu0 %v1993
        %v1995 = vpop.xlane.xlu0 %1994
        %v1996 = vsel %vm1944, %v1980, 0.0
        %1997 = vadd.xlane.f32.xlu0 %v1996
        %v1998 = vpop.xlane.xlu0 %1997
        %v1999 = vsel %vm1944, %v1982, 0.0
        %2000 = vadd.xlane.f32.xlu0 %v1999
        %v2001 = vpop.xlane.xlu0 %2000
        %v2002 = vsel %vm1944, %v1984, 0.0
        %2003 = vadd.xlane.f32.xlu0 %v2002
        %v2004 = vpop.xlane.xlu0 %2003
        %v2005 = vsel %vm1944, %v1986, 0.0
        %2006 = vadd.xlane.f32.xlu0 %v2005
        %v2007 = vpop.xlane.xlu0 %2006
        %v2008 = vsel %vm1944, %v1988, 0.0
        %2009 = vadd.xlane.f32.xlu0 %v2008
        %v2010 = vpop.xlane.xlu0 %2009
        %v2011 = vsel %vm1944, %v1990, 0.0
        %2012 = vadd.xlane.f32.xlu0 %v2011
        %v2013 = vpop.xlane.xlu0 %2012
        %v2014 = vsel %vm1944, %v1992, 0.0
        %2015 = vadd.xlane.f32.xlu0 %v2014
        %v2016 = vpop.xlane.xlu0 %2015
        %v2017 = vrcp.pop %v1995
        %v2018 = vrcp.pop %v1998
        %v2019 = vrcp.pop %v2001
        %v2020 = vrcp.pop %v2004
        %v2021 = vrcp.pop %v2007
        %v2022 = vrcp.pop %v2010
        %v2023 = vrcp.pop %v2013
        %v2024 = vrcp.pop %v2016
        %v2025 = vmul.f32 %v1978, %v2017
        %v2026 = vmul.f32 %v1980, %v2018
        %v2027 = vmul.f32 %v1982, %v2019
        %v2028 = vmul.f32 %v1984, %v2020
        %v2029 = vmul.f32 %v1986, %v2021
        %v2030 = vmul.f32 %v1988, %v2022
        %v2031 = vmul.f32 %v1990, %v2023
        %v2032 = vmul.f32 %v1992, %v2024
        %v2033 = vpack.c.bf16 %v2026, %v2025
        %v2034 = vpack.c.bf16 %v2028, %v2027
        %v2035 = vpack.c.bf16 %v2030, %v2029
        %v2036 = vpack.c.bf16 %v2032, %v2031
        %v2038 = vsel %vm1944, %v2033, 0
        %2040 = vmatprep.subr.bf16.mxu0 0
        %2041 = vmatpush1.bf16.msra.mxu0 0
        %2042 = vmatprep.subr.bf16.mxu0 0
        %2043 = vmatpush1.bf16.msra.mxu0 0
        %2044 = vmatprep.subr.bf16.mxu0 0
        %2045 = vmatpush1.bf16.msra.mxu0 0
        %2046 = vmatprep.subr.bf16.mxu0 0
        %2047 = vmatpush1.bf16.msra.mxu0 0
        %2048 = vmatprep.subr.bf16.mxu0 0
        %2049 = vmatpush1.bf16.msra.mxu0 0
        %2050 = vmatprep.subr.bf16.mxu0 0
        %2051 = vmatpush1.bf16.msra.mxu0 0
        %2052 = vmatprep.subr.bf16.mxu0 0
        %2053 = vmatpush1.bf16.msra.mxu0 0
        %2054 = vmatprep.subr.bf16.mxu0 0
        %2055 = vmatpush1.bf16.msra.mxu0 %v1739
        %2056 = vmatprep.subr.bf16.mxu0 0
        %2057 = vmatpush2.bf16.msra.mxu0 0
        %2058 = vmatprep.subr.bf16.mxu0 0
        %2059 = vmatpush2.bf16.msra.mxu0 0
        %2060 = vmatprep.subr.bf16.mxu0 0
        %2061 = vmatpush2.bf16.msra.mxu0 0
        %2062 = vmatprep.subr.bf16.mxu0 0
        %2063 = vmatpush2.bf16.msra.mxu0 0
        %2064 = vmatprep.subr.bf16.mxu0 0
        %2065 = vmatpush2.bf16.msra.mxu0 0
        %2066 = vmatprep.subr.bf16.mxu0 0
        %2067 = vmatpush2.bf16.msra.mxu0 0
        %2068 = vmatprep.subr.bf16.mxu0 0
        %2069 = vmatpush2.bf16.msra.mxu0 0
        %2070 = vmatprep.subr.bf16.mxu0 0
        %2071 = vmatpush2.bf16.msra.mxu0 0
        %2072 = vmatprep.mubr.bf16.mxu0 0
        %2073 = vmatmul.mubr.bf16.gmra.mxu0 %v2038
        %v2074 = vpop.f32.mrf.mxu0
        %v2075 = vadd.f32 0.0, %v2074
        %v2076 = vpop.f32.mrf.mxu0
        %v2077 = vpop.f32.mrf.mxu0
        %v2078 = vadd.f32 0.0, %v2077
        %v2079 = vpop.f32.mrf.mxu0
        %2080 = vdwg.mxu0
        %v2082 = vsel %vm1944, %v2034, 0
        %2084 = vmatprep.subr.bf16.mxu0 0
        %2085 = vmatpush1.bf16.msra.mxu0 0
        %2086 = vmatprep.subr.bf16.mxu0 0
        %2087 = vmatpush1.bf16.msra.mxu0 0
        %2088 = vmatprep.subr.bf16.mxu0 0
        %2089 = vmatpush1.bf16.msra.mxu0 0
        %2090 = vmatprep.subr.bf16.mxu0 0
        %2091 = vmatpush1.bf16.msra.mxu0 0
        %2092 = vmatprep.subr.bf16.mxu0 0
        %2093 = vmatpush1.bf16.msra.mxu0 0
        %2094 = vmatprep.subr.bf16.mxu0 0
        %2095 = vmatpush1.bf16.msra.mxu0 0
        %2096 = vmatprep.subr.bf16.mxu0 0
        %2097 = vmatpush1.bf16.msra.mxu0 0
        %2098 = vmatprep.subr.bf16.mxu0 0
        %2099 = vmatpush1.bf16.msra.mxu0 %v1740
        %2100 = vmatprep.subr.bf16.mxu0 0
        %2101 = vmatpush2.bf16.msra.mxu0 0
        %2102 = vmatprep.subr.bf16.mxu0 0
        %2103 = vmatpush2.bf16.msra.mxu0 0
        %2104 = vmatprep.subr.bf16.mxu0 0
        %2105 = vmatpush2.bf16.msra.mxu0 0
        %2106 = vmatprep.subr.bf16.mxu0 0
        %2107 = vmatpush2.bf16.msra.mxu0 0
        %2108 = vmatprep.subr.bf16.mxu0 0
        %2109 = vmatpush2.bf16.msra.mxu0 0
        %2110 = vmatprep.subr.bf16.mxu0 0
        %2111 = vmatpush2.bf16.msra.mxu0 0
        %2112 = vmatprep.subr.bf16.mxu0 0
        %2113 = vmatpush2.bf16.msra.mxu0 0
        %2114 = vmatprep.subr.bf16.mxu0 0
        %2115 = vmatpush2.bf16.msra.mxu0 0
        %2116 = vmatprep.mubr.bf16.mxu0 0
        %2117 = vmatmul.mubr.bf16.gmra.mxu0 %v2082
        %v2118 = vpop.f32.mrf.mxu0
        %v2119 = vadd.f32 0.0, %v2118
        %v2120 = vpop.f32.mrf.mxu0
        %v2121 = vpop.f32.mrf.mxu0
        %v2122 = vadd.f32 0.0, %v2121
        %v2123 = vpop.f32.mrf.mxu0
        %2124 = vdwg.mxu0
        %v2126 = vsel %vm1944, %v2035, 0
        %2128 = vmatprep.subr.bf16.mxu0 0
        %2129 = vmatpush1.bf16.msra.mxu0 0
        %2130 = vmatprep.subr.bf16.mxu0 0
        %2131 = vmatpush1.bf16.msra.mxu0 0
        %2132 = vmatprep.subr.bf16.mxu0 0
        %2133 = vmatpush1.bf16.msra.mxu0 0
        %2134 = vmatprep.subr.bf16.mxu0 0
        %2135 = vmatpush1.bf16.msra.mxu0 0
        %2136 = vmatprep.subr.bf16.mxu0 0
        %2137 = vmatpush1.bf16.msra.mxu0 0
        %2138 = vmatprep.subr.bf16.mxu0 0
        %2139 = vmatpush1.bf16.msra.mxu0 0
        %2140 = vmatprep.subr.bf16.mxu0 0
        %2141 = vmatpush1.bf16.msra.mxu0 0
        %2142 = vmatprep.subr.bf16.mxu0 0
        %2143 = vmatpush1.bf16.msra.mxu0 %v1741
        %2144 = vmatprep.subr.bf16.mxu0 0
        %2145 = vmatpush2.bf16.msra.mxu0 0
        %2146 = vmatprep.subr.bf16.mxu0 0
        %2147 = vmatpush2.bf16.msra.mxu0 0
        %2148 = vmatprep.subr.bf16.mxu0 0
        %2149 = vmatpush2.bf16.msra.mxu0 0
        %2150 = vmatprep.subr.bf16.mxu0 0
        %2151 = vmatpush2.bf16.msra.mxu0 0
        %2152 = vmatprep.subr.bf16.mxu0 0
        %2153 = vmatpush2.bf16.msra.mxu0 0
        %2154 = vmatprep.subr.bf16.mxu0 0
        %2155 = vmatpush2.bf16.msra.mxu0 0
        %2156 = vmatprep.subr.bf16.mxu0 0
        %2157 = vmatpush2.bf16.msra.mxu0 0
        %2158 = vmatprep.subr.bf16.mxu0 0
        %2159 = vmatpush2.bf16.msra.mxu0 0
        %2160 = vmatprep.mubr.bf16.mxu0 0
        %2161 = vmatmul.mubr.bf16.gmra.mxu0 %v2126
        %v2162 = vpop.f32.mrf.mxu0
        %v2163 = vadd.f32 0.0, %v2162
        %v2164 = vpop.f32.mrf.mxu0
        %v2165 = vpop.f32.mrf.mxu0
        %v2166 = vadd.f32 0.0, %v2165
        %v2167 = vpop.f32.mrf.mxu0
        %2168 = vdwg.mxu0
        %v2170 = vsel %vm1944, %v2036, 0
        %2172 = vmatprep.subr.bf16.mxu0 0
        %2173 = vmatpush1.bf16.msra.mxu0 0
        %2174 = vmatprep.subr.bf16.mxu0 0
        %2175 = vmatpush1.bf16.msra.mxu0 0
        %2176 = vmatprep.subr.bf16.mxu0 0
        %2177 = vmatpush1.bf16.msra.mxu0 0
        %2178 = vmatprep.subr.bf16.mxu0 0
        %2179 = vmatpush1.bf16.msra.mxu0 0
        %2180 = vmatprep.subr.bf16.mxu0 0
        %2181 = vmatpush1.bf16.msra.mxu0 0
        %2182 = vmatprep.subr.bf16.mxu0 0
        %2183 = vmatpush1.bf16.msra.mxu0 0
        %2184 = vmatprep.subr.bf16.mxu0 0
        %2185 = vmatpush1.bf16.msra.mxu0 0
        %2186 = vmatprep.subr.bf16.mxu0 0
        %2187 = vmatpush1.bf16.msra.mxu0 %v1742
        %2188 = vmatprep.subr.bf16.mxu0 0
        %2189 = vmatpush2.bf16.msra.mxu0 0
        %2190 = vmatprep.subr.bf16.mxu0 0
        %2191 = vmatpush2.bf16.msra.mxu0 0
        %2192 = vmatprep.subr.bf16.mxu0 0
        %2193 = vmatpush2.bf16.msra.mxu0 0
        %2194 = vmatprep.subr.bf16.mxu0 0
        %2195 = vmatpush2.bf16.msra.mxu0 0
        %2196 = vmatprep.subr.bf16.mxu0 0
        %2197 = vmatpush2.bf16.msra.mxu0 0
        %2198 = vmatprep.subr.bf16.mxu0 0
        %2199 = vmatpush2.bf16.msra.mxu0 0
        %2200 = vmatprep.subr.bf16.mxu0 0
        %2201 = vmatpush2.bf16.msra.mxu0 0
        %2202 = vmatprep.subr.bf16.mxu0 0
        %2203 = vmatpush2.bf16.msra.mxu0 0
        %2204 = vmatprep.mubr.bf16.mxu0 0
        %2205 = vmatmul.mubr.bf16.gmra.mxu0 %v2170
        %v2206 = vpop.f32.mrf.mxu0
        %v2207 = vadd.f32 0.0, %v2206
        %v2208 = vpop.f32.mrf.mxu0
        %v2209 = vpop.f32.mrf.mxu0
        %v2210 = vadd.f32 0.0, %v2209
        %v2211 = vpop.f32.mrf.mxu0
        %2212 = vdwg.mxu0
        %v2213 = vcombine.low %v2075, %v2163
        %v2214 = vcombine.high %v2075, %v2163
        %v2216 = vunpack.c.l.s4 1983009808
        %v2217 = vunpack.c.0.s8 %v2216
        %v2218 = vlaneseq
        %v2219 = vshrl.u32 %v2218, 7
        %v2220 = vsub.s32 %v2217, %v2219
        %v2221 = vrot.slane %v2213, %v2220
        %v2223 = vunpack.c.l.s4 1983009808
        %v2224 = vunpack.c.0.s8 %v2223
        %v2225 = vlaneseq
        %v2226 = vshrl.u32 %v2225, 7
        %v2227 = vsub.s32 %v2224, %v2226
        %v2228 = vrot.slane %v2214, %v2227
        %v2229 = vcombine.low %v2119, %v2207
        %v2230 = vcombine.high %v2119, %v2207
        %v2232 = vunpack.c.l.s4 1983009808
        %v2233 = vunpack.c.0.s8 %v2232
        %v2234 = vlaneseq
        %v2235 = vshrl.u32 %v2234, 7
        %v2236 = vsub.s32 %v2233, %v2235
        %v2237 = vrot.slane %v2229, %v2236
        %v2239 = vunpack.c.l.s4 1983009808
        %v2240 = vunpack.c.0.s8 %v2239
        %v2241 = vlaneseq
        %v2242 = vshrl.u32 %v2241, 7
        %v2243 = vsub.s32 %v2240, %v2242
        %v2244 = vrot.slane %v2230, %v2243
        %v2245 = vcombine.low %v2221, %v2237
        %v2246 = vcombine.high %v2221, %v2237
        %v2248 = vunpack.c.l.s4 1934713408
        %v2249 = vunpack.c.0.s8 %v2248
        %v2250 = vlaneseq
        %v2251 = vshrl.u32 %v2250, 7
        %v2252 = vsub.s32 %v2249, %v2251
        %v2253 = vrot.slane %v2245, %v2252
        %v2255 = vunpack.c.l.s4 1934713408
        %v2256 = vunpack.c.0.s8 %v2255
        %v2257 = vlaneseq
        %v2258 = vshrl.u32 %v2257, 7
        %v2259 = vsub.s32 %v2256, %v2258
        %v2260 = vrot.slane %v2246, %v2259
        %v2261 = vcombine.low %v2228, %v2244
        %v2262 = vcombine.high %v2228, %v2244
        %v2264 = vunpack.c.l.s4 1934713408
        %v2265 = vunpack.c.0.s8 %v2264
        %v2266 = vlaneseq
        %v2267 = vshrl.u32 %v2266, 7
        %v2268 = vsub.s32 %v2265, %v2267
        %v2269 = vrot.slane %v2261, %v2268
        %v2271 = vunpack.c.l.s4 1934713408
        %v2272 = vunpack.c.0.s8 %v2271
        %v2273 = vlaneseq
        %v2274 = vshrl.u32 %v2273, 7
        %v2275 = vsub.s32 %v2272, %v2274
        %v2276 = vrot.slane %v2262, %v2275
        %v2277 = vcombine.high %v2253, 0.0
        %v2278 = vcombine.high %v2260, 0.0
        %v2279 = vcombine.high %v2269, 0.0
        %v2280 = vcombine.high %v2276, 0.0
        %v2281 = vcombine.low %v2078, %v2166
        %v2282 = vcombine.high %v2078, %v2166
        %v2284 = vunpack.c.l.s4 1983009808
        %v2285 = vunpack.c.0.s8 %v2284
        %v2286 = vlaneseq
        %v2287 = vshrl.u32 %v2286, 7
        %v2288 = vsub.s32 %v2285, %v2287
        %v2289 = vrot.slane %v2281, %v2288
        %v2291 = vunpack.c.l.s4 1983009808
        %v2292 = vunpack.c.0.s8 %v2291
        %v2293 = vlaneseq
        %v2294 = vshrl.u32 %v2293, 7
        %v2295 = vsub.s32 %v2292, %v2294
        %v2296 = vrot.slane %v2282, %v2295
        %v2297 = vcombine.low %v2122, %v2210
        %v2298 = vcombine.high %v2122, %v2210
        %v2300 = vunpack.c.l.s4 1983009808
        %v2301 = vunpack.c.0.s8 %v2300
        %v2302 = vlaneseq
        %v2303 = vshrl.u32 %v2302, 7
        %v2304 = vsub.s32 %v2301, %v2303
        %v2305 = vrot.slane %v2297, %v2304
        %v2307 = vunpack.c.l.s4 1983009808
        %v2308 = vunpack.c.0.s8 %v2307
        %v2309 = vlaneseq
        %v2310 = vshrl.u32 %v2309, 7
        %v2311 = vsub.s32 %v2308, %v2310
        %v2312 = vrot.slane %v2298, %v2311
        %v2313 = vcombine.low %v2289, %v2305
        %v2314 = vcombine.high %v2289, %v2305
        %v2316 = vunpack.c.l.s4 1934713408
        %v2317 = vunpack.c.0.s8 %v2316
        %v2318 = vlaneseq
        %v2319 = vshrl.u32 %v2318, 7
        %v2320 = vsub.s32 %v2317, %v2319
        %v2321 = vrot.slane %v2313, %v2320
        %v2323 = vunpack.c.l.s4 1934713408
        %v2324 = vunpack.c.0.s8 %v2323
        %v2325 = vlaneseq
        %v2326 = vshrl.u32 %v2325, 7
        %v2327 = vsub.s32 %v2324, %v2326
        %v2328 = vrot.slane %v2314, %v2327
        %v2329 = vcombine.low %v2296, %v2312
        %v2330 = vcombine.high %v2296, %v2312
        %v2332 = vunpack.c.l.s4 1934713408
        %v2333 = vunpack.c.0.s8 %v2332
        %v2334 = vlaneseq
        %v2335 = vshrl.u32 %v2334, 7
        %v2336 = vsub.s32 %v2333, %v2335
        %v2337 = vrot.slane %v2329, %v2336
        %v2339 = vunpack.c.l.s4 1934713408
        %v2340 = vunpack.c.0.s8 %v2339
        %v2341 = vlaneseq
        %v2342 = vshrl.u32 %v2341, 7
        %v2343 = vsub.s32 %v2340, %v2342
        %v2344 = vrot.slane %v2330, %v2343
        %v2345 = vcombine.high %v2321, 0.0
        %v2346 = vcombine.high %v2328, 0.0
        %v2347 = vcombine.high %v2337, 0.0
        %v2348 = vcombine.high %v2344, 0.0
        %v2349 = vcombine.low %v2253, %v2260
        %v2351 = vunpack.c.l.s4 1983009808
        %v2352 = vunpack.c.0.s8 %v2351
        %v2353 = vlaneseq
        %v2354 = vshrl.u32 %v2353, 7
        %v2355 = vsub.s32 %v2352, %v2354
        %v2356 = vrot.slane %v2349, %v2355
        %v2357 = vcombine.low %v2277, %v2278
        %v2359 = vunpack.c.l.s4 1983009808
        %v2360 = vunpack.c.0.s8 %v2359
        %v2361 = vlaneseq
        %v2362 = vshrl.u32 %v2361, 7
        %v2363 = vsub.s32 %v2360, %v2362
        %v2364 = vrot.slane %v2357, %v2363
        %v2365 = vcombine.low %v2269, %v2276
        %v2367 = vunpack.c.l.s4 1983009808
        %v2368 = vunpack.c.0.s8 %v2367
        %v2369 = vlaneseq
        %v2370 = vshrl.u32 %v2369, 7
        %v2371 = vsub.s32 %v2368, %v2370
        %v2372 = vrot.slane %v2365, %v2371
        %v2373 = vcombine.low %v2279, %v2280
        %v2375 = vunpack.c.l.s4 1983009808
        %v2376 = vunpack.c.0.s8 %v2375
        %v2377 = vlaneseq
        %v2378 = vshrl.u32 %v2377, 7
        %v2379 = vsub.s32 %v2376, %v2378
        %v2380 = vrot.slane %v2373, %v2379
        %v2381 = vcombine.low %v2356, %v2364
        %v2382 = vcombine.high %v2356, %v2364
        %v2384 = vunpack.c.l.s4 1934713408
        %v2385 = vunpack.c.0.s8 %v2384
        %v2386 = vlaneseq
        %v2387 = vshrl.u32 %v2386, 7
        %v2388 = vsub.s32 %v2385, %v2387
        %v2389 = vrot.slane %v2381, %v2388
        %v2391 = vunpack.c.l.s4 1934713408
        %v2392 = vunpack.c.0.s8 %v2391
        %v2393 = vlaneseq
        %v2394 = vshrl.u32 %v2393, 7
        %v2395 = vsub.s32 %v2392, %v2394
        %v2396 = vrot.slane %v2382, %v2395
        %v2397 = vcombine.low %v2372, %v2380
        %v2398 = vcombine.high %v2372, %v2380
        %v2400 = vunpack.c.l.s4 1934713408
        %v2401 = vunpack.c.0.s8 %v2400
        %v2402 = vlaneseq
        %v2403 = vshrl.u32 %v2402, 7
        %v2404 = vsub.s32 %v2401, %v2403
        %v2405 = vrot.slane %v2397, %v2404
        %v2407 = vunpack.c.l.s4 1934713408
        %v2408 = vunpack.c.0.s8 %v2407
        %v2409 = vlaneseq
        %v2410 = vshrl.u32 %v2409, 7
        %v2411 = vsub.s32 %v2408, %v2410
        %v2412 = vrot.slane %v2398, %v2411
        %v2413 = vcombine.low %v2389, %v2405
        %v2414 = vcombine.high %v2389, %v2405
        %v2415 = vcombine.low %v2396, %v2412
        %v2416 = vcombine.high %v2396, %v2412
        %v2417 = vcombine.low %v2321, %v2328
        %v2419 = vunpack.c.l.s4 1983009808
        %v2420 = vunpack.c.0.s8 %v2419
        %v2421 = vlaneseq
        %v2422 = vshrl.u32 %v2421, 7
        %v2423 = vsub.s32 %v2420, %v2422
        %v2424 = vrot.slane %v2417, %v2423
        %v2425 = vcombine.low %v2345, %v2346
        %v2427 = vunpack.c.l.s4 1983009808
        %v2428 = vunpack.c.0.s8 %v2427
        %v2429 = vlaneseq
        %v2430 = vshrl.u32 %v2429, 7
        %v2431 = vsub.s32 %v2428, %v2430
        %v2432 = vrot.slane %v2425, %v2431
        %v2433 = vcombine.low %v2337, %v2344
        %v2435 = vunpack.c.l.s4 1983009808
        %v2436 = vunpack.c.0.s8 %v2435
        %v2437 = vlaneseq
        %v2438 = vshrl.u32 %v2437, 7
        %v2439 = vsub.s32 %v2436, %v2438
        %v2440 = vrot.slane %v2433, %v2439
        %v2441 = vcombine.low %v2347, %v2348
        %v2443 = vunpack.c.l.s4 1983009808
        %v2444 = vunpack.c.0.s8 %v2443
        %v2445 = vlaneseq
        %v2446 = vshrl.u32 %v2445, 7
        %v2447 = vsub.s32 %v2444, %v2446
        %v2448 = vrot.slane %v2441, %v2447
        %v2449 = vcombine.low %v2424, %v2432
        %v2450 = vcombine.high %v2424, %v2432
        %v2452 = vunpack.c.l.s4 1934713408
        %v2453 = vunpack.c.0.s8 %v2452
        %v2454 = vlaneseq
        %v2455 = vshrl.u32 %v2454, 7
        %v2456 = vsub.s32 %v2453, %v2455
        %v2457 = vrot.slane %v2449, %v2456
        %v2459 = vunpack.c.l.s4 1934713408
        %v2460 = vunpack.c.0.s8 %v2459
        %v2461 = vlaneseq
        %v2462 = vshrl.u32 %v2461, 7
        %v2463 = vsub.s32 %v2460, %v2462
        %v2464 = vrot.slane %v2450, %v2463
        %v2465 = vcombine.low %v2440, %v2448
        %v2466 = vcombine.high %v2440, %v2448
        %v2468 = vunpack.c.l.s4 1934713408
        %v2469 = vunpack.c.0.s8 %v2468
        %v2470 = vlaneseq
        %v2471 = vshrl.u32 %v2470, 7
        %v2472 = vsub.s32 %v2469, %v2471
        %v2473 = vrot.slane %v2465, %v2472
        %v2475 = vunpack.c.l.s4 1934713408
        %v2476 = vunpack.c.0.s8 %v2475
        %v2477 = vlaneseq
        %v2478 = vshrl.u32 %v2477, 7
        %v2479 = vsub.s32 %v2476, %v2478
        %v2480 = vrot.slane %v2466, %v2479
        %v2481 = vcombine.low %v2457, %v2473
        %v2482 = vcombine.high %v2457, %v2473
        %v2483 = vcombine.low %v2464, %v2480
        %v2484 = vcombine.high %v2464, %v2480
        %2487 = vrot.lane.b32.xlu0 %v2414, 32
        %v2488 = vpop.permute.xlu0 %2487
        %2489 = vrot.lane.b32.xlu0 %v2482, 32
        %v2490 = vpop.permute.xlu0 %2489
        %2495 = vrot.lane.b32.xlu0 %v2415, 64
        %v2496 = vpop.permute.xlu0 %2495
        %2497 = vrot.lane.b32.xlu0 %v2483, 64
        %v2498 = vpop.permute.xlu0 %2497
        %2503 = vrot.lane.b32.xlu0 %v2416, 96
        %v2504 = vpop.permute.xlu0 %2503
        %2505 = vrot.lane.b32.xlu0 %v2484, 96
        %v2506 = vpop.permute.xlu0 %2505
        %v2509 = vsel %vm1743, %v2413, %v2488
        %v2510 = vsel %vm1743, %v2481, %v2490
        %vm2511 = vcmask 523264
        %v2512 = vsel %vm2511, %v2509, %v2496
        %v2513 = vsel %vm2511, %v2510, %v2498
        %vm2514 = vcmask 785408
        %v2515 = vsel %vm2514, %v2512, %v2504
        %v2516 = vsel %vm2514, %v2513, %v2506
        %v2517 = vpack.c.bf16 %v2516, %v2515
        %v2518 = vld [vmem:[#allocation11] sm:$0xf]
        %v2519 = vld [vmem:[#allocation11 + $0x4] sm:$0xf]
        %v2520 = vld [vmem:[#allocation11 + $0x8] sm:$0xf]
        %v2521 = vld [vmem:[#allocation11 + $0xc] sm:$0xf]
        %v2522 = vld [vmem:[#allocation11 + $0x10] sm:$0xf]
        %v2523 = vld [vmem:[#allocation11 + $0x14] sm:$0xf]
        %v2524 = vld [vmem:[#allocation11 + $0x18] sm:$0xf]
        %v2525 = vld [vmem:[#allocation11 + $0x1c] sm:$0xf]
        %v2526 = vld [vmem:[#allocation11 + $0x20] sm:$0xf]
        %v2527 = vld [vmem:[#allocation11 + $0x24] sm:$0xf]
        %v2528 = vld [vmem:[#allocation11 + $0x28] sm:$0xf]
        %v2529 = vld [vmem:[#allocation11 + $0x2c] sm:$0xf]
        %v2530 = vld [vmem:[#allocation11 + $0x30] sm:$0xf]
        %v2531 = vld [vmem:[#allocation11 + $0x34] sm:$0xf]
        %v2532 = vld [vmem:[#allocation11 + $0x38] sm:$0xf]
        %v2533 = vld [vmem:[#allocation11 + $0x3c] sm:$0xf]
        %v2534 = vld [vmem:[%s6] sm:$0x1]
        %v2536 = vlaneseq
        %v2537 = vshrl.u32 %v2536, 7
        %v2538 = vsub.s32 0, %v2537
        %v2539 = vrot.slane %v2534, %v2538
        %v2557 = vunpack.c.l.b16 %v2518
        %v2558 = vunpack.c.l.b16 %v2519
        %v2559 = vunpack.c.l.b16 %v2520
        %v2560 = vunpack.c.l.b16 %v2521
        %v2561 = vunpack.c.l.b16 %v2522
        %v2562 = vunpack.c.l.b16 %v2523
        %v2563 = vunpack.c.l.b16 %v2524
        %v2564 = vunpack.c.l.b16 %v2525
        %v2565 = vunpack.c.l.b16 %v2526
        %v2566 = vunpack.c.l.b16 %v2527
        %v2567 = vunpack.c.l.b16 %v2528
        %v2568 = vunpack.c.l.b16 %v2529
        %v2569 = vunpack.c.l.b16 %v2530
        %v2570 = vunpack.c.l.b16 %v2531
        %v2571 = vunpack.c.l.b16 %v2532
        %v2572 = vunpack.c.l.b16 %v2533
        %v2573 = vpack.c.b16 %v2558, %v2557
        %v2574 = vpack.c.b16 %v2560, %v2559
        %v2575 = vpack.c.b16 %v2562, %v2561
        %v2576 = vpack.c.b16 %v2564, %v2563
        %v2577 = vpack.c.b16 %v2566, %v2565
        %v2578 = vpack.c.b16 %v2568, %v2567
        %v2579 = vpack.c.b16 %v2570, %v2569
        %v2580 = vpack.c.b16 %v2572, %v2571
        %2589 = vmatprep.subr.bf16.mxu0 0
        %2590 = vmatpush1.bf16.msra.mxu0 %v2580
        %2591 = vmatprep.subr.bf16.mxu0 0
        %2592 = vmatpush1.bf16.msra.mxu0 %v2579
        %2593 = vmatprep.subr.bf16.mxu0 0
        %2594 = vmatpush1.bf16.msra.mxu0 %v2578
        %2595 = vmatprep.subr.bf16.mxu0 0
        %2596 = vmatpush1.bf16.msra.mxu0 %v2577
        %2597 = vmatprep.subr.bf16.mxu0 0
        %2598 = vmatpush1.bf16.msra.mxu0 %v2576
        %2599 = vmatprep.subr.bf16.mxu0 0
        %2600 = vmatpush1.bf16.msra.mxu0 %v2575
        %2601 = vmatprep.subr.bf16.mxu0 0
        %2602 = vmatpush1.bf16.msra.mxu0 %v2574
        %2603 = vmatprep.subr.bf16.mxu0 0
        %2604 = vmatpush1.bf16.msra.mxu0 %v2573
        %2605 = vmatprep.subr.bf16.mxu0 0
        %2606 = vmatpush2.bf16.msra.mxu0 0
        %2607 = vmatprep.subr.bf16.mxu0 0
        %2608 = vmatpush2.bf16.msra.mxu0 0
        %2609 = vmatprep.subr.bf16.mxu0 0
        %2610 = vmatpush2.bf16.msra.mxu0 0
        %2611 = vmatprep.subr.bf16.mxu0 0
        %2612 = vmatpush2.bf16.msra.mxu0 0
        %2613 = vmatprep.subr.bf16.mxu0 0
        %2614 = vmatpush2.bf16.msra.mxu0 0
        %2615 = vmatprep.subr.bf16.mxu0 0
        %2616 = vmatpush2.bf16.msra.mxu0 0
        %2617 = vmatprep.subr.bf16.mxu0 0
        %2618 = vmatpush2.bf16.msra.mxu0 0
        %2619 = vmatprep.subr.bf16.mxu0 0
        %2620 = vmatpush2.bf16.msra.mxu0 0
        %2621 = vmatprep.mubr.bf16.mxu0 0
        %2622 = vmatmul.mubr.bf16.gmra.mxu0 %v2517
        %v2623 = vpop.f32.mrf.mxu0
        %v2624 = vadd.f32 %v2539, %v2623
        %v2625 = vpop.f32.mrf.mxu0
        %v2626 = vpop.f32.mrf.mxu0
        %v2627 = vadd.f32 %v2539, %v2626
        %v2628 = vpop.f32.mrf.mxu0
        %2629 = vdwg.mxu0
        %v2630 = vadd.f32 %v543, %v2624
        %v2631 = vadd.f32 %v544, %v2627
        %v2632 = vld [vmem:[%s7] sm:$0x1]
        %v2633 = vld [vmem:[%s8] sm:$0x1]
        %2634 = vadd.xlane.f32.xlu0 %v2630
        %v2635 = vpop.xlane.xlu0 %2634
        %2636 = vadd.xlane.f32.xlu0 %v2631
        %v2637 = vpop.xlane.xlu0 %2636
        %v2638 = vmul.f32 %v2635, %v551
        %v2639 = vmul.f32 %v2637, %v551
        %v2640 = vsub.f32 %v2630, %v2638
        %v2641 = vsub.f32 %v2631, %v2639
        %v2642 = vmul.f32 %v2640, %v2640
        %v2643 = vmul.f32 %v2641, %v2641
        %2644 = vadd.xlane.f32.xlu0 %v2642
        %v2645 = vpop.xlane.xlu0 %2644
        %2646 = vadd.xlane.f32.xlu0 %v2643
        %v2647 = vpop.xlane.xlu0 %2646
        %v2648 = vmul.f32 %v2645, %v551
        %v2649 = vmul.f32 %v2647, %v551
        %v2650 = vadd.f32 %v2648, 1e-05
        %v2651 = vadd.f32 %v2649, 1e-05
        %v2652 = vrsqrt.pop %v2650
        %v2653 = vrsqrt.pop %v2651
        %v2654 = vmul.f32 %v2640, %v2652
        %v2655 = vmul.f32 %v2641, %v2653
        %v2657 = vlaneseq
        %v2658 = vshrl.u32 %v2657, 7
        %v2659 = vsub.s32 0, %v2658
        %v2660 = vrot.slane %v2632, %v2659
        %v2662 = vmul.f32 %v2654, %v2660
        %v2663 = vmul.f32 %v2655, %v2660
        %v2665 = vlaneseq
        %v2666 = vshrl.u32 %v2665, 7
        %v2667 = vsub.s32 0, %v2666
        %v2668 = vrot.slane %v2633, %v2667
        %v2670 = vadd.f32 %v2662, %v2668
        %v2671 = vadd.f32 %v2663, %v2668
        %v2672 = vpack.c.bf16 %v2671, %v2670
        %2673 = vst [vmem:[#allocation2] sm:$0xff] 0.0
        %2674 = vst [vmem:[#allocation2 + $0x8] sm:$0xff] 0.0
        %v2675 = vld [vmem:[#allocation12] sm:$0xff]
        %v2676 = vld [vmem:[#allocation12 + $0x10] sm:$0xff]
        %v2677 = vld [vmem:[#allocation12 + $0x20] sm:$0xff]
        %v2678 = vld [vmem:[#allocation12 + $0x30] sm:$0xff]
        %v2679 = vld [vmem:[#allocation12 + $0x40] sm:$0xff]
        %v2680 = vld [vmem:[#allocation12 + $0x50] sm:$0xff]
        %v2681 = vld [vmem:[#allocation12 + $0x60] sm:$0xff]
        %v2682 = vld [vmem:[#allocation12 + $0x70] sm:$0xff]
        %v2683 = vld [vmem:[#allocation12 + $0x80] sm:$0xff]
        %v2684 = vld [vmem:[#allocation12 + $0x90] sm:$0xff]
        %v2685 = vld [vmem:[#allocation12 + $0xa0] sm:$0xff]
        %v2686 = vld [vmem:[#allocation12 + $0xb0] sm:$0xff]
        %v2687 = vld [vmem:[#allocation12 + $0xc0] sm:$0xff]
        %v2688 = vld [vmem:[#allocation12 + $0xd0] sm:$0xff]
        %v2689 = vld [vmem:[#allocation12 + $0xe0] sm:$0xff]
        %v2690 = vld [vmem:[#allocation12 + $0xf0] sm:$0xff]
        %v2691 = vld [vmem:[%s10] sm:$0x3]
        %v2693 = vlaneseq
        %v2694 = vshrl.u32 %v2693, 7
        %v2695 = vsub.s32 0, %v2694
        %v2696 = vrot.slane %v2691, %v2695
        %v2697 = vlaneseq
        %v2698 = vshrl.u32 %v2697, 7
        %v2699 = vsub.s32 1, %v2698
        %v2700 = vrot.slane %v2691, %v2699
        %v2719 = vunpack.c.l.b16 %v2675
        %v2720 = vunpack.c.h.b16 %v2675
        %v2721 = vunpack.c.l.b16 %v2676
        %v2722 = vunpack.c.h.b16 %v2676
        %v2723 = vunpack.c.l.b16 %v2677
        %v2724 = vunpack.c.h.b16 %v2677
        %v2725 = vunpack.c.l.b16 %v2678
        %v2726 = vunpack.c.h.b16 %v2678
        %v2727 = vunpack.c.l.b16 %v2679
        %v2728 = vunpack.c.h.b16 %v2679
        %v2729 = vunpack.c.l.b16 %v2680
        %v2730 = vunpack.c.h.b16 %v2680
        %v2731 = vunpack.c.l.b16 %v2681
        %v2732 = vunpack.c.h.b16 %v2681
        %v2733 = vunpack.c.l.b16 %v2682
        %v2734 = vunpack.c.h.b16 %v2682
        %v2735 = vunpack.c.l.b16 %v2683
        %v2736 = vunpack.c.h.b16 %v2683
        %v2737 = vunpack.c.l.b16 %v2684
        %v2738 = vunpack.c.h.b16 %v2684
        %v2739 = vunpack.c.l.b16 %v2685
        %v2740 = vunpack.c.h.b16 %v2685
        %v2741 = vunpack.c.l.b16 %v2686
        %v2742 = vunpack.c.h.b16 %v2686
        %v2743 = vunpack.c.l.b16 %v2687
        %v2744 = vunpack.c.h.b16 %v2687
        %v2745 = vunpack.c.l.b16 %v2688
        %v2746 = vunpack.c.h.b16 %v2688
        %v2747 = vunpack.c.l.b16 %v2689
        %v2748 = vunpack.c.h.b16 %v2689
        %v2749 = vunpack.c.l.b16 %v2690
        %v2750 = vunpack.c.h.b16 %v2690
        %v2751 = vpack.c.b16 %v2721, %v2719
        %v2752 = vpack.c.b16 %v2722, %v2720
        %v2753 = vpack.c.b16 %v2725, %v2723
        %v2754 = vpack.c.b16 %v2726, %v2724
        %v2755 = vpack.c.b16 %v2729, %v2727
        %v2756 = vpack.c.b16 %v2730, %v2728
        %v2757 = vpack.c.b16 %v2733, %v2731
        %v2758 = vpack.c.b16 %v2734, %v2732
        %v2759 = vpack.c.b16 %v2737, %v2735
        %v2760 = vpack.c.b16 %v2738, %v2736
        %v2761 = vpack.c.b16 %v2741, %v2739
        %v2762 = vpack.c.b16 %v2742, %v2740
        %v2763 = vpack.c.b16 %v2745, %v2743
        %v2764 = vpack.c.b16 %v2746, %v2744
        %v2765 = vpack.c.b16 %v2749, %v2747
        %v2766 = vpack.c.b16 %v2750, %v2748
        %2783 = vmatprep.subr.bf16.mxu0 %v2766
        %2784 = vmatpush1.bf16.msra.mxu0 %v2765
        %2785 = vmatprep.subr.bf16.mxu0 %v2764
        %2786 = vmatpush1.bf16.msra.mxu0 %v2763
        %2787 = vmatprep.subr.bf16.mxu0 %v2762
        %2788 = vmatpush1.bf16.msra.mxu0 %v2761
        %2789 = vmatprep.subr.bf16.mxu0 %v2760
        %2790 = vmatpush1.bf16.msra.mxu0 %v2759
        %2791 = vmatprep.subr.bf16.mxu0 %v2758
        %2792 = vmatpush1.bf16.msra.mxu0 %v2757
        %2793 = vmatprep.subr.bf16.mxu0 %v2756
        %2794 = vmatpush1.bf16.msra.mxu0 %v2755
        %2795 = vmatprep.subr.bf16.mxu0 %v2754
        %2796 = vmatpush1.bf16.msra.mxu0 %v2753
        %2797 = vmatprep.subr.bf16.mxu0 %v2752
        %2798 = vmatpush1.bf16.msra.mxu0 %v2751
        %2799 = vmatprep.subr.bf16.mxu0 0
        %2800 = vmatpush2.bf16.msra.mxu0 0
        %2801 = vmatprep.subr.bf16.mxu0 0
        %2802 = vmatpush2.bf16.msra.mxu0 0
        %2803 = vmatprep.subr.bf16.mxu0 0
        %2804 = vmatpush2.bf16.msra.mxu0 0
        %2805 = vmatprep.subr.bf16.mxu0 0
        %2806 = vmatpush2.bf16.msra.mxu0 0
        %2807 = vmatprep.subr.bf16.mxu0 0
        %2808 = vmatpush2.bf16.msra.mxu0 0
        %2809 = vmatprep.subr.bf16.mxu0 0
        %2810 = vmatpush2.bf16.msra.mxu0 0
        %2811 = vmatprep.subr.bf16.mxu0 0
        %2812 = vmatpush2.bf16.msra.mxu0 0
        %2813 = vmatprep.subr.bf16.mxu0 0
        %2814 = vmatpush2.bf16.msra.mxu0 0
        %2815 = vmatprep.mubr.bf16.mxu0 0
        %2816 = vmatmul.mubr.bf16.gmra.mxu0 %v2672
        %v2817 = vpop.f32.mrf.mxu0
        %v2818 = vadd.f32 %v2696, %v2817
        %v2819 = vpop.f32.mrf.mxu0
        %v2820 = vadd.f32 %v2700, %v2819
        %v2821 = vpop.f32.mrf.mxu0
        %v2822 = vadd.f32 %v2696, %v2821
        %v2823 = vpop.f32.mrf.mxu0
        %v2824 = vadd.f32 %v2700, %v2823
        %2825 = vdwg.mxu0
        %v2826 = vmax.f32 %v2818, 0.0
        %v2827 = vmax.f32 %v2820, 0.0
        %v2828 = vmax.f32 %v2822, 0.0
        %v2829 = vmax.f32 %v2824, 0.0
        %v2830 = vmul.f32 %v2826, %v2826
        %v2831 = vmul.f32 %v2827, %v2827
        %v2832 = vmul.f32 %v2828, %v2828
        %v2833 = vmul.f32 %v2829, %v2829
        %v2834 = vpack.c.bf16 %v2832, %v2830
        %v2835 = vpack.c.bf16 %v2833, %v2831
        %v2836 = vld [vmem:[#allocation2] sm:$0xff]
        %v2837 = vld [vmem:[#allocation2 + $0x8] sm:$0xff]
        %v2838 = vld [vmem:[#allocation14] sm:$0xf]
        %v2839 = vld [vmem:[#allocation14 + $0x4] sm:$0xf]
        %v2840 = vld [vmem:[#allocation14 + $0x8] sm:$0xf]
        %v2841 = vld [vmem:[#allocation14 + $0xc] sm:$0xf]
        %v2842 = vld [vmem:[#allocation14 + $0x10] sm:$0xf]
        %v2843 = vld [vmem:[#allocation14 + $0x14] sm:$0xf]
        %v2844 = vld [vmem:[#allocation14 + $0x18] sm:$0xf]
        %v2845 = vld [vmem:[#allocation14 + $0x1c] sm:$0xf]
        %v2846 = vld [vmem:[#allocation14 + $0x20] sm:$0xf]
        %v2847 = vld [vmem:[#allocation14 + $0x24] sm:$0xf]
        %v2848 = vld [vmem:[#allocation14 + $0x28] sm:$0xf]
        %v2849 = vld [vmem:[#allocation14 + $0x2c] sm:$0xf]
        %v2850 = vld [vmem:[#allocation14 + $0x30] sm:$0xf]
        %v2851 = vld [vmem:[#allocation14 + $0x34] sm:$0xf]
        %v2852 = vld [vmem:[#allocation14 + $0x38] sm:$0xf]
        %v2853 = vld [vmem:[#allocation14 + $0x3c] sm:$0xf]
        %v2854 = vld [vmem:[#allocation14 + $0x40] sm:$0xf]
        %v2855 = vld [vmem:[#allocation14 + $0x44] sm:$0xf]
        %v2856 = vld [vmem:[#allocation14 + $0x48] sm:$0xf]
        %v2857 = vld [vmem:[#allocation14 + $0x4c] sm:$0xf]
        %v2858 = vld [vmem:[#allocation14 + $0x50] sm:$0xf]
        %v2859 = vld [vmem:[#allocation14 + $0x54] sm:$0xf]
        %v2860 = vld [vmem:[#allocation14 + $0x58] sm:$0xf]
        %v2861 = vld [vmem:[#allocation14 + $0x5c] sm:$0xf]
        %v2862 = vld [vmem:[#allocation14 + $0x60] sm:$0xf]
        %v2863 = vld [vmem:[#allocation14 + $0x64] sm:$0xf]
        %v2864 = vld [vmem:[#allocation14 + $0x68] sm:$0xf]
        %v2865 = vld [vmem:[#allocation14 + $0x6c] sm:$0xf]
        %v2866 = vld [vmem:[#allocation14 + $0x70] sm:$0xf]
        %v2867 = vld [vmem:[#allocation14 + $0x74] sm:$0xf]
        %v2868 = vld [vmem:[#allocation14 + $0x78] sm:$0xf]
        %v2869 = vld [vmem:[#allocation14 + $0x7c] sm:$0xf]
        %v2902 = vunpack.c.l.b16 %v2838
        %v2903 = vunpack.c.l.b16 %v2839
        %v2904 = vunpack.c.l.b16 %v2840
        %v2905 = vunpack.c.l.b16 %v2841
        %v2906 = vunpack.c.l.b16 %v2842
        %v2907 = vunpack.c.l.b16 %v2843
        %v2908 = vunpack.c.l.b16 %v2844
        %v2909 = vunpack.c.l.b16 %v2845
        %v2910 = vunpack.c.l.b16 %v2846
        %v2911 = vunpack.c.l.b16 %v2847
        %v2912 = vunpack.c.l.b16 %v2848
        %v2913 = vunpack.c.l.b16 %v2849
        %v2914 = vunpack.c.l.b16 %v2850
        %v2915 = vunpack.c.l.b16 %v2851
        %v2916 = vunpack.c.l.b16 %v2852
        %v2917 = vunpack.c.l.b16 %v2853
        %v2918 = vunpack.c.l.b16 %v2854
        %v2919 = vunpack.c.l.b16 %v2855
        %v2920 = vunpack.c.l.b16 %v2856
        %v2921 = vunpack.c.l.b16 %v2857
        %v2922 = vunpack.c.l.b16 %v2858
        %v2923 = vunpack.c.l.b16 %v2859
        %v2924 = vunpack.c.l.b16 %v2860
        %v2925 = vunpack.c.l.b16 %v2861
        %v2926 = vunpack.c.l.b16 %v2862
        %v2927 = vunpack.c.l.b16 %v2863
        %v2928 = vunpack.c.l.b16 %v2864
        %v2929 = vunpack.c.l.b16 %v2865
        %v2930 = vunpack.c.l.b16 %v2866
        %v2931 = vunpack.c.l.b16 %v2867
        %v2932 = vunpack.c.l.b16 %v2868
        %v2933 = vunpack.c.l.b16 %v2869
        %v2934 = vpack.c.b16 %v2903, %v2902
        %v2935 = vpack.c.b16 %v2905, %v2904
        %v2936 = vpack.c.b16 %v2907, %v2906
        %v2937 = vpack.c.b16 %v2909, %v2908
        %v2938 = vpack.c.b16 %v2911, %v2910
        %v2939 = vpack.c.b16 %v2913, %v2912
        %v2940 = vpack.c.b16 %v2915, %v2914
        %v2941 = vpack.c.b16 %v2917, %v2916
        %v2942 = vpack.c.b16 %v2919, %v2918
        %v2943 = vpack.c.b16 %v2921, %v2920
        %v2944 = vpack.c.b16 %v2923, %v2922
        %v2945 = vpack.c.b16 %v2925, %v2924
        %v2946 = vpack.c.b16 %v2927, %v2926
        %v2947 = vpack.c.b16 %v2929, %v2928
        %v2948 = vpack.c.b16 %v2931, %v2930
        %v2949 = vpack.c.b16 %v2933, %v2932
        %2966 = vmatprep.subr.bf16.mxu0 0
        %2967 = vmatpush1.bf16.msra.mxu0 %v2941
        %2968 = vmatprep.subr.bf16.mxu0 0
        %2969 = vmatpush1.bf16.msra.mxu0 %v2940
        %2970 = vmatprep.subr.bf16.mxu0 0
        %2971 = vmatpush1.bf16.msra.mxu0 %v2939
        %2972 = vmatprep.subr.bf16.mxu0 0
        %2973 = vmatpush1.bf16.msra.mxu0 %v2938
        %2974 = vmatprep.subr.bf16.mxu0 0
        %2975 = vmatpush1.bf16.msra.mxu0 %v2937
        %2976 = vmatprep.subr.bf16.mxu0 0
        %2977 = vmatpush1.bf16.msra.mxu0 %v2936
        %2978 = vmatprep.subr.bf16.mxu0 0
        %2979 = vmatpush1.bf16.msra.mxu0 %v2935
        %2980 = vmatprep.subr.bf16.mxu0 0
        %2981 = vmatpush1.bf16.msra.mxu0 %v2934
        %2982 = vmatprep.subr.bf16.mxu0 0
        %2983 = vmatpush2.bf16.msra.mxu0 %v2949
        %2984 = vmatprep.subr.bf16.mxu0 0
        %2985 = vmatpush2.bf16.msra.mxu0 %v2948
        %2986 = vmatprep.subr.bf16.mxu0 0
        %2987 = vmatpush2.bf16.msra.mxu0 %v2947
        %2988 = vmatprep.subr.bf16.mxu0 0
        %2989 = vmatpush2.bf16.msra.mxu0 %v2946
        %2990 = vmatprep.subr.bf16.mxu0 0
        %2991 = vmatpush2.bf16.msra.mxu0 %v2945
        %2992 = vmatprep.subr.bf16.mxu0 0
        %2993 = vmatpush2.bf16.msra.mxu0 %v2944
        %2994 = vmatprep.subr.bf16.mxu0 0
        %2995 = vmatpush2.bf16.msra.mxu0 %v2943
        %2996 = vmatprep.subr.bf16.mxu0 0
        %2997 = vmatpush2.bf16.msra.mxu0 %v2942
        %2998 = vmatprep.mubr.bf16.mxu0 %v2835
        %2999 = vmatmul.mubr.bf16.gmra.mxu0 %v2834
        %v3000 = vpop.f32.mrf.mxu0
        %v3001 = vadd.f32 0.0, %v3000
        %v3002 = vpop.f32.mrf.mxu0
        %v3003 = vpop.f32.mrf.mxu0
        %v3004 = vadd.f32 0.0, %v3003
        %v3005 = vpop.f32.mrf.mxu0
        %3006 = vdwg.mxu0
        %v3007 = vadd.f32 %v2836, %v3001
        %v3008 = vadd.f32 %v2837, %v3004
        %3009 = vst [vmem:[#allocation2] sm:$0xff] %v3007
        %3010 = vst [vmem:[#allocation2 + $0x8] sm:$0xff] %v3008
        %v3011 = vld [vmem:[#allocation12 + $0x8] sm:$0xff]
        %v3012 = vld [vmem:[#allocation12 + $0x18] sm:$0xff]
        %v3013 = vld [vmem:[#allocation12 + $0x28] sm:$0xff]
        %v3014 = vld [vmem:[#allocation12 + $0x38] sm:$0xff]
        %v3015 = vld [vmem:[#allocation12 + $0x48] sm:$0xff]
        %v3016 = vld [vmem:[#allocation12 + $0x58] sm:$0xff]
        %v3017 = vld [vmem:[#allocation12 + $0x68] sm:$0xff]
        %v3018 = vld [vmem:[#allocation12 + $0x78] sm:$0xff]
        %v3019 = vld [vmem:[#allocation12 + $0x88] sm:$0xff]
        %v3020 = vld [vmem:[#allocation12 + $0x98] sm:$0xff]
        %v3021 = vld [vmem:[#allocation12 + $0xa8] sm:$0xff]
        %v3022 = vld [vmem:[#allocation12 + $0xb8] sm:$0xff]
        %v3023 = vld [vmem:[#allocation12 + $0xc8] sm:$0xff]
        %v3024 = vld [vmem:[#allocation12 + $0xd8] sm:$0xff]
        %v3025 = vld [vmem:[#allocation12 + $0xe8] sm:$0xff]
        %v3026 = vld [vmem:[#allocation12 + $0xf8] sm:$0xff]
        %v3027 = vld [vmem:[%s10 + $0x2] sm:$0x3]
        %v3029 = vlaneseq
        %v3030 = vshrl.u32 %v3029, 7
        %v3031 = vsub.s32 0, %v3030
        %v3032 = vrot.slane %v3027, %v3031
        %v3033 = vlaneseq
        %v3034 = vshrl.u32 %v3033, 7
        %v3035 = vsub.s32 1, %v3034
        %v3036 = vrot.slane %v3027, %v3035
        %v3055 = vunpack.c.l.b16 %v3011
        %v3056 = vunpack.c.h.b16 %v3011
        %v3057 = vunpack.c.l.b16 %v3012
        %v3058 = vunpack.c.h.b16 %v3012
        %v3059 = vunpack.c.l.b16 %v3013
        %v3060 = vunpack.c.h.b16 %v3013
        %v3061 = vunpack.c.l.b16 %v3014
        %v3062 = vunpack.c.h.b16 %v3014
        %v3063 = vunpack.c.l.b16 %v3015
        %v3064 = vunpack.c.h.b16 %v3015
        %v3065 = vunpack.c.l.b16 %v3016
        %v3066 = vunpack.c.h.b16 %v3016
        %v3067 = vunpack.c.l.b16 %v3017
        %v3068 = vunpack.c.h.b16 %v3017
        %v3069 = vunpack.c.l.b16 %v3018
        %v3070 = vunpack.c.h.b16 %v3018
        %v3071 = vunpack.c.l.b16 %v3019
        %v3072 = vunpack.c.h.b16 %v3019
        %v3073 = vunpack.c.l.b16 %v3020
        %v3074 = vunpack.c.h.b16 %v3020
        %v3075 = vunpack.c.l.b16 %v3021
        %v3076 = vunpack.c.h.b16 %v3021
        %v3077 = vunpack.c.l.b16 %v3022
        %v3078 = vunpack.c.h.b16 %v3022
        %v3079 = vunpack.c.l.b16 %v3023
        %v3080 = vunpack.c.h.b16 %v3023
        %v3081 = vunpack.c.l.b16 %v3024
        %v3082 = vunpack.c.h.b16 %v3024
        %v3083 = vunpack.c.l.b16 %v3025
        %v3084 = vunpack.c.h.b16 %v3025
        %v3085 = vunpack.c.l.b16 %v3026
        %v3086 = vunpack.c.h.b16 %v3026
        %v3087 = vpack.c.b16 %v3057, %v3055
        %v3088 = vpack.c.b16 %v3058, %v3056
        %v3089 = vpack.c.b16 %v3061, %v3059
        %v3090 = vpack.c.b16 %v3062, %v3060
        %v3091 = vpack.c.b16 %v3065, %v3063
        %v3092 = vpack.c.b16 %v3066, %v3064
        %v3093 = vpack.c.b16 %v3069, %v3067
        %v3094 = vpack.c.b16 %v3070, %v3068
        %v3095 = vpack.c.b16 %v3073, %v3071
        %v3096 = vpack.c.b16 %v3074, %v3072
        %v3097 = vpack.c.b16 %v3077, %v3075
        %v3098 = vpack.c.b16 %v3078, %v3076
        %v3099 = vpack.c.b16 %v3081, %v3079
        %v3100 = vpack.c.b16 %v3082, %v3080
        %v3101 = vpack.c.b16 %v3085, %v3083
        %v3102 = vpack.c.b16 %v3086, %v3084
        %3119 = vmatprep.subr.bf16.mxu0 %v3102
        %3120 = vmatpush1.bf16.msra.mxu0 %v3101
        %3121 = vmatprep.subr.bf16.mxu0 %v3100
        %3122 = vmatpush1.bf16.msra.mxu0 %v3099
        %3123 = vmatprep.subr.bf16.mxu0 %v3098
        %3124 = vmatpush1.bf16.msra.mxu0 %v3097
        %3125 = vmatprep.subr.bf16.mxu0 %v3096
        %3126 = vmatpush1.bf16.msra.mxu0 %v3095
        %3127 = vmatprep.subr.bf16.mxu0 %v3094
        %3128 = vmatpush1.bf16.msra.mxu0 %v3093
        %3129 = vmatprep.subr.bf16.mxu0 %v3092
        %3130 = vmatpush1.bf16.msra.mxu0 %v3091
        %3131 = vmatprep.subr.bf16.mxu0 %v3090
        %3132 = vmatpush1.bf16.msra.mxu0 %v3089
        %3133 = vmatprep.subr.bf16.mxu0 %v3088
        %3134 = vmatpush1.bf16.msra.mxu0 %v3087
        %3135 = vmatprep.subr.bf16.mxu0 0
        %3136 = vmatpush2.bf16.msra.mxu0 0
        %3137 = vmatprep.subr.bf16.mxu0 0
        %3138 = vmatpush2.bf16.msra.mxu0 0
        %3139 = vmatprep.subr.bf16.mxu0 0
        %3140 = vmatpush2.bf16.msra.mxu0 0
        %3141 = vmatprep.subr.bf16.mxu0 0
        %3142 = vmatpush2.bf16.msra.mxu0 0
        %3143 = vmatprep.subr.bf16.mxu0 0
        %3144 = vmatpush2.bf16.msra.mxu0 0
        %3145 = vmatprep.subr.bf16.mxu0 0
        %3146 = vmatpush2.bf16.msra.mxu0 0
        %3147 = vmatprep.subr.bf16.mxu0 0
        %3148 = vmatpush2.bf16.msra.mxu0 0
        %3149 = vmatprep.subr.bf16.mxu0 0
        %3150 = vmatpush2.bf16.msra.mxu0 0
        %3151 = vmatprep.mubr.bf16.mxu0 0
        %3152 = vmatmul.mubr.bf16.gmra.mxu0 %v2672
        %v3153 = vpop.f32.mrf.mxu0
        %v3154 = vadd.f32 %v3032, %v3153
        %v3155 = vpop.f32.mrf.mxu0
        %v3156 = vadd.f32 %v3036, %v3155
        %v3157 = vpop.f32.mrf.mxu0
        %v3158 = vadd.f32 %v3032, %v3157
        %v3159 = vpop.f32.mrf.mxu0
        %v3160 = vadd.f32 %v3036, %v3159
        %3161 = vdwg.mxu0
        %v3162 = vmax.f32 %v3154, 0.0
        %v3163 = vmax.f32 %v3156, 0.0
        %v3164 = vmax.f32 %v3158, 0.0
        %v3165 = vmax.f32 %v3160, 0.0
        %v3166 = vmul.f32 %v3162, %v3162
        %v3167 = vmul.f32 %v3163, %v3163
        %v3168 = vmul.f32 %v3164, %v3164
        %v3169 = vmul.f32 %v3165, %v3165
        %v3170 = vpack.c.bf16 %v3168, %v3166
        %v3171 = vpack.c.bf16 %v3169, %v3167
        %v3172 = vld [vmem:[#allocation2] sm:$0xff]
        %v3173 = vld [vmem:[#allocation2 + $0x8] sm:$0xff]
        %v3174 = vld [vmem:[#allocation14 + $0x80] sm:$0xf]
        %v3175 = vld [vmem:[#allocation14 + $0x84] sm:$0xf]
        %v3176 = vld [vmem:[#allocation14 + $0x88] sm:$0xf]
        %v3177 = vld [vmem:[#allocation14 + $0x8c] sm:$0xf]
        %v3178 = vld [vmem:[#allocation14 + $0x90] sm:$0xf]
        %v3179 = vld [vmem:[#allocation14 + $0x94] sm:$0xf]
        %v3180 = vld [vmem:[#allocation14 + $0x98] sm:$0xf]
        %v3181 = vld [vmem:[#allocation14 + $0x9c] sm:$0xf]
        %v3182 = vld [vmem:[#allocation14 + $0xa0] sm:$0xf]
        %v3183 = vld [vmem:[#allocation14 + $0xa4] sm:$0xf]
        %v3184 = vld [vmem:[#allocation14 + $0xa8] sm:$0xf]
        %v3185 = vld [vmem:[#allocation14 + $0xac] sm:$0xf]
        %v3186 = vld [vmem:[#allocation14 + $0xb0] sm:$0xf]
        %v3187 = vld [vmem:[#allocation14 + $0xb4] sm:$0xf]
        %v3188 = vld [vmem:[#allocation14 + $0xb8] sm:$0xf]
        %v3189 = vld [vmem:[#allocation14 + $0xbc] sm:$0xf]
        %v3190 = vld [vmem:[#allocation14 + $0xc0] sm:$0xf]
        %v3191 = vld [vmem:[#allocation14 + $0xc4] sm:$0xf]
        %v3192 = vld [vmem:[#allocation14 + $0xc8] sm:$0xf]
        %v3193 = vld [vmem:[#allocation14 + $0xcc] sm:$0xf]
        %v3194 = vld [vmem:[#allocation14 + $0xd0] sm:$0xf]
        %v3195 = vld [vmem:[#allocation14 + $0xd4] sm:$0xf]
        %v3196 = vld [vmem:[#allocation14 + $0xd8] sm:$0xf]
        %v3197 = vld [vmem:[#allocation14 + $0xdc] sm:$0xf]
        %v3198 = vld [vmem:[#allocation14 + $0xe0] sm:$0xf]
        %v3199 = vld [vmem:[#allocation14 + $0xe4] sm:$0xf]
        %v3200 = vld [vmem:[#allocation14 + $0xe8] sm:$0xf]
        %v3201 = vld [vmem:[#allocation14 + $0xec] sm:$0xf]
        %v3202 = vld [vmem:[#allocation14 + $0xf0] sm:$0xf]
        %v3203 = vld [vmem:[#allocation14 + $0xf4] sm:$0xf]
        %v3204 = vld [vmem:[#allocation14 + $0xf8] sm:$0xf]
        %v3205 = vld [vmem:[#allocation14 + $0xfc] sm:$0xf]
        %v3238 = vunpack.c.l.b16 %v3174
        %v3239 = vunpack.c.l.b16 %v3175
        %v3240 = vunpack.c.l.b16 %v3176
        %v3241 = vunpack.c.l.b16 %v3177
        %v3242 = vunpack.c.l.b16 %v3178
        %v3243 = vunpack.c.l.b16 %v3179
        %v3244 = vunpack.c.l.b16 %v3180
        %v3245 = vunpack.c.l.b16 %v3181
        %v3246 = vunpack.c.l.b16 %v3182
        %v3247 = vunpack.c.l.b16 %v3183
        %v3248 = vunpack.c.l.b16 %v3184
        %v3249 = vunpack.c.l.b16 %v3185
        %v3250 = vunpack.c.l.b16 %v3186
        %v3251 = vunpack.c.l.b16 %v3187
        %v3252 = vunpack.c.l.b16 %v3188
        %v3253 = vunpack.c.l.b16 %v3189
        %v3254 = vunpack.c.l.b16 %v3190
        %v3255 = vunpack.c.l.b16 %v3191
        %v3256 = vunpack.c.l.b16 %v3192
        %v3257 = vunpack.c.l.b16 %v3193
        %v3258 = vunpack.c.l.b16 %v3194
        %v3259 = vunpack.c.l.b16 %v3195
        %v3260 = vunpack.c.l.b16 %v3196
        %v3261 = vunpack.c.l.b16 %v3197
        %v3262 = vunpack.c.l.b16 %v3198
        %v3263 = vunpack.c.l.b16 %v3199
        %v3264 = vunpack.c.l.b16 %v3200
        %v3265 = vunpack.c.l.b16 %v3201
        %v3266 = vunpack.c.l.b16 %v3202
        %v3267 = vunpack.c.l.b16 %v3203
        %v3268 = vunpack.c.l.b16 %v3204
        %v3269 = vunpack.c.l.b16 %v3205
        %v3270 = vpack.c.b16 %v3239, %v3238
        %v3271 = vpack.c.b16 %v3241, %v3240
        %v3272 = vpack.c.b16 %v3243, %v3242
        %v3273 = vpack.c.b16 %v3245, %v3244
        %v3274 = vpack.c.b16 %v3247, %v3246
        %v3275 = vpack.c.b16 %v3249, %v3248
        %v3276 = vpack.c.b16 %v3251, %v3250
        %v3277 = vpack.c.b16 %v3253, %v3252
        %v3278 = vpack.c.b16 %v3255, %v3254
        %v3279 = vpack.c.b16 %v3257, %v3256
        %v3280 = vpack.c.b16 %v3259, %v3258
        %v3281 = vpack.c.b16 %v3261, %v3260
        %v3282 = vpack.c.b16 %v3263, %v3262
        %v3283 = vpack.c.b16 %v3265, %v3264
        %v3284 = vpack.c.b16 %v3267, %v3266
        %v3285 = vpack.c.b16 %v3269, %v3268
        %3302 = vmatprep.subr.bf16.mxu0 0
        %3303 = vmatpush1.bf16.msra.mxu0 %v3277
        %3304 = vmatprep.subr.bf16.mxu0 0
        %3305 = vmatpush1.bf16.msra.mxu0 %v3276
        %3306 = vmatprep.subr.bf16.mxu0 0
        %3307 = vmatpush1.bf16.msra.mxu0 %v3275
        %3308 = vmatprep.subr.bf16.mxu0 0
        %3309 = vmatpush1.bf16.msra.mxu0 %v3274
        %3310 = vmatprep.subr.bf16.mxu0 0
        %3311 = vmatpush1.bf16.msra.mxu0 %v3273
        %3312 = vmatprep.subr.bf16.mxu0 0
        %3313 = vmatpush1.bf16.msra.mxu0 %v3272
        %3314 = vmatprep.subr.bf16.mxu0 0
        %3315 = vmatpush1.bf16.msra.mxu0 %v3271
        %3316 = vmatprep.subr.bf16.mxu0 0
        %3317 = vmatpush1.bf16.msra.mxu0 %v3270
        %3318 = vmatprep.subr.bf16.mxu0 0
        %3319 = vmatpush2.bf16.msra.mxu0 %v3285
        %3320 = vmatprep.subr.bf16.mxu0 0
        %3321 = vmatpush2.bf16.msra.mxu0 %v3284
        %3322 = vmatprep.subr.bf16.mxu0 0
        %3323 = vmatpush2.bf16.msra.mxu0 %v3283
        %3324 = vmatprep.subr.bf16.mxu0 0
        %3325 = vmatpush2.bf16.msra.mxu0 %v3282
        %3326 = vmatprep.subr.bf16.mxu0 0
        %3327 = vmatpush2.bf16.msra.mxu0 %v3281
        %3328 = vmatprep.subr.bf16.mxu0 0
        %3329 = vmatpush2.bf16.msra.mxu0 %v3280
        %3330 = vmatprep.subr.bf16.mxu0 0
        %3331 = vmatpush2.bf16.msra.mxu0 %v3279
        %3332 = vmatprep.subr.bf16.mxu0 0
        %3333 = vmatpush2.bf16.msra.mxu0 %v3278
        %3334 = vmatprep.mubr.bf16.mxu0 %v3171
        %3335 = vmatmul.mubr.bf16.gmra.mxu0 %v3170
        %v3336 = vpop.f32.mrf.mxu0
        %v3337 = vadd.f32 0.0, %v3336
        %v3338 = vpop.f32.mrf.mxu0
        %v3339 = vpop.f32.mrf.mxu0
        %v3340 = vadd.f32 0.0, %v3339
        %v3341 = vpop.f32.mrf.mxu0
        %3342 = vdwg.mxu0
        %v3343 = vadd.f32 %v3172, %v3337
        %v3344 = vadd.f32 %v3173, %v3340
        %3345 = vst [vmem:[#allocation2] sm:$0xff] %v3343
        %3346 = vst [vmem:[#allocation2 + $0x8] sm:$0xff] %v3344
        %v3347 = vld [vmem:[#allocation2] sm:$0xff]
        %v3348 = vld [vmem:[#allocation2 + $0x8] sm:$0xff]
        %v3349 = vadd.f32 %v2630, %v3347
        %v3350 = vadd.f32 %v2631, %v3348
        %v3351 = vld [vmem:[%s12] sm:$0x1]
        %v3353 = vlaneseq
        %v3354 = vshrl.u32 %v3353, 7
        %v3355 = vsub.s32 0, %v3354
        %v3356 = vrot.slane %v3351, %v3355
        %v3358 = vadd.f32 %v3349, %v3356
        %v3359 = vadd.f32 %v3350, %v3356
        %3360 = vst [vmem:[%s541] sm:$0xff] %v3358
        %3361 = vst [vmem:[%s541 + $0x8] sm:$0xff] %v3359
        %s3362 = sand.u32 %s319, 1
        %s3363 = scalar_lea.sflag [#allocation5], %s3362
        %s3364 = sand.u32 %s319, 1
        %s3365 = smul.addr %s3364, 16
        %s3366 = scalar_lea.vmem [#allocation15], %s3365
        // Predicated region
        $region101: #{tpu_custom_call.1} parent=71 // pred_check
          %p3367 = pneg %p329
        $region102: #{tpu_custom_call.1} parent=71 // pred_check_branch
          %3369 = sbr.rel (%p3367) target = $region104
        $region103: #{tpu_custom_call.1} parent=71 // pred_region
          %s3371 = ssub.s32 256, 256
          %3372 = vsyncadd %s3363, %s3371
          %s3373 = smul.addr %s33, 2
          %s3374 = smul.addr %s3373, 128
          %s3375 = scalar_lea.hbm %s13, %s3374
          %s3376 = sshll.u32 %s3366, 4
          %s3377 = int_to_ptr.vmem [resolvable:$true] %s3376
          %3382 = dma.vmem_to_hbm [thread:$0]  %s3377, 256, %s3375, %s3363, 128, 128, 8
        $region104: #{tpu_custom_call.1} parent=71 // pred_fallthru
          _
      $region72: #{tpu_custom_call.1} parent=5 // pred_fallthru
        _
      %p3383 = scmp.le.s32.totalorder 2, %s28
      // Predicated region
      $region105: #{tpu_custom_call.1} parent=5 // pred_check
        %p3384 = pneg %p3383
      $region106: #{tpu_custom_call.1} parent=5 // pred_check_branch
        %3386 = sbr.rel (%p3384) target = $region108
      $region107: #{tpu_custom_call.1} parent=5 // pred_region
        %s3387 = ssub.s32 %s28, 2
        // Predicated region
        $region109: #{tpu_custom_call.1} parent=107 // pred_check
          %p3388 = pneg %p335
        $region110: #{tpu_custom_call.1} parent=107 // pred_check_branch
          %3390 = sbr.rel (%p3388) target = $region112
        $region111: #{tpu_custom_call.1} parent=107 // pred_region
          %s3391 = sand.u32 %s320, 1
          %s3392 = scalar_lea.sflag [#allocation5], %s3391
          %s3393 = sand.u32 %s320, 1
          %s3394 = smul.addr %s3393, 16
          %s3395 = scalar_lea.vmem [#allocation15], %s3394
          %3396 = dma.done %s3392, 256
        $region112: #{tpu_custom_call.1} parent=107 // pred_fallthru
          _
      $region108: #{tpu_custom_call.1} parent=5 // pred_fallthru
        _
    $region6: #{tpu_custom_call.1} parent=1 // loop_footer
      %s32 = sadd.s32 1, %s28
    $region7: #{tpu_custom_call.1} parent=1 // loop_footer_branch
      %27 = sbr.rel target = $region3
    $region8: #{tpu_custom_call.1} parent=1 // loop_exit
      _
    %3397 = vsyncpa [#allocation4], 1
    %s3398 = scalar_lea.sflag [#allocation4], 1
    %3399 = vsyncpa %s3398, 1
    %3400 = vsyncpa [#allocation7], 1
    %3401 = vsyncpa [#allocation10], 1
    %3402 = vsyncpa [#allocation13], 1
    %3403 = vsyncpa [#allocation5], 1
    %s3404 = scalar_lea.sflag [#allocation5], 1
    %3405 = vsyncpa %s3404, 1

</llo_original>
